<compile_context>
chip_gen: v7x
topology: tpu7x:2x2x1
jax: 0.10.0
libtpu: 0.0.40
codegen_flags: <defaults>
</compile_context>

<pallas_src>
import functools

import jax
import jax.numpy as jnp
from jax.experimental import pallas as pl
from jax.experimental.pallas import tpu as pltpu

EPS = 1e-5

# ConvTranspose2d(k=4, s=2, p=1) output-parity taps: output row 2h+r uses
# kernel rows kh with input-row offsets dh:
#   r=0 -> {(kh=1, dh=0), (kh=3, dh=-1)},  r=1 -> {(kh=0, dh=+1), (kh=2, dh=0)}
_TAPS = {0: ((1, 0), (3, -1)), 1: ((0, 1), (2, 0))}


def _round_up(x, m):
    return ((x + m - 1) // m) * m


# ---------------------------------------------------------------------------
# Pallas kernels: fused (M, 9K) @ (9K, 4*Cout) + bias + ReLU (+ end_up dot).
# ---------------------------------------------------------------------------
def _stage_kernel(x_ref, w_ref, b_ref, o_ref):
    acc = jnp.dot(x_ref[...], w_ref[...], preferred_element_type=jnp.float32)
    acc = jnp.maximum(acc + b_ref[...], 0.0)          # ReLU(BN(deconv(...)))
    o_ref[...] = acc.astype(o_ref.dtype)


def _stage_end_kernel(x_ref, w_ref, b_ref, we_ref, be_ref, o_ref):
    acc = jnp.dot(x_ref[...], w_ref[...], preferred_element_type=jnp.float32)
    acc = jnp.maximum(acc + b_ref[...], 0.0)          # ReLU(BN(deconv(...)))
    # Fused end_up 1x1 conv: block-diagonal (4*Cd, 4) weight, one column per parity.
    out = jnp.dot(acc, we_ref[...], preferred_element_type=jnp.float32)
    o_ref[...] = (out + be_ref[...]).astype(o_ref.dtype)


def _pick_tm(M, K, N, in_itemsize, out_itemsize, cap=1024, budget=8 << 20):
    """Adaptive M-tile: no padding of tiny stages, bounded VMEM on big ones."""
    per_row = 2 * (K * in_itemsize + N * out_itemsize) + 8   # double-buffered x/out
    tm = min(cap, max(8, budget // per_row))
    tm = max(8, (tm // 8) * 8)
    return min(tm, _round_up(M, 8))


def fused_stage_matmul(x, w, b, *, out_dtype, end_w=None, end_b=None, tm_cap=1024):
    """y = ReLU(x @ w + b), optionally followed by the fused end_up dot.

    x: (M, K) compute dtype;  w: (K, N) compute dtype;  b: (1, N) f32.
    end_w: (N, 4) f32 block-diagonal end_up weight;  end_b: (1, 4) f32.
    """
    M, K = x.shape
    N = w.shape[1]
    n_out = 4 if end_w is not None else N
    tm = _pick_tm(M, K, n_out, x.dtype.itemsize, jnp.dtype(out_dtype).itemsize,
                  cap=tm_cap)
    Mp = _round_up(M, tm)
    if Mp != M:
        x = jnp.pad(x, ((0, Mp - M), (0, 0)))
    grid = (Mp // tm,)
    x_spec = pl.BlockSpec((tm, K), lambda i: (i, 0))
    w_spec = pl.BlockSpec((K, N), lambda i: (0, 0))
    b_spec = pl.BlockSpec((1, N), lambda i: (0, 0))
    o_spec = pl.BlockSpec((tm, n_out), lambda i: (i, 0))
    cparams = pltpu.CompilerParams(dimension_semantics=("parallel",))
    if end_w is None:
        out = pl.pallas_call(
            _stage_kernel,
            out_shape=jax.ShapeDtypeStruct((Mp, N), out_dtype),
            grid=grid,
            in_specs=[x_spec, w_spec, b_spec],
            out_specs=o_spec,
            compiler_params=cparams,
        )(x, w, b)
    else:
        we_spec = pl.BlockSpec((N, 4), lambda i: (0, 0))
        be_spec = pl.BlockSpec((1, 4), lambda i: (0, 0))
        out = pl.pallas_call(
            _stage_end_kernel,
            out_shape=jax.ShapeDtypeStruct((Mp, 4), out_dtype),
            grid=grid,
            in_specs=[x_spec, w_spec, b_spec, we_spec, be_spec],
            out_specs=o_spec,
            compiler_params=cparams,
        )(x, w, b, end_w, end_b)
    return out if Mp == M else out[:M]


# ---------------------------------------------------------------------------
# Parameter preparation: fold conv1x1+BN and deconv-BN, pack parities, build
# the 9-shift big weight.  Done once, outside the hot path.
# ---------------------------------------------------------------------------
def _bn_scale_shift(bn):
    scale = bn["gamma"] / jnp.sqrt(bn["var"] + EPS)
    shift = bn["beta"] - scale * bn["mean"]
    return scale, shift


def prepare_params(params, compute_dtype=jnp.bfloat16):
    stages = []
    for st in params["stages"]:
        cw, cb = st["cw"], st["cb"]            # Conv2d 1x1: (Cc, Cx, 1, 1), (Cc,)
        dcw, dcb = st["dw"], st["db"]          # ConvT2d:    (2Cc, Cd, 4, 4), (Cd,)
        Cc, Cx = cw.shape[0], cw.shape[1]
        Cd = dcw.shape[1]
        cs, csh = _bn_scale_shift(st["cbn"])
        A = cw.reshape(Cc, Cx).T * cs[None, :]        # (Cx, Cc) folded 1x1+BN weight
        a = cb * cs + csh                             # (Cc,)    folded 1x1+BN bias
        ds_, dsh = _bn_scale_shift(st["dbn"])
        K = Cx + 1 + Cc                               # augmented input [x, 1, feat]
        # blocks[shift_slot][parity] : (K, Cd) weight on the shifted input.
        blocks = [[None] * 4 for _ in range(9)]
        for r in (0, 1):
            for c in (0, 1):
                p = 2 * r + c
                for kh, dh in _TAPS[r]:
                    for kw, dw in _TAPS[c]:
                        wt = dcw[:, :, kh, kw] * ds_[None, :]          # (2Cc, Cd)
                        blk = jnp.concatenate(
                            [A @ wt[:Cc],               # acts on x channels
                             (a @ wt[:Cc])[None, :],    # acts on the ones channel
                             wt[Cc:]], axis=0)          # acts on feat channels
                        blocks[(dh + 1) * 3 + (dw + 1)][p] = blk
        zero = jnp.zeros((K, Cd), jnp.float32)
        rows = [jnp.concatenate([blk if blk is not None else zero for blk in br],
                                axis=1) for br in blocks]
        w_big = jnp.concatenate(rows, axis=0).astype(compute_dtype)     # (9K, 4Cd)
        b_big = jnp.tile(dcb * ds_ + dsh, 4).reshape(1, 4 * Cd).astype(jnp.float32)
        stages.append({"w": w_big, "b": b_big})
    # end_up (Cd_last -> 1) as a block-diagonal (4*Cd_last, 4) epilogue weight.
    Cd_last = params["stages"][-1]["dw"].shape[1]
    we = params["end_up_w"].reshape(1, Cd_last).T                       # (Cd_last, 1)
    end_w = jnp.kron(jnp.eye(4, dtype=jnp.float32), we.astype(jnp.float32))
    end_b = jnp.full((1, 4), params["end_up_b"][0], jnp.float32)
    return {"stages": stages, "end_w": end_w, "end_b": end_b}


# ---------------------------------------------------------------------------
# Forward pass.
# ---------------------------------------------------------------------------
def _build_shift9(z):
    """z: (B,H,W,K) -> (B,H,W,9K); slot (dh+1)*3+(dw+1) holds z[h+dh, w+dw]
    with zero padding outside the image (one shared shift set for all parities)."""
    B, H, W, K = z.shape
    zp = jnp.pad(z, ((0, 0), (1, 1), (1, 1), (0, 0)))
    slabs = []
    for dh in (-1, 0, 1):
        for dw in (-1, 0, 1):
            slabs.append(zp[:, 1 + dh:1 + dh + H, 1 + dw:1 + dw + W, :])
    return jnp.concatenate(slabs, axis=-1)


def easy_upsample_pallas(prep, net, X, *, tm_cap=1024):
    """net: (B, d_model, H, W) NCHW; X: tuple of 4 NCHW feature maps."""
    to_nhwc = lambda t: jnp.transpose(t, (0, 2, 3, 1))
    cdt = prep["stages"][0]["w"].dtype
    feat = to_nhwc(net).astype(cdt)
    n_stages = len(prep["stages"])
    out = None
    for s, (st, x) in enumerate(zip(prep["stages"], X)):
        last = s == n_stages - 1
        xs = to_nhwc(x).astype(cdt)
        B, H, W, _ = xs.shape
        ones = jnp.ones((B, H, W, 1), cdt)
        z = jnp.concatenate([xs, ones, feat], axis=-1)            # (B,H,W,K)
        z9 = _build_shift9(z).reshape(B * H * W, -1)              # (M, 9K)
        if last:
            y = fused_stage_matmul(z9, st["w"], st["b"], out_dtype=jnp.float32,
                                   end_w=prep["end_w"], end_b=prep["end_b"],
                                   tm_cap=tm_cap)                 # (M, 4)
            out = (y.reshape(B, H, W, 2, 2)
                     .transpose(0, 1, 3, 2, 4)                    # (B,H,2,W,2)
                     .reshape(B, 1, 2 * H, 2 * W))                # NCHW, C=1
        else:
            Cd = st["b"].shape[1] // 4
            y = fused_stage_matmul(z9, st["w"], st["b"], out_dtype=cdt,
                                   tm_cap=tm_cap)                 # (M, 4*Cd)
            feat = (y.reshape(B, H, W, 2, 2, Cd)
                      .transpose(0, 1, 3, 2, 4, 5)                # (B,H,2,W,2,Cd)
                      .reshape(B, 2 * H, 2 * W, Cd))
    return out


# ---------------------------------------------------------------------------
# Pure-JAX reference (lax convs) for correctness checking.
# ---------------------------------------------------------------------------
def _bn_ref(y, bn):
    scale, shift = _bn_scale_shift(bn)
    return y * scale[None, :, None, None] + shift[None, :, None, None]


def _conv1x1_ref(x, w, b):
    y = jax.lax.conv_general_dilated(
        x, w, (1, 1), "VALID", dimension_numbers=("NCHW", "OIHW", "NCHW"))
    return y + b[None, :, None, None]


def _deconv_ref(x, w, b):
    rhs = jnp.transpose(w, (1, 0, 2, 3))[:, :, ::-1, ::-1]    # (Cout,Cin,4,4) flipped
    y = jax.lax.conv_general_dilated(
        x, rhs, (1, 1), ((2, 2), (2, 2)), lhs_dilation=(2, 2),
        dimension_numbers=("NCHW", "OIHW", "NCHW"))
    return y + b[None, :, None, None]


def easy_upsample_ref(params, net, X):
    feat = net
    for stage, x in zip(params["stages"], X):
        f = _bn_ref(_conv1x1_ref(x, stage["cw"], stage["cb"]), stage["cbn"])
        feat = jnp.maximum(
            _bn_ref(_deconv_ref(jnp.concatenate([f, feat], axis=1),
                                stage["dw"], stage["db"]), stage["dbn"]), 0.0)
    return _conv1x1_ref(feat, params["end_up_w"], params["end_up_b"])


# ---------------------------------------------------------------------------
# Deterministic synthetic parameter initialization (kaiming-normal style).
# ---------------------------------------------------------------------------
def init_params(key, feat_dim, d_model):
    keys = iter(jax.random.split(key, 64))
    conv_out = [d_model, d_model // 2, d_model // 4, d_model // 8]

    def bn_init(c):
        return {"gamma": 1.0 + 0.1 * jax.random.normal(next(keys), (c,), jnp.float32),
                "beta": 0.1 * jax.random.normal(next(keys), (c,), jnp.float32),
                "mean": 0.1 * jax.random.normal(next(keys), (c,), jnp.float32),
                "var": jax.random.uniform(next(keys), (c,), jnp.float32, 0.5, 1.5)}

    stages = []
    for s in range(4):
        cin, cout = feat_dim[s], conv_out[s]
        cw = jax.random.normal(next(keys), (cout, cin, 1, 1), jnp.float32) * jnp.sqrt(2.0 / cin)
        cb = 0.05 * jax.random.normal(next(keys), (cout,), jnp.float32)
        dcin, dcout = cout * 2, conv_out[s] // 2
        dw = jax.random.normal(next(keys), (dcin, dcout, 4, 4), jnp.float32) * jnp.sqrt(2.0 / (dcout * 16))
        db = 0.05 * jax.random.normal(next(keys), (dcout,), jnp.float32)
        stages.append({"cw": cw, "cb": cb, "cbn": bn_init(cout),
                       "dw": dw, "db": db, "dbn": bn_init(dcout)})
    ew = jax.random.normal(next(keys), (1, d_model // 16, 1, 1), jnp.float32) * jnp.sqrt(2.0 / (d_model // 16))
    eb = 0.05 * jax.random.normal(next(keys), (1,), jnp.float32)
    return {"stages": stages, "end_up_w": ew, "end_up_b": eb}


if __name__ == "__main__":
    feat_dim = (12, 10, 8, 6)
    d_model = 64
    B, H0, W0 = 2, 4, 4

    params = init_params(jax.random.PRNGKey(0), feat_dim, d_model)
    k1, k2, k3, k4, k5 = jax.random.split(jax.random.PRNGKey(1), 5)
    net = jax.random.normal(k1, (B, d_model, H0, W0), jnp.float32)
    X = (jax.random.normal(k2, (B, feat_dim[0], H0, W0), jnp.float32),
         jax.random.normal(k3, (B, feat_dim[1], 2 * H0, 2 * W0), jnp.float32),
         jax.random.normal(k4, (B, feat_dim[2], 4 * H0, 4 * W0), jnp.float32),
         jax.random.normal(k5, (B, feat_dim[3], 8 * H0, 8 * W0), jnp.float32))

    ref = jax.block_until_ready(easy_upsample_ref(params, net, X))
    fwd = jax.jit(easy_upsample_pallas)

    # 1) f32 compute path: strict check of the fused-kernel structure.
    prep32 = prepare_params(params, compute_dtype=jnp.float32)
    out32 = jax.block_until_ready(fwd(prep32, net, X))
    assert out32.shape == (B, 1, 16 * H0, 16 * W0), out32.shape
    assert jnp.allclose(out32, ref, atol=1e-3, rtol=1e-3), \
        float(jnp.max(jnp.abs(out32 - ref)))

    # 2) bf16 compute path (default perf config): loose check vs f32 reference.
    prep16 = prepare_params(params, compute_dtype=jnp.bfloat16)
    out16 = jax.block_until_ready(fwd(prep16, net, X))
    assert out16.shape == ref.shape
    rel = float(jnp.linalg.norm(out16 - ref) / (jnp.linalg.norm(ref) + 1e-12))
    assert rel < 5e-2, rel

    print("KERNEL_OK")
</pallas_src>

<mosaic_0001>
module attributes {stable_mosaic.version = 11 : i64} {
  func.func @_stage_kernel(%arg0: i32, %arg1: memref<32x693xf32, #tpu.memory_space<vmem>>, %arg2: memref<693x128xf32, #tpu.memory_space<vmem>>, %arg3: memref<1x128xf32, #tpu.memory_space<vmem>>, %arg4: memref<32x128xf32, #tpu.memory_space<vmem>>) attributes {dimension_semantics = [#tpu.dimension_semantics<parallel>], iteration_bounds = array<i64: 1>, scalar_prefetch = 0 : i64, scratch_operands = 0 : i64, tpu.core_type = #tpu.core_type<tc>, window_params = [{transform_indices = @transform_0, window_bounds = array<i64: 32, 693>}, {pipeline_mode = #tpu.pipeline_mode<synchronous>, transform_indices = @transform_1, window_bounds = array<i64: 693, 128>}, {pipeline_mode = #tpu.pipeline_mode<synchronous>, transform_indices = @transform_2, window_bounds = array<i64: 1, 128>}, {transform_indices = @transform_3, window_bounds = array<i64: 32, 128>}]} {
    %c0 = arith.constant 0 : index
    %c0_0 = arith.constant 0 : index
    %0 = vector.load %arg1[%c0, %c0_0] : memref<32x693xf32, #tpu.memory_space<vmem>>, vector<32x693xf32>
    %c0_1 = arith.constant 0 : index
    %c0_2 = arith.constant 0 : index
    %1 = vector.load %arg2[%c0_1, %c0_2] : memref<693x128xf32, #tpu.memory_space<vmem>>, vector<693x128xf32>
    %cst = arith.constant dense<0.000000e+00> : vector<32x128xf32>
    %2 = tpu.matmul %0, %1, %cst {dimension_numbers = #tpu.dot_dimension_numbers<[1], [0], [0], [1], [0, 0, 1, 1], [], []>} : vector<32x693xf32>, vector<693x128xf32>, vector<32x128xf32> -> vector<32x128xf32>
    %c0_3 = arith.constant 0 : index
    %c0_4 = arith.constant 0 : index
    %3 = vector.load %arg3[%c0_3, %c0_4] : memref<1x128xf32, #tpu.memory_space<vmem>>, vector<1x128xf32>
    %4 = vector.broadcast %3 : vector<1x128xf32> to vector<32x128xf32>
    %5 = arith.addf %2, %4 : vector<32x128xf32>
    %cst_5 = arith.constant 0.000000e+00 : f32
    %6 = vector.broadcast %cst_5 : f32 to vector<32x128xf32>
    %7 = arith.maximumf %5, %6 : vector<32x128xf32>
    %c0_6 = arith.constant 0 : index
    %c0_7 = arith.constant 0 : index
    %8 = vector.load %arg4[%c0_6, %c0_7] : memref<32x128xf32, #tpu.memory_space<vmem>>, vector<32x128xf32>
    tpu.vector_store %arg4[%c0_6, %c0_7], %7 {strides = array<i32>} : memref<32x128xf32, #tpu.memory_space<vmem>>, vector<32x128xf32>,
    return
  }
  func.func @transform_0(%arg0: i32) -> (i32, i32) {
    %c0_i32 = arith.constant 0 : i32
    %c0_i32_0 = arith.constant 0 : i32
    return %arg0, %c0_i32 : i32, i32
  }
  func.func @transform_1(%arg0: i32) -> (i32, i32) {
    %c0_i32 = arith.constant 0 : i32
    %c0_i32_0 = arith.constant 0 : i32
    %c0_i32_1 = arith.constant 0 : i32
    return %c0_i32, %c0_i32_0 : i32, i32
  }
  func.func @transform_2(%arg0: i32) -> (i32, i32) {
    %c0_i32 = arith.constant 0 : i32
    %c0_i32_0 = arith.constant 0 : i32
    %c0_i32_1 = arith.constant 0 : i32
    return %c0_i32, %c0_i32_0 : i32, i32
  }
  func.func @transform_3(%arg0: i32) -> (i32, i32) {
    %c0_i32 = arith.constant 0 : i32
    %c0_i32_0 = arith.constant 0 : i32
    return %arg0, %c0_i32 : i32, i32
  }
}

module attributes {stable_mosaic.version = 11 : i64} {
  func.func @_stage_kernel(%arg0: i32, %arg1: memref<128x387xf32, #tpu.memory_space<vmem>>, %arg2: memref<387x64xf32, #tpu.memory_space<vmem>>, %arg3: memref<1x64xf32, #tpu.memory_space<vmem>>, %arg4: memref<128x64xf32, #tpu.memory_space<vmem>>) attributes {dimension_semantics = [#tpu.dimension_semantics<parallel>], iteration_bounds = array<i64: 1>, scalar_prefetch = 0 : i64, scratch_operands = 0 : i64, tpu.core_type = #tpu.core_type<tc>, window_params = [{transform_indices = @transform_0, window_bounds = array<i64: 128, 387>}, {pipeline_mode = #tpu.pipeline_mode<synchronous>, transform_indices = @transform_1, window_bounds = array<i64: 387, 64>}, {pipeline_mode = #tpu.pipeline_mode<synchronous>, transform_indices = @transform_2, window_bounds = array<i64: 1, 64>}, {transform_indices = @transform_3, window_bounds = array<i64: 128, 64>}]} {
    %c0 = arith.constant 0 : index
    %c0_0 = arith.constant 0 : index
    %0 = vector.load %arg1[%c0, %c0_0] : memref<128x387xf32, #tpu.memory_space<vmem>>, vector<128x387xf32>
    %c0_1 = arith.constant 0 : index
    %c0_2 = arith.constant 0 : index
    %1 = vector.load %arg2[%c0_1, %c0_2] : memref<387x64xf32, #tpu.memory_space<vmem>>, vector<387x64xf32>
    %cst = arith.constant dense<0.000000e+00> : vector<128x64xf32>
    %2 = tpu.matmul %0, %1, %cst {dimension_numbers = #tpu.dot_dimension_numbers<[1], [0], [0], [1], [0, 0, 1, 1], [], []>} : vector<128x387xf32>, vector<387x64xf32>, vector<128x64xf32> -> vector<128x64xf32>
    %c0_3 = arith.constant 0 : index
    %c0_4 = arith.constant 0 : index
    %3 = vector.load %arg3[%c0_3, %c0_4] : memref<1x64xf32, #tpu.memory_space<vmem>>, vector<1x64xf32>
    %4 = vector.broadcast %3 : vector<1x64xf32> to vector<128x64xf32>
    %5 = arith.addf %2, %4 : vector<128x64xf32>
    %cst_5 = arith.constant 0.000000e+00 : f32
    %6 = vector.broadcast %cst_5 : f32 to vector<128x64xf32>
    %7 = arith.maximumf %5, %6 : vector<128x64xf32>
    %c0_6 = arith.constant 0 : index
    %c0_7 = arith.constant 0 : index
    %8 = vector.load %arg4[%c0_6, %c0_7] : memref<128x64xf32, #tpu.memory_space<vmem>>, vector<128x64xf32>
    tpu.vector_store %arg4[%c0_6, %c0_7], %7 {strides = array<i32>} : memref<128x64xf32, #tpu.memory_space<vmem>>, vector<128x64xf32>,
    return
  }
  func.func @transform_0(%arg0: i32) -> (i32, i32) {
    %c0_i32 = arith.constant 0 : i32
    %c0_i32_0 = arith.constant 0 : i32
    return %arg0, %c0_i32 : i32, i32
  }
  func.func @transform_1(%arg0: i32) -> (i32, i32) {
    %c0_i32 = arith.constant 0 : i32
    %c0_i32_0 = arith.constant 0 : i32
    %c0_i32_1 = arith.constant 0 : i32
    return %c0_i32, %c0_i32_0 : i32, i32
  }
  func.func @transform_2(%arg0: i32) -> (i32, i32) {
    %c0_i32 = arith.constant 0 : i32
    %c0_i32_0 = arith.constant 0 : i32
    %c0_i32_1 = arith.constant 0 : i32
    return %c0_i32, %c0_i32_0 : i32, i32
  }
  func.func @transform_3(%arg0: i32) -> (i32, i32) {
    %c0_i32 = arith.constant 0 : i32
    %c0_i32_0 = arith.constant 0 : i32
    return %arg0, %c0_i32 : i32, i32
  }
}

module attributes {stable_mosaic.version = 11 : i64} {
  func.func @_stage_kernel(%arg0: i32, %arg1: memref<512x225xf32, #tpu.memory_space<vmem>>, %arg2: memref<225x32xf32, #tpu.memory_space<vmem>>, %arg3: memref<1x32xf32, #tpu.memory_space<vmem>>, %arg4: memref<512x32xf32, #tpu.memory_space<vmem>>) attributes {dimension_semantics = [#tpu.dimension_semantics<parallel>], iteration_bounds = array<i64: 1>, scalar_prefetch = 0 : i64, scratch_operands = 0 : i64, tpu.core_type = #tpu.core_type<tc>, window_params = [{transform_indices = @transform_0, window_bounds = array<i64: 512, 225>}, {pipeline_mode = #tpu.pipeline_mode<synchronous>, transform_indices = @transform_1, window_bounds = array<i64: 225, 32>}, {pipeline_mode = #tpu.pipeline_mode<synchronous>, transform_indices = @transform_2, window_bounds = array<i64: 1, 32>}, {transform_indices = @transform_3, window_bounds = array<i64: 512, 32>}]} {
    %c0 = arith.constant 0 : index
    %c0_0 = arith.constant 0 : index
    %0 = vector.load %arg1[%c0, %c0_0] : memref<512x225xf32, #tpu.memory_space<vmem>>, vector<512x225xf32>
    %c0_1 = arith.constant 0 : index
    %c0_2 = arith.constant 0 : index
    %1 = vector.load %arg2[%c0_1, %c0_2] : memref<225x32xf32, #tpu.memory_space<vmem>>, vector<225x32xf32>
    %cst = arith.constant dense<0.000000e+00> : vector<512x32xf32>
    %2 = tpu.matmul %0, %1, %cst {dimension_numbers = #tpu.dot_dimension_numbers<[1], [0], [0], [1], [0, 0, 1, 1], [], []>} : vector<512x225xf32>, vector<225x32xf32>, vector<512x32xf32> -> vector<512x32xf32>
    %c0_3 = arith.constant 0 : index
    %c0_4 = arith.constant 0 : index
    %3 = vector.load %arg3[%c0_3, %c0_4] : memref<1x32xf32, #tpu.memory_space<vmem>>, vector<1x32xf32>
    %4 = vector.broadcast %3 : vector<1x32xf32> to vector<512x32xf32>
    %5 = arith.addf %2, %4 : vector<512x32xf32>
    %cst_5 = arith.constant 0.000000e+00 : f32
    %6 = vector.broadcast %cst_5 : f32 to vector<512x32xf32>
    %7 = arith.maximumf %5, %6 : vector<512x32xf32>
    %c0_6 = arith.constant 0 : index
    %c0_7 = arith.constant 0 : index
    %8 = vector.load %arg4[%c0_6, %c0_7] : memref<512x32xf32, #tpu.memory_space<vmem>>, vector<512x32xf32>
    tpu.vector_store %arg4[%c0_6, %c0_7], %7 {strides = array<i32>} : memref<512x32xf32, #tpu.memory_space<vmem>>, vector<512x32xf32>,
    return
  }
  func.func @transform_0(%arg0: i32) -> (i32, i32) {
    %c0_i32 = arith.constant 0 : i32
    %c0_i32_0 = arith.constant 0 : i32
    return %arg0, %c0_i32 : i32, i32
  }
  func.func @transform_1(%arg0: i32) -> (i32, i32) {
    %c0_i32 = arith.constant 0 : i32
    %c0_i32_0 = arith.constant 0 : i32
    %c0_i32_1 = arith.constant 0 : i32
    return %c0_i32, %c0_i32_0 : i32, i32
  }
  func.func @transform_2(%arg0: i32) -> (i32, i32) {
    %c0_i32 = arith.constant 0 : i32
    %c0_i32_0 = arith.constant 0 : i32
    %c0_i32_1 = arith.constant 0 : i32
    return %c0_i32, %c0_i32_0 : i32, i32
  }
  func.func @transform_3(%arg0: i32) -> (i32, i32) {
    %c0_i32 = arith.constant 0 : i32
    %c0_i32_0 = arith.constant 0 : i32
    return %arg0, %c0_i32 : i32, i32
  }
}

module attributes {stable_mosaic.version = 11 : i64} {
  func.func @_stage_end_kernel(%arg0: i32, %arg1: memref<1024x135xf32, #tpu.memory_space<vmem>>, %arg2: memref<135x16xf32, #tpu.memory_space<vmem>>, %arg3: memref<1x16xf32, #tpu.memory_space<vmem>>, %arg4: memref<16x4xf32, #tpu.memory_space<vmem>>, %arg5: memref<1x4xf32, #tpu.memory_space<vmem>>, %arg6: memref<1024x4xf32, #tpu.memory_space<vmem>>) attributes {dimension_semantics = [#tpu.dimension_semantics<parallel>], iteration_bounds = array<i64: 2>, scalar_prefetch = 0 : i64, scratch_operands = 0 : i64, tpu.core_type = #tpu.core_type<tc>, window_params = [{transform_indices = @transform_0, window_bounds = array<i64: 1024, 135>}, {pipeline_mode = #tpu.pipeline_mode<synchronous>, transform_indices = @transform_1, window_bounds = array<i64: 135, 16>}, {pipeline_mode = #tpu.pipeline_mode<synchronous>, transform_indices = @transform_2, window_bounds = array<i64: 1, 16>}, {pipeline_mode = #tpu.pipeline_mode<synchronous>, transform_indices = @transform_3, window_bounds = array<i64: 16, 4>}, {pipeline_mode = #tpu.pipeline_mode<synchronous>, transform_indices = @transform_4, window_bounds = array<i64: 1, 4>}, {transform_indices = @transform_5, window_bounds = array<i64: 1024, 4>}]} {
    %c0 = arith.constant 0 : index
    %c0_0 = arith.constant 0 : index
    %0 = vector.load %arg1[%c0, %c0_0] : memref<1024x135xf32, #tpu.memory_space<vmem>>, vector<1024x135xf32>
    %c0_1 = arith.constant 0 : index
    %c0_2 = arith.constant 0 : index
    %1 = vector.load %arg2[%c0_1, %c0_2] : memref<135x16xf32, #tpu.memory_space<vmem>>, vector<135x16xf32>
    %cst = arith.constant dense<0.000000e+00> : vector<1024x16xf32>
    %2 = tpu.matmul %0, %1, %cst {dimension_numbers = #tpu.dot_dimension_numbers<[1], [0], [0], [1], [0, 0, 1, 1], [], []>} : vector<1024x135xf32>, vector<135x16xf32>, vector<1024x16xf32> -> vector<1024x16xf32>
    %c0_3 = arith.constant 0 : index
    %c0_4 = arith.constant 0 : index
    %3 = vector.load %arg3[%c0_3, %c0_4] : memref<1x16xf32, #tpu.memory_space<vmem>>, vector<1x16xf32>
    %4 = vector.broadcast %3 : vector<1x16xf32> to vector<1024x16xf32>
    %5 = arith.addf %2, %4 : vector<1024x16xf32>
    %cst_5 = arith.constant 0.000000e+00 : f32
    %6 = vector.broadcast %cst_5 : f32 to vector<1024x16xf32>
    %7 = arith.maximumf %5, %6 : vector<1024x16xf32>
    %c0_6 = arith.constant 0 : index
    %c0_7 = arith.constant 0 : index
    %8 = vector.load %arg4[%c0_6, %c0_7] : memref<16x4xf32, #tpu.memory_space<vmem>>, vector<16x4xf32>
    %cst_8 = arith.constant dense<0.000000e+00> : vector<1024x4xf32>
    %9 = tpu.matmul %7, %8, %cst_8 {dimension_numbers = #tpu.dot_dimension_numbers<[1], [0], [0], [1], [0, 0, 1, 1], [], []>} : vector<1024x16xf32>, vector<16x4xf32>, vector<1024x4xf32> -> vector<1024x4xf32>
    %c0_9 = arith.constant 0 : index
    %c0_10 = arith.constant 0 : index
    %10 = vector.load %arg5[%c0_9, %c0_10] : memref<1x4xf32, #tpu.memory_space<vmem>>, vector<1x4xf32>
    %11 = vector.broadcast %10 : vector<1x4xf32> to vector<1024x4xf32>
    %12 = arith.addf %9, %11 : vector<1024x4xf32>
    %c0_11 = arith.constant 0 : index
    %c0_12 = arith.constant 0 : index
    %13 = vector.load %arg6[%c0_11, %c0_12] : memref<1024x4xf32, #tpu.memory_space<vmem>>, vector<1024x4xf32>
    tpu.vector_store %arg6[%c0_11, %c0_12], %12 {strides = array<i32>} : memref<1024x4xf32, #tpu.memory_space<vmem>>, vector<1024x4xf32>,
    return
  }
  func.func @transform_0(%arg0: i32) -> (i32, i32) {
    %c0_i32 = arith.constant 0 : i32
    %c0_i32_0 = arith.constant 0 : i32
    return %arg0, %c0_i32 : i32, i32
  }
  func.func @transform_1(%arg0: i32) -> (i32, i32) {
    %c0_i32 = arith.constant 0 : i32
    %c0_i32_0 = arith.constant 0 : i32
    %c0_i32_1 = arith.constant 0 : i32
    return %c0_i32, %c0_i32_0 : i32, i32
  }
  func.func @transform_2(%arg0: i32) -> (i32, i32) {
    %c0_i32 = arith.constant 0 : i32
    %c0_i32_0 = arith.constant 0 : i32
    %c0_i32_1 = arith.constant 0 : i32
    return %c0_i32, %c0_i32_0 : i32, i32
  }
  func.func @transform_3(%arg0: i32) -> (i32, i32) {
    %c0_i32 = arith.constant 0 : i32
    %c0_i32_0 = arith.constant 0 : i32
    %c0_i32_1 = arith.constant 0 : i32
    return %c0_i32, %c0_i32_0 : i32, i32
  }
  func.func @transform_4(%arg0: i32) -> (i32, i32) {
    %c0_i32 = arith.constant 0 : i32
    %c0_i32_0 = arith.constant 0 : i32
    %c0_i32_1 = arith.constant 0 : i32
    return %c0_i32, %c0_i32_0 : i32, i32
  }
  func.func @transform_5(%arg0: i32) -> (i32, i32) {
    %c0_i32 = arith.constant 0 : i32
    %c0_i32_0 = arith.constant 0 : i32
    return %arg0, %c0_i32 : i32, i32
  }
}

</mosaic_0001>

<llo_original>
// kernel: easy_upsample_pallas.4
$region0: #{easy_upsample_pallas.4}
  #allocation0 [shape = 'u32[]', space=smem, size = 0x4, offset = 0x4, fixed_abs, tag = 'smem constant byte address 0x4 - core index']
  #allocation1 [shape = 'u32[144,128]{1,0:T(1,128)}', space=vmem, size = 0x12000, scoped, tag = 'internal scratch']
  %s0 = inlined_call_operand.vmem [shape: f32[32,693], index: 0, kind: input, shape index: {}]
  %s1 = inlined_call_operand.hbm [shape: f32[693,128], index: 1, kind: input, shape index: {}]
  %s2 = inlined_call_operand.hbm [shape: f32[1,128], index: 2, kind: input, shape index: {}]
  %s3 = inlined_call_operand.vmem [shape: f32[32,128], index: 3, kind: output, shape index: {}]
  %s4 = sld [smem:[#allocation0]]
  $region30: #{easy_upsample_pallas.4} parent=0
    _
  %s6 = ssub.s32 1, %s4
  %s7 = scalar_select 0, %s6, %s4
  $region1: #{easy_upsample_pallas.4} parent=0
    #allocation2 [shape = 'u8[356352]{0}', space=vmem, size = 0x57000, scoped, tag = 'input window, operand 1, single buffered']
    #allocation3 [shape = 's32[1]{0}', space=sflag, size = 0x4, scoped, tag = 'scoped memory for easy_upsample_pallas.4']
    #allocation4 [shape = 'u8[512]{0}', space=vmem, size = 0x400, scoped, tag = 'input window, operand 2, single buffered']
    #allocation5 [shape = 's32[1]{0}', space=sflag, size = 0x4, scoped, tag = 'scoped memory for easy_upsample_pallas.4']
    %8 = vsyncpa [#allocation3], 0
    %9 = vsyncpa [#allocation5], 0
    // Predicated region
    $region2: #{easy_upsample_pallas.4} parent=1 // pred_check
      _
    $region3: #{easy_upsample_pallas.4} parent=1 // pred_check_branch
      %11 = sbr.rel (0) target = $region5
    $region4: #{easy_upsample_pallas.4} parent=1 // pred_region
      _
    $region5: #{easy_upsample_pallas.4} parent=1 // pred_fallthru
      _
    // Predicated region
    $region6: #{easy_upsample_pallas.4} parent=1 // pred_check
      _
    $region7: #{easy_upsample_pallas.4} parent=1 // pred_check_branch
      %13 = sbr.rel (0) target = $region9
    $region8: #{easy_upsample_pallas.4} parent=1 // pred_region
      %s15 = ssub.s32 11136, 11136
      %16 = vsyncadd [#allocation3], %s15
      %s17 = sshll.u32 [#allocation2], 4
      %s18 = int_to_ptr.vmem [resolvable:$true] %s17
      %23 = dma.hbm_to_vmem [thread:$0]  %s1, 11136, %s18, [#allocation3], 128, 128, 8
    $region9: #{easy_upsample_pallas.4} parent=1 // pred_fallthru
      _
    // Predicated region
    $region10: #{easy_upsample_pallas.4} parent=1 // pred_check
      _
    $region11: #{easy_upsample_pallas.4} parent=1 // pred_check_branch
      %25 = sbr.rel (0) target = $region13
    $region12: #{easy_upsample_pallas.4} parent=1 // pred_region
      %s27 = ssub.s32 16, 16
      %28 = vsyncadd [#allocation5], %s27
      %s30 = sshll.u32 [#allocation4], 4
      %s31 = int_to_ptr.vmem [resolvable:$true] %s30
      %33 = dma.hbm_to_vmem [thread:$0]  %s2, 16, %s31, [#allocation5]
    $region13: #{easy_upsample_pallas.4} parent=1 // pred_fallthru
      _
    // Predicated region
    $region14: #{easy_upsample_pallas.4} parent=1 // pred_check
      _
    $region15: #{easy_upsample_pallas.4} parent=1 // pred_check_branch
      %35 = sbr.rel (0) target = $region17
    $region16: #{easy_upsample_pallas.4} parent=1 // pred_region
      %36 = dma.done [#allocation3], 11136
    $region17: #{easy_upsample_pallas.4} parent=1 // pred_fallthru
      _
    // Predicated region
    $region18: #{easy_upsample_pallas.4} parent=1 // pred_check
      _
    $region19: #{easy_upsample_pallas.4} parent=1 // pred_check_branch
      %38 = sbr.rel (0) target = $region21
    $region20: #{easy_upsample_pallas.4} parent=1 // pred_region
      %39 = dma.done [#allocation5], 16
    $region21: #{easy_upsample_pallas.4} parent=1 // pred_fallthru
      _
    %v40 = vld [vmem:[%s0] sm:$0xff]
    %v41 = vld [vmem:[%s0 + $0x8] sm:$0xff]
    %v42 = vld [vmem:[%s0 + $0x10] sm:$0xff]
    %v43 = vld [vmem:[%s0 + $0x18] sm:$0xff]
    %v44 = vld [vmem:[%s0 + $0x20] sm:$0xff]
    %v45 = vld [vmem:[%s0 + $0x28] sm:$0xff]
    %v46 = vld [vmem:[%s0 + $0x30] sm:$0xff]
    %v47 = vld [vmem:[%s0 + $0x38] sm:$0xff]
    %v48 = vld [vmem:[%s0 + $0x40] sm:$0xff]
    %v49 = vld [vmem:[%s0 + $0x48] sm:$0xff]
    %v50 = vld [vmem:[%s0 + $0x50] sm:$0xff]
    %v51 = vld [vmem:[%s0 + $0x58] sm:$0xff]
    %v52 = vld [vmem:[%s0 + $0x60] sm:$0xff]
    %v53 = vld [vmem:[%s0 + $0x68] sm:$0xff]
    %v54 = vld [vmem:[%s0 + $0x70] sm:$0xff]
    %v55 = vld [vmem:[%s0 + $0x78] sm:$0xff]
    %v56 = vld [vmem:[%s0 + $0x80] sm:$0xff]
    %v57 = vld [vmem:[%s0 + $0x88] sm:$0xff]
    %v58 = vld [vmem:[%s0 + $0x90] sm:$0xff]
    %v59 = vld [vmem:[%s0 + $0x98] sm:$0xff]
    %v60 = vld [vmem:[%s0 + $0xa0] sm:$0xff]
    %v61 = vld [vmem:[%s0 + $0xa8] sm:$0xff]
    %v62 = vld [vmem:[%s0 + $0xb0] sm:$0xff]
    %v63 = vld [vmem:[%s0 + $0xb8] sm:$0xff]
    %v64 = vld [vmem:[#allocation2] sm:$0xff]
    %v65 = vld [vmem:[#allocation2 + $0x8] sm:$0xff]
    %v66 = vld [vmem:[#allocation2 + $0x10] sm:$0xff]
    %v67 = vld [vmem:[#allocation2 + $0x18] sm:$0xff]
    %v68 = vld [vmem:[#allocation2 + $0x20] sm:$0xff]
    %v69 = vld [vmem:[#allocation2 + $0x28] sm:$0xff]
    %v70 = vld [vmem:[#allocation2 + $0x30] sm:$0xff]
    %v71 = vld [vmem:[#allocation2 + $0x38] sm:$0xff]
    %v72 = vld [vmem:[#allocation2 + $0x40] sm:$0xff]
    %v73 = vld [vmem:[#allocation2 + $0x48] sm:$0xff]
    %v74 = vld [vmem:[#allocation2 + $0x50] sm:$0xff]
    %v75 = vld [vmem:[#allocation2 + $0x58] sm:$0xff]
    %v76 = vld [vmem:[#allocation2 + $0x60] sm:$0xff]
    %v77 = vld [vmem:[#allocation2 + $0x68] sm:$0xff]
    %v78 = vld [vmem:[#allocation2 + $0x70] sm:$0xff]
    %v79 = vld [vmem:[#allocation2 + $0x78] sm:$0xff]
    %v80 = vld [vmem:[#allocation2 + $0x80] sm:$0xff]
    %v81 = vld [vmem:[#allocation2 + $0x88] sm:$0xff]
    %v82 = vld [vmem:[#allocation2 + $0x90] sm:$0xff]
    %v83 = vld [vmem:[#allocation2 + $0x98] sm:$0xff]
    %v84 = vld [vmem:[#allocation2 + $0xa0] sm:$0xff]
    %v85 = vld [vmem:[#allocation2 + $0xa8] sm:$0xff]
    %v86 = vld [vmem:[#allocation2 + $0xb0] sm:$0xff]
    %v87 = vld [vmem:[#allocation2 + $0xb8] sm:$0xff]
    %v88 = vld [vmem:[#allocation2 + $0xc0] sm:$0xff]
    %v89 = vld [vmem:[#allocation2 + $0xc8] sm:$0xff]
    %v90 = vld [vmem:[#allocation2 + $0xd0] sm:$0xff]
    %v91 = vld [vmem:[#allocation2 + $0xd8] sm:$0xff]
    %v92 = vld [vmem:[#allocation2 + $0xe0] sm:$0xff]
    %v93 = vld [vmem:[#allocation2 + $0xe8] sm:$0xff]
    %v94 = vld [vmem:[#allocation2 + $0xf0] sm:$0xff]
    %v95 = vld [vmem:[#allocation2 + $0xf8] sm:$0xff]
    %v96 = vld [vmem:[#allocation2 + $0x100] sm:$0xff]
    %v97 = vld [vmem:[#allocation2 + $0x108] sm:$0xff]
    %v98 = vld [vmem:[#allocation2 + $0x110] sm:$0xff]
    %v99 = vld [vmem:[#allocation2 + $0x118] sm:$0xff]
    %v100 = vld [vmem:[#allocation2 + $0x120] sm:$0xff]
    %v101 = vld [vmem:[#allocation2 + $0x128] sm:$0xff]
    %v102 = vld [vmem:[#allocation2 + $0x130] sm:$0xff]
    %v103 = vld [vmem:[#allocation2 + $0x138] sm:$0xff]
    %v104 = vld [vmem:[#allocation2 + $0x140] sm:$0xff]
    %v105 = vld [vmem:[#allocation2 + $0x148] sm:$0xff]
    %v106 = vld [vmem:[#allocation2 + $0x150] sm:$0xff]
    %v107 = vld [vmem:[#allocation2 + $0x158] sm:$0xff]
    %v108 = vld [vmem:[#allocation2 + $0x160] sm:$0xff]
    %v109 = vld [vmem:[#allocation2 + $0x168] sm:$0xff]
    %v110 = vld [vmem:[#allocation2 + $0x170] sm:$0xff]
    %v111 = vld [vmem:[#allocation2 + $0x178] sm:$0xff]
    %v112 = vld [vmem:[#allocation2 + $0x180] sm:$0xff]
    %v113 = vld [vmem:[#allocation2 + $0x188] sm:$0xff]
    %v114 = vld [vmem:[#allocation2 + $0x190] sm:$0xff]
    %v115 = vld [vmem:[#allocation2 + $0x198] sm:$0xff]
    %v116 = vld [vmem:[#allocation2 + $0x1a0] sm:$0xff]
    %v117 = vld [vmem:[#allocation2 + $0x1a8] sm:$0xff]
    %v118 = vld [vmem:[#allocation2 + $0x1b0] sm:$0xff]
    %v119 = vld [vmem:[#allocation2 + $0x1b8] sm:$0xff]
    %v120 = vld [vmem:[#allocation2 + $0x1c0] sm:$0xff]
    %v121 = vld [vmem:[#allocation2 + $0x1c8] sm:$0xff]
    %v122 = vld [vmem:[#allocation2 + $0x1d0] sm:$0xff]
    %v123 = vld [vmem:[#allocation2 + $0x1d8] sm:$0xff]
    %v124 = vld [vmem:[#allocation2 + $0x1e0] sm:$0xff]
    %v125 = vld [vmem:[#allocation2 + $0x1e8] sm:$0xff]
    %v126 = vld [vmem:[#allocation2 + $0x1f0] sm:$0xff]
    %v127 = vld [vmem:[#allocation2 + $0x1f8] sm:$0xff]
    %v128 = vld [vmem:[#allocation2 + $0x200] sm:$0xff]
    %v129 = vld [vmem:[#allocation2 + $0x208] sm:$0xff]
    %v130 = vld [vmem:[#allocation2 + $0x210] sm:$0xff]
    %v131 = vld [vmem:[#allocation2 + $0x218] sm:$0xff]
    %v132 = vld [vmem:[#allocation2 + $0x220] sm:$0xff]
    %v133 = vld [vmem:[#allocation2 + $0x228] sm:$0xff]
    %v134 = vld [vmem:[#allocation2 + $0x230] sm:$0xff]
    %v135 = vld [vmem:[#allocation2 + $0x238] sm:$0xff]
    %v136 = vld [vmem:[#allocation2 + $0x240] sm:$0xff]
    %v137 = vld [vmem:[#allocation2 + $0x248] sm:$0xff]
    %v138 = vld [vmem:[#allocation2 + $0x250] sm:$0xff]
    %v139 = vld [vmem:[#allocation2 + $0x258] sm:$0xff]
    %v140 = vld [vmem:[#allocation2 + $0x260] sm:$0xff]
    %v141 = vld [vmem:[#allocation2 + $0x268] sm:$0xff]
    %v142 = vld [vmem:[#allocation2 + $0x270] sm:$0xff]
    %v143 = vld [vmem:[#allocation2 + $0x278] sm:$0xff]
    %v144 = vld [vmem:[#allocation2 + $0x280] sm:$0xff]
    %v145 = vld [vmem:[#allocation2 + $0x288] sm:$0xff]
    %v146 = vld [vmem:[#allocation2 + $0x290] sm:$0xff]
    %v147 = vld [vmem:[#allocation2 + $0x298] sm:$0xff]
    %v148 = vld [vmem:[#allocation2 + $0x2a0] sm:$0xff]
    %v149 = vld [vmem:[#allocation2 + $0x2a8] sm:$0xff]
    %v150 = vld [vmem:[#allocation2 + $0x2b0] sm:$0x1f]
    %v151 = vld [vmem:[#allocation4] sm:$0x1]
    %v153 = vlaneseq
    %v154 = vshrl.u32 %v153, 7
    %v155 = vsub.s32 0, %v154
    %v156 = vrot.slane %v151, %v155
    %vm158 = vcmask 433152
    %v160 = vsel %vm158, %v45, 0
    %v163 = vsel %vm158, %v51, 0
    %v166 = vsel %vm158, %v57, 0
    %v169 = vsel %vm158, %v63, 0
    %vm171 = vcmask 1044480
    %v173 = vsel %vm171, %v150, 0
    %175 = vmatprep.subr.mxu0 0.0
    %176 = vmatpush1.msra.mxu0 %v64
    %177 = vmatprep.subr.mxu0 0.0
    %178 = vmatpush1.msra.mxu0 %v65
    %179 = vmatprep.subr.mxu0 0.0
    %180 = vmatpush1.msra.mxu0 %v66
    %181 = vmatprep.subr.mxu0 0.0
    %182 = vmatpush1.msra.mxu0 %v67
    %183 = vmatprep.subr.mxu0 0.0
    %184 = vmatpush1.msra.mxu0 %v68
    %185 = vmatprep.subr.mxu0 0.0
    %186 = vmatpush1.msra.mxu0 %v69
    %187 = vmatprep.subr.mxu0 0.0
    %188 = vmatpush1.msra.mxu0 %v70
    %189 = vmatprep.subr.mxu0 0.0
    %190 = vmatpush1.msra.mxu0 %v71
    %191 = vmatprep.subr.mxu0 0.0
    %192 = vmatpush1.msra.mxu0 %v72
    %193 = vmatprep.subr.mxu0 0.0
    %194 = vmatpush1.msra.mxu0 %v73
    %195 = vmatprep.subr.mxu0 0.0
    %196 = vmatpush1.msra.mxu0 %v74
    %197 = vmatprep.subr.mxu0 0.0
    %198 = vmatpush1.msra.mxu0 %v75
    %199 = vmatprep.subr.mxu0 0.0
    %200 = vmatpush1.msra.mxu0 %v76
    %201 = vmatprep.subr.mxu0 0.0
    %202 = vmatpush1.msra.mxu0 %v77
    %203 = vmatprep.subr.mxu0 0.0
    %204 = vmatpush1.msra.mxu0 %v78
    %205 = vmatprep.subr.mxu0 0.0
    %206 = vmatpush1.msra.mxu0 %v79
    %207 = vmatprep.subr.mxu0 0.0
    %208 = vmatpush1.msra.mxu0 %v80
    %209 = vmatprep.subr.mxu0 0.0
    %210 = vmatpush1.msra.mxu0 %v81
    %211 = vmatprep.subr.mxu0 0.0
    %212 = vmatpush1.msra.mxu0 %v82
    %213 = vmatprep.subr.mxu0 0.0
    %214 = vmatpush1.msra.mxu0 %v83
    %215 = vmatprep.subr.mxu0 0.0
    %216 = vmatpush1.msra.mxu0 %v84
    %217 = vmatprep.subr.mxu0 0.0
    %218 = vmatpush1.msra.mxu0 %v85
    %219 = vmatprep.subr.mxu0 0.0
    %220 = vmatpush1.msra.mxu0 %v86
    %221 = vmatprep.subr.mxu0 0.0
    %222 = vmatpush1.msra.mxu0 %v87
    %223 = vmatprep.subr.mxu0 0.0
    %224 = vmatpush1.msra.mxu0 %v88
    %225 = vmatprep.subr.mxu0 0.0
    %226 = vmatpush1.msra.mxu0 %v89
    %227 = vmatprep.subr.mxu0 0.0
    %228 = vmatpush1.msra.mxu0 %v90
    %229 = vmatprep.subr.mxu0 0.0
    %230 = vmatpush1.msra.mxu0 %v91
    %231 = vmatprep.subr.mxu0 0.0
    %232 = vmatpush1.msra.mxu0 %v92
    %233 = vmatprep.subr.mxu0 0.0
    %234 = vmatpush1.msra.mxu0 %v93
    %235 = vmatprep.subr.mxu0 0.0
    %236 = vmatpush1.msra.mxu0 %v94
    %237 = vmatprep.subr.mxu0 0.0
    %238 = vmatpush1.msra.mxu0 %v95
    %239 = vmatprep.mubr.f32.mxu0 %v41
    %240 = vmatmul.mubr.f32.gmra.mrb[0].mxu0 %v40
    %v241 = vpop.f32.mrb[0].mxu0
    %v242 = vadd.f32 %v156, %v241
    %v243 = vpop.f32.mrb[0].mxu0
    %244 = vmatprep.mubr.f32.mxu0 %v47
    %245 = vmatmul.mubr.f32.gmra.mrb[0].mxu0 %v46
    %v246 = vpop.f32.mrb[0].mxu0
    %v247 = vadd.f32 %v156, %v246
    %v248 = vpop.f32.mrb[0].mxu0
    %249 = vmatprep.mubr.f32.mxu0 %v53
    %250 = vmatmul.mubr.f32.gmra.mrb[0].mxu0 %v52
    %v251 = vpop.f32.mrb[0].mxu0
    %v252 = vadd.f32 %v156, %v251
    %v253 = vpop.f32.mrb[0].mxu0
    %254 = vmatprep.mubr.f32.mxu0 %v59
    %255 = vmatmul.mubr.f32.gmra.mrb[0].mxu0 %v58
    %v256 = vpop.f32.mrb[0].mxu0
    %v257 = vadd.f32 %v156, %v256
    %v258 = vpop.f32.mrb[0].mxu0
    %259 = vdwg.mxu0
    %260 = vmatprep.subr.mxu0 0.0
    %261 = vmatpush1.msra.mxu0 %v96
    %262 = vmatprep.subr.mxu0 0.0
    %263 = vmatpush1.msra.mxu0 %v97
    %264 = vmatprep.subr.mxu0 0.0
    %265 = vmatpush1.msra.mxu0 %v98
    %266 = vmatprep.subr.mxu0 0.0
    %267 = vmatpush1.msra.mxu0 %v99
    %268 = vmatprep.subr.mxu0 0.0
    %269 = vmatpush1.msra.mxu0 %v100
    %270 = vmatprep.subr.mxu0 0.0
    %271 = vmatpush1.msra.mxu0 %v101
    %272 = vmatprep.subr.mxu0 0.0
    %273 = vmatpush1.msra.mxu0 %v102
    %274 = vmatprep.subr.mxu0 0.0
    %275 = vmatpush1.msra.mxu0 %v103
    %276 = vmatprep.subr.mxu0 0.0
    %277 = vmatpush1.msra.mxu0 %v104
    %278 = vmatprep.subr.mxu0 0.0
    %279 = vmatpush1.msra.mxu0 %v105
    %280 = vmatprep.subr.mxu0 0.0
    %281 = vmatpush1.msra.mxu0 %v106
    %282 = vmatprep.subr.mxu0 0.0
    %283 = vmatpush1.msra.mxu0 %v107
    %284 = vmatprep.subr.mxu0 0.0
    %285 = vmatpush1.msra.mxu0 %v108
    %286 = vmatprep.subr.mxu0 0.0
    %287 = vmatpush1.msra.mxu0 %v109
    %288 = vmatprep.subr.mxu0 0.0
    %289 = vmatpush1.msra.mxu0 %v110
    %290 = vmatprep.subr.mxu0 0.0
    %291 = vmatpush1.msra.mxu0 %v111
    %292 = vmatprep.subr.mxu0 0.0
    %293 = vmatpush1.msra.mxu0 %v112
    %294 = vmatprep.subr.mxu0 0.0
    %295 = vmatpush1.msra.mxu0 %v113
    %296 = vmatprep.subr.mxu0 0.0
    %297 = vmatpush1.msra.mxu0 %v114
    %298 = vmatprep.subr.mxu0 0.0
    %299 = vmatpush1.msra.mxu0 %v115
    %300 = vmatprep.subr.mxu0 0.0
    %301 = vmatpush1.msra.mxu0 %v116
    %302 = vmatprep.subr.mxu0 0.0
    %303 = vmatpush1.msra.mxu0 %v117
    %304 = vmatprep.subr.mxu0 0.0
    %305 = vmatpush1.msra.mxu0 %v118
    %306 = vmatprep.subr.mxu0 0.0
    %307 = vmatpush1.msra.mxu0 %v119
    %308 = vmatprep.subr.mxu0 0.0
    %309 = vmatpush1.msra.mxu0 %v120
    %310 = vmatprep.subr.mxu0 0.0
    %311 = vmatpush1.msra.mxu0 %v121
    %312 = vmatprep.subr.mxu0 0.0
    %313 = vmatpush1.msra.mxu0 %v122
    %314 = vmatprep.subr.mxu0 0.0
    %315 = vmatpush1.msra.mxu0 %v123
    %316 = vmatprep.subr.mxu0 0.0
    %317 = vmatpush1.msra.mxu0 %v124
    %318 = vmatprep.subr.mxu0 0.0
    %319 = vmatpush1.msra.mxu0 %v125
    %320 = vmatprep.subr.mxu0 0.0
    %321 = vmatpush1.msra.mxu0 %v126
    %322 = vmatprep.subr.mxu0 0.0
    %323 = vmatpush1.msra.mxu0 %v127
    %324 = vmatprep.mubr.f32.mxu0 %v43
    %325 = vmatmul.mubr.f32.gmra.mrb[0].mxu0 %v42
    %v326 = vpop.f32.mrb[0].mxu0
    %v327 = vadd.f32 %v242, %v326
    %v328 = vpop.f32.mrb[0].mxu0
    %329 = vmatprep.mubr.f32.mxu0 %v49
    %330 = vmatmul.mubr.f32.gmra.mrb[0].mxu0 %v48
    %v331 = vpop.f32.mrb[0].mxu0
    %v332 = vadd.f32 %v247, %v331
    %v333 = vpop.f32.mrb[0].mxu0
    %334 = vmatprep.mubr.f32.mxu0 %v55
    %335 = vmatmul.mubr.f32.gmra.mrb[0].mxu0 %v54
    %v336 = vpop.f32.mrb[0].mxu0
    %v337 = vadd.f32 %v252, %v336
    %v338 = vpop.f32.mrb[0].mxu0
    %339 = vmatprep.mubr.f32.mxu0 %v61
    %340 = vmatmul.mubr.f32.gmra.mrb[0].mxu0 %v60
    %v341 = vpop.f32.mrb[0].mxu0
    %v342 = vadd.f32 %v257, %v341
    %v343 = vpop.f32.mrb[0].mxu0
    %344 = vdwg.mxu0
    %345 = vmatprep.subr.mxu0 0.0
    %346 = vmatpush1.msra.mxu0 %v128
    %347 = vmatprep.subr.mxu0 0.0
    %348 = vmatpush1.msra.mxu0 %v129
    %349 = vmatprep.subr.mxu0 0.0
    %350 = vmatpush1.msra.mxu0 %v130
    %351 = vmatprep.subr.mxu0 0.0
    %352 = vmatpush1.msra.mxu0 %v131
    %353 = vmatprep.subr.mxu0 0.0
    %354 = vmatpush1.msra.mxu0 %v132
    %355 = vmatprep.subr.mxu0 0.0
    %356 = vmatpush1.msra.mxu0 %v133
    %357 = vmatprep.subr.mxu0 0.0
    %358 = vmatpush1.msra.mxu0 %v134
    %359 = vmatprep.subr.mxu0 0.0
    %360 = vmatpush1.msra.mxu0 %v135
    %361 = vmatprep.subr.mxu0 0.0
    %362 = vmatpush1.msra.mxu0 %v136
    %363 = vmatprep.subr.mxu0 0.0
    %364 = vmatpush1.msra.mxu0 %v137
    %365 = vmatprep.subr.mxu0 0.0
    %366 = vmatpush1.msra.mxu0 %v138
    %367 = vmatprep.subr.mxu0 0.0
    %368 = vmatpush1.msra.mxu0 %v139
    %369 = vmatprep.subr.mxu0 0.0
    %370 = vmatpush1.msra.mxu0 %v140
    %371 = vmatprep.subr.mxu0 0.0
    %372 = vmatpush1.msra.mxu0 %v141
    %373 = vmatprep.subr.mxu0 0.0
    %374 = vmatpush1.msra.mxu0 %v142
    %375 = vmatprep.subr.mxu0 0.0
    %376 = vmatpush1.msra.mxu0 %v143
    %377 = vmatprep.subr.mxu0 0.0
    %378 = vmatpush1.msra.mxu0 %v144
    %379 = vmatprep.subr.mxu0 0.0
    %380 = vmatpush1.msra.mxu0 %v145
    %381 = vmatprep.subr.mxu0 0.0
    %382 = vmatpush1.msra.mxu0 %v146
    %383 = vmatprep.subr.mxu0 0.0
    %384 = vmatpush1.msra.mxu0 %v147
    %385 = vmatprep.subr.mxu0 0.0
    %386 = vmatpush1.msra.mxu0 %v148
    %387 = vmatprep.subr.mxu0 0.0
    %388 = vmatpush1.msra.mxu0 %v149
    %389 = vmatprep.subr.mxu0 0.0
    %390 = vmatpush1.msra.mxu0 %v173
    %391 = vmatprep.subr.mxu0 0.0
    %392 = vmatpush1.msra.mxu0 0.0
    %393 = vmatprep.subr.mxu0 0.0
    %394 = vmatpush1.msra.mxu0 0.0
    %395 = vmatprep.subr.mxu0 0.0
    %396 = vmatpush1.msra.mxu0 0.0
    %397 = vmatprep.subr.mxu0 0.0
    %398 = vmatpush1.msra.mxu0 0.0
    %399 = vmatprep.subr.mxu0 0.0
    %400 = vmatpush1.msra.mxu0 0.0
    %401 = vmatprep.subr.mxu0 0.0
    %402 = vmatpush1.msra.mxu0 0.0
    %403 = vmatprep.subr.mxu0 0.0
    %404 = vmatpush1.msra.mxu0 0.0
    %405 = vmatprep.subr.mxu0 0.0
    %406 = vmatpush1.msra.mxu0 0.0
    %407 = vmatprep.subr.mxu0 0.0
    %408 = vmatpush1.msra.mxu0 0.0
    %409 = vmatprep.mubr.f32.mxu0 %v160
    %410 = vmatmul.mubr.f32.gmra.mrb[0].mxu0 %v44
    %v411 = vpop.f32.mrb[0].mxu0
    %v412 = vadd.f32 %v327, %v411
    %v413 = vpop.f32.mrb[0].mxu0
    %414 = vmatprep.mubr.f32.mxu0 %v163
    %415 = vmatmul.mubr.f32.gmra.mrb[0].mxu0 %v50
    %v416 = vpop.f32.mrb[0].mxu0
    %v417 = vadd.f32 %v332, %v416
    %v418 = vpop.f32.mrb[0].mxu0
    %419 = vmatprep.mubr.f32.mxu0 %v166
    %420 = vmatmul.mubr.f32.gmra.mrb[0].mxu0 %v56
    %v421 = vpop.f32.mrb[0].mxu0
    %v422 = vadd.f32 %v337, %v421
    %v423 = vpop.f32.mrb[0].mxu0
    %424 = vmatprep.mubr.f32.mxu0 %v169
    %425 = vmatmul.mubr.f32.gmra.mrb[0].mxu0 %v62
    %v426 = vpop.f32.mrb[0].mxu0
    %v427 = vadd.f32 %v342, %v426
    %v428 = vpop.f32.mrb[0].mxu0
    %429 = vdwg.mxu0
    %v430 = vmax.f32 %v412, 0.0
    %v431 = vmax.f32 %v417, 0.0
    %v432 = vmax.f32 %v422, 0.0
    %v433 = vmax.f32 %v427, 0.0
    %434 = vst [vmem:[%s3] sm:$0xff] %v430
    %435 = vst [vmem:[%s3 + $0x8] sm:$0xff] %v431
    %436 = vst [vmem:[%s3 + $0x10] sm:$0xff] %v432
    %437 = vst [vmem:[%s3 + $0x18] sm:$0xff] %v433
    // Predicated region
    $region22: #{easy_upsample_pallas.4} parent=1 // pred_check
      _
    $region23: #{easy_upsample_pallas.4} parent=1 // pred_check_branch
      %439 = sbr.rel (0) target = $region25
    $region24: #{easy_upsample_pallas.4} parent=1 // pred_region
      _
    $region25: #{easy_upsample_pallas.4} parent=1 // pred_fallthru
      _
    // Predicated region
    $region26: #{easy_upsample_pallas.4} parent=1 // pred_check
      _
    $region27: #{easy_upsample_pallas.4} parent=1 // pred_check_branch
      %441 = sbr.rel (0) target = $region29
    $region28: #{easy_upsample_pallas.4} parent=1 // pred_region
      _
    $region29: #{easy_upsample_pallas.4} parent=1 // pred_fallthru
      _
    %442 = vsyncpa [#allocation3], 1
    %443 = vsyncpa [#allocation5], 1

// kernel: easy_upsample_pallas.5
$region0: #{easy_upsample_pallas.5}
  #allocation0 [shape = 'u32[]', space=smem, size = 0x4, offset = 0x4, fixed_abs, tag = 'smem constant byte address 0x4 - core index']
  #allocation1 [shape = 'u32[144,128]{1,0:T(1,128)}', space=vmem, size = 0x12000, scoped, tag = 'internal scratch']
  %s0 = inlined_call_operand.vmem [shape: f32[128,387], index: 0, kind: input, shape index: {}]
  %s1 = inlined_call_operand.vmem [shape: f32[387,64], index: 1, kind: input, shape index: {}]
  %s2 = inlined_call_operand.vmem [shape: f32[1,64], index: 2, kind: input, shape index: {}]
  %s3 = inlined_call_operand.vmem [shape: f32[128,64], index: 3, kind: output, shape index: {}]
  %s4 = sld [smem:[#allocation0]]
  $region22: #{easy_upsample_pallas.5} parent=0
    _
  %s6 = ssub.s32 1, %s4
  %s7 = scalar_select 0, %s6, %s4
  // Predicated region
  $region2: #{easy_upsample_pallas.5} parent=0 // pred_check
    _
  $region3: #{easy_upsample_pallas.5} parent=0 // pred_check_branch
    %9 = sbr.rel (0) target = $region5
  $region4: #{easy_upsample_pallas.5} parent=0 // pred_region
    _
  $region5: #{easy_upsample_pallas.5} parent=0 // pred_fallthru
    _
  // Predicated region
  $region6: #{easy_upsample_pallas.5} parent=0 // pred_check
    _
  $region7: #{easy_upsample_pallas.5} parent=0 // pred_check_branch
    %11 = sbr.rel (0) target = $region9
  $region8: #{easy_upsample_pallas.5} parent=0 // pred_region
    _
  $region9: #{easy_upsample_pallas.5} parent=0 // pred_fallthru
    _
  // Predicated region
  $region10: #{easy_upsample_pallas.5} parent=0 // pred_check
    _
  $region11: #{easy_upsample_pallas.5} parent=0 // pred_check_branch
    %13 = sbr.rel (0) target = $region13
  $region12: #{easy_upsample_pallas.5} parent=0 // pred_region
    _
  $region13: #{easy_upsample_pallas.5} parent=0 // pred_fallthru
    _
  %v14 = vld [vmem:[%s0] sm:$0xff]
  %v15 = vld [vmem:[%s0 + $0x8] sm:$0xff]
  %v16 = vld [vmem:[%s0 + $0x10] sm:$0xff]
  %v17 = vld [vmem:[%s0 + $0x18] sm:$0xff]
  %v18 = vld [vmem:[%s0 + $0x20] sm:$0xff]
  %v19 = vld [vmem:[%s0 + $0x28] sm:$0xff]
  %v20 = vld [vmem:[%s0 + $0x30] sm:$0xff]
  %v21 = vld [vmem:[%s0 + $0x38] sm:$0xff]
  %v22 = vld [vmem:[%s0 + $0x40] sm:$0xff]
  %v23 = vld [vmem:[%s0 + $0x48] sm:$0xff]
  %v24 = vld [vmem:[%s0 + $0x50] sm:$0xff]
  %v25 = vld [vmem:[%s0 + $0x58] sm:$0xff]
  %v26 = vld [vmem:[%s0 + $0x60] sm:$0xff]
  %v27 = vld [vmem:[%s0 + $0x68] sm:$0xff]
  %v28 = vld [vmem:[%s0 + $0x70] sm:$0xff]
  %v29 = vld [vmem:[%s0 + $0x78] sm:$0xff]
  %v30 = vld [vmem:[%s0 + $0x80] sm:$0xff]
  %v31 = vld [vmem:[%s0 + $0x88] sm:$0xff]
  %v32 = vld [vmem:[%s0 + $0x90] sm:$0xff]
  %v33 = vld [vmem:[%s0 + $0x98] sm:$0xff]
  %v34 = vld [vmem:[%s0 + $0xa0] sm:$0xff]
  %v35 = vld [vmem:[%s0 + $0xa8] sm:$0xff]
  %v36 = vld [vmem:[%s0 + $0xb0] sm:$0xff]
  %v37 = vld [vmem:[%s0 + $0xb8] sm:$0xff]
  %v38 = vld [vmem:[%s0 + $0xc0] sm:$0xff]
  %v39 = vld [vmem:[%s0 + $0xc8] sm:$0xff]
  %v40 = vld [vmem:[%s0 + $0xd0] sm:$0xff]
  %v41 = vld [vmem:[%s0 + $0xd8] sm:$0xff]
  %v42 = vld [vmem:[%s0 + $0xe0] sm:$0xff]
  %v43 = vld [vmem:[%s0 + $0xe8] sm:$0xff]
  %v44 = vld [vmem:[%s0 + $0xf0] sm:$0xff]
  %v45 = vld [vmem:[%s0 + $0xf8] sm:$0xff]
  %v46 = vld [vmem:[%s0 + $0x100] sm:$0xff]
  %v47 = vld [vmem:[%s0 + $0x108] sm:$0xff]
  %v48 = vld [vmem:[%s0 + $0x110] sm:$0xff]
  %v49 = vld [vmem:[%s0 + $0x118] sm:$0xff]
  %v50 = vld [vmem:[%s0 + $0x120] sm:$0xff]
  %v51 = vld [vmem:[%s0 + $0x128] sm:$0xff]
  %v52 = vld [vmem:[%s0 + $0x130] sm:$0xff]
  %v53 = vld [vmem:[%s0 + $0x138] sm:$0xff]
  %v54 = vld [vmem:[%s0 + $0x140] sm:$0xff]
  %v55 = vld [vmem:[%s0 + $0x148] sm:$0xff]
  %v56 = vld [vmem:[%s0 + $0x150] sm:$0xff]
  %v57 = vld [vmem:[%s0 + $0x158] sm:$0xff]
  %v58 = vld [vmem:[%s0 + $0x160] sm:$0xff]
  %v59 = vld [vmem:[%s0 + $0x168] sm:$0xff]
  %v60 = vld [vmem:[%s0 + $0x170] sm:$0xff]
  %v61 = vld [vmem:[%s0 + $0x178] sm:$0xff]
  %v62 = vld [vmem:[%s0 + $0x180] sm:$0xff]
  %v63 = vld [vmem:[%s0 + $0x188] sm:$0xff]
  %v64 = vld [vmem:[%s0 + $0x190] sm:$0xff]
  %v65 = vld [vmem:[%s0 + $0x198] sm:$0xff]
  %v66 = vld [vmem:[%s0 + $0x1a0] sm:$0xff]
  %v67 = vld [vmem:[%s0 + $0x1a8] sm:$0xff]
  %v68 = vld [vmem:[%s0 + $0x1b0] sm:$0xff]
  %v69 = vld [vmem:[%s0 + $0x1b8] sm:$0xff]
  %v70 = vld [vmem:[%s0 + $0x1c0] sm:$0xff]
  %v71 = vld [vmem:[%s0 + $0x1c8] sm:$0xff]
  %v72 = vld [vmem:[%s0 + $0x1d0] sm:$0xff]
  %v73 = vld [vmem:[%s0 + $0x1d8] sm:$0xff]
  %v74 = vld [vmem:[%s0 + $0x1e0] sm:$0xff]
  %v75 = vld [vmem:[%s0 + $0x1e8] sm:$0xff]
  %v76 = vld [vmem:[%s0 + $0x1f0] sm:$0xff]
  %v77 = vld [vmem:[%s0 + $0x1f8] sm:$0xff]
  %v78 = vld [vmem:[%s1] sm:$0xff]
  %v79 = vld [vmem:[%s1 + $0x8] sm:$0xff]
  %v80 = vld [vmem:[%s1 + $0x10] sm:$0xff]
  %v81 = vld [vmem:[%s1 + $0x18] sm:$0xff]
  %v82 = vld [vmem:[%s1 + $0x20] sm:$0xff]
  %v83 = vld [vmem:[%s1 + $0x28] sm:$0xff]
  %v84 = vld [vmem:[%s1 + $0x30] sm:$0xff]
  %v85 = vld [vmem:[%s1 + $0x38] sm:$0xff]
  %v86 = vld [vmem:[%s1 + $0x40] sm:$0xff]
  %v87 = vld [vmem:[%s1 + $0x48] sm:$0xff]
  %v88 = vld [vmem:[%s1 + $0x50] sm:$0xff]
  %v89 = vld [vmem:[%s1 + $0x58] sm:$0xff]
  %v90 = vld [vmem:[%s1 + $0x60] sm:$0xff]
  %v91 = vld [vmem:[%s1 + $0x68] sm:$0xff]
  %v92 = vld [vmem:[%s1 + $0x70] sm:$0xff]
  %v93 = vld [vmem:[%s1 + $0x78] sm:$0xff]
  %v94 = vld [vmem:[%s1 + $0x80] sm:$0xff]
  %v95 = vld [vmem:[%s1 + $0x88] sm:$0xff]
  %v96 = vld [vmem:[%s1 + $0x90] sm:$0xff]
  %v97 = vld [vmem:[%s1 + $0x98] sm:$0xff]
  %v98 = vld [vmem:[%s1 + $0xa0] sm:$0xff]
  %v99 = vld [vmem:[%s1 + $0xa8] sm:$0xff]
  %v100 = vld [vmem:[%s1 + $0xb0] sm:$0xff]
  %v101 = vld [vmem:[%s1 + $0xb8] sm:$0xff]
  %v102 = vld [vmem:[%s1 + $0xc0] sm:$0xff]
  %v103 = vld [vmem:[%s1 + $0xc8] sm:$0xff]
  %v104 = vld [vmem:[%s1 + $0xd0] sm:$0xff]
  %v105 = vld [vmem:[%s1 + $0xd8] sm:$0xff]
  %v106 = vld [vmem:[%s1 + $0xe0] sm:$0xff]
  %v107 = vld [vmem:[%s1 + $0xe8] sm:$0xff]
  %v108 = vld [vmem:[%s1 + $0xf0] sm:$0xff]
  %v109 = vld [vmem:[%s1 + $0xf8] sm:$0xff]
  %v110 = vld [vmem:[%s1 + $0x100] sm:$0xff]
  %v111 = vld [vmem:[%s1 + $0x108] sm:$0xff]
  %v112 = vld [vmem:[%s1 + $0x110] sm:$0xff]
  %v113 = vld [vmem:[%s1 + $0x118] sm:$0xff]
  %v114 = vld [vmem:[%s1 + $0x120] sm:$0xff]
  %v115 = vld [vmem:[%s1 + $0x128] sm:$0xff]
  %v116 = vld [vmem:[%s1 + $0x130] sm:$0xff]
  %v117 = vld [vmem:[%s1 + $0x138] sm:$0xff]
  %v118 = vld [vmem:[%s1 + $0x140] sm:$0xff]
  %v119 = vld [vmem:[%s1 + $0x148] sm:$0xff]
  %v120 = vld [vmem:[%s1 + $0x150] sm:$0xff]
  %v121 = vld [vmem:[%s1 + $0x158] sm:$0xff]
  %v122 = vld [vmem:[%s1 + $0x160] sm:$0xff]
  %v123 = vld [vmem:[%s1 + $0x168] sm:$0xff]
  %v124 = vld [vmem:[%s1 + $0x170] sm:$0xff]
  %v125 = vld [vmem:[%s1 + $0x178] sm:$0xff]
  %v126 = vld [vmem:[%s1 + $0x180] sm:$0x7]
  %v127 = vld [vmem:[%s2] sm:$0x1]
  %v129 = vlaneseq
  %v130 = vshrl.u32 %v129, 7
  %v131 = vsub.s32 0, %v130
  %v132 = vrot.slane %v127, %v131
  %vm134 = vcmask 23552
  %v136 = vsel %vm134, %v17, 0
  %v139 = vsel %vm134, %v21, 0
  %v142 = vsel %vm134, %v25, 0
  %v145 = vsel %vm134, %v29, 0
  %v148 = vsel %vm134, %v33, 0
  %v151 = vsel %vm134, %v37, 0
  %v154 = vsel %vm134, %v41, 0
  %v157 = vsel %vm134, %v45, 0
  %v160 = vsel %vm134, %v49, 0
  %v163 = vsel %vm134, %v53, 0
  %v166 = vsel %vm134, %v57, 0
  %v169 = vsel %vm134, %v61, 0
  %v172 = vsel %vm134, %v65, 0
  %v175 = vsel %vm134, %v69, 0
  %v178 = vsel %vm134, %v73, 0
  %v181 = vsel %vm134, %v77, 0
  %vm183 = vcmask 1042432
  %v185 = vsel %vm183, %v126, 0
  %187 = vmatprep.subr.mxu0 0.0
  %188 = vmatpush1.msra.mxu0 %v78
  %189 = vmatprep.subr.mxu0 0.0
  %190 = vmatpush1.msra.mxu0 %v79
  %191 = vmatprep.subr.mxu0 0.0
  %192 = vmatpush1.msra.mxu0 %v80
  %193 = vmatprep.subr.mxu0 0.0
  %194 = vmatpush1.msra.mxu0 %v81
  %195 = vmatprep.subr.mxu0 0.0
  %196 = vmatpush1.msra.mxu0 %v82
  %197 = vmatprep.subr.mxu0 0.0
  %198 = vmatpush1.msra.mxu0 %v83
  %199 = vmatprep.subr.mxu0 0.0
  %200 = vmatpush1.msra.mxu0 %v84
  %201 = vmatprep.subr.mxu0 0.0
  %202 = vmatpush1.msra.mxu0 %v85
  %203 = vmatprep.subr.mxu0 0.0
  %204 = vmatpush1.msra.mxu0 %v86
  %205 = vmatprep.subr.mxu0 0.0
  %206 = vmatpush1.msra.mxu0 %v87
  %207 = vmatprep.subr.mxu0 0.0
  %208 = vmatpush1.msra.mxu0 %v88
  %209 = vmatprep.subr.mxu0 0.0
  %210 = vmatpush1.msra.mxu0 %v89
  %211 = vmatprep.subr.mxu0 0.0
  %212 = vmatpush1.msra.mxu0 %v90
  %213 = vmatprep.subr.mxu0 0.0
  %214 = vmatpush1.msra.mxu0 %v91
  %215 = vmatprep.subr.mxu0 0.0
  %216 = vmatpush1.msra.mxu0 %v92
  %217 = vmatprep.subr.mxu0 0.0
  %218 = vmatpush1.msra.mxu0 %v93
  %219 = vmatprep.subr.mxu0 0.0
  %220 = vmatpush1.msra.mxu0 %v94
  %221 = vmatprep.subr.mxu0 0.0
  %222 = vmatpush1.msra.mxu0 %v95
  %223 = vmatprep.subr.mxu0 0.0
  %224 = vmatpush1.msra.mxu0 %v96
  %225 = vmatprep.subr.mxu0 0.0
  %226 = vmatpush1.msra.mxu0 %v97
  %227 = vmatprep.subr.mxu0 0.0
  %228 = vmatpush1.msra.mxu0 %v98
  %229 = vmatprep.subr.mxu0 0.0
  %230 = vmatpush1.msra.mxu0 %v99
  %231 = vmatprep.subr.mxu0 0.0
  %232 = vmatpush1.msra.mxu0 %v100
  %233 = vmatprep.subr.mxu0 0.0
  %234 = vmatpush1.msra.mxu0 %v101
  %235 = vmatprep.subr.mxu0 0.0
  %236 = vmatpush1.msra.mxu0 %v102
  %237 = vmatprep.subr.mxu0 0.0
  %238 = vmatpush1.msra.mxu0 %v103
  %239 = vmatprep.subr.mxu0 0.0
  %240 = vmatpush1.msra.mxu0 %v104
  %241 = vmatprep.subr.mxu0 0.0
  %242 = vmatpush1.msra.mxu0 %v105
  %243 = vmatprep.subr.mxu0 0.0
  %244 = vmatpush1.msra.mxu0 %v106
  %245 = vmatprep.subr.mxu0 0.0
  %246 = vmatpush1.msra.mxu0 %v107
  %247 = vmatprep.subr.mxu0 0.0
  %248 = vmatpush1.msra.mxu0 %v108
  %249 = vmatprep.subr.mxu0 0.0
  %250 = vmatpush1.msra.mxu0 %v109
  %251 = vmatprep.mubr.f32.mxu0 %v15
  %252 = vmatmul.mubr.f32.gmra.mrb[0].mxu0 %v14
  %v253 = vpop.f32.mrb[0].mxu0
  %v254 = vadd.f32 %v132, %v253
  %v255 = vpop.f32.mrb[0].mxu0
  %256 = vmatprep.mubr.f32.mxu0 %v19
  %257 = vmatmul.mubr.f32.gmra.mrb[0].mxu0 %v18
  %v258 = vpop.f32.mrb[0].mxu0
  %v259 = vadd.f32 %v132, %v258
  %v260 = vpop.f32.mrb[0].mxu0
  %261 = vmatprep.mubr.f32.mxu0 %v23
  %262 = vmatmul.mubr.f32.gmra.mrb[0].mxu0 %v22
  %v263 = vpop.f32.mrb[0].mxu0
  %v264 = vadd.f32 %v132, %v263
  %v265 = vpop.f32.mrb[0].mxu0
  %266 = vmatprep.mubr.f32.mxu0 %v27
  %267 = vmatmul.mubr.f32.gmra.mrb[0].mxu0 %v26
  %v268 = vpop.f32.mrb[0].mxu0
  %v269 = vadd.f32 %v132, %v268
  %v270 = vpop.f32.mrb[0].mxu0
  %271 = vmatprep.mubr.f32.mxu0 %v31
  %272 = vmatmul.mubr.f32.gmra.mrb[0].mxu0 %v30
  %v273 = vpop.f32.mrb[0].mxu0
  %v274 = vadd.f32 %v132, %v273
  %v275 = vpop.f32.mrb[0].mxu0
  %276 = vmatprep.mubr.f32.mxu0 %v35
  %277 = vmatmul.mubr.f32.gmra.mrb[0].mxu0 %v34
  %v278 = vpop.f32.mrb[0].mxu0
  %v279 = vadd.f32 %v132, %v278
  %v280 = vpop.f32.mrb[0].mxu0
  %281 = vmatprep.mubr.f32.mxu0 %v39
  %282 = vmatmul.mubr.f32.gmra.mrb[0].mxu0 %v38
  %v283 = vpop.f32.mrb[0].mxu0
  %v284 = vadd.f32 %v132, %v283
  %v285 = vpop.f32.mrb[0].mxu0
  %286 = vmatprep.mubr.f32.mxu0 %v43
  %287 = vmatmul.mubr.f32.gmra.mrb[0].mxu0 %v42
  %v288 = vpop.f32.mrb[0].mxu0
  %v289 = vadd.f32 %v132, %v288
  %v290 = vpop.f32.mrb[0].mxu0
  %291 = vmatprep.mubr.f32.mxu0 %v47
  %292 = vmatmul.mubr.f32.gmra.mrb[0].mxu0 %v46
  %v293 = vpop.f32.mrb[0].mxu0
  %v294 = vadd.f32 %v132, %v293
  %v295 = vpop.f32.mrb[0].mxu0
  %296 = vmatprep.mubr.f32.mxu0 %v51
  %297 = vmatmul.mubr.f32.gmra.mrb[0].mxu0 %v50
  %v298 = vpop.f32.mrb[0].mxu0
  %v299 = vadd.f32 %v132, %v298
  %v300 = vpop.f32.mrb[0].mxu0
  %301 = vmatprep.mubr.f32.mxu0 %v55
  %302 = vmatmul.mubr.f32.gmra.mrb[0].mxu0 %v54
  %v303 = vpop.f32.mrb[0].mxu0
  %v304 = vadd.f32 %v132, %v303
  %v305 = vpop.f32.mrb[0].mxu0
  %306 = vmatprep.mubr.f32.mxu0 %v59
  %307 = vmatmul.mubr.f32.gmra.mrb[0].mxu0 %v58
  %v308 = vpop.f32.mrb[0].mxu0
  %v309 = vadd.f32 %v132, %v308
  %v310 = vpop.f32.mrb[0].mxu0
  %311 = vmatprep.mubr.f32.mxu0 %v63
  %312 = vmatmul.mubr.f32.gmra.mrb[0].mxu0 %v62
  %v313 = vpop.f32.mrb[0].mxu0
  %v314 = vadd.f32 %v132, %v313
  %v315 = vpop.f32.mrb[0].mxu0
  %316 = vmatprep.mubr.f32.mxu0 %v67
  %317 = vmatmul.mubr.f32.gmra.mrb[0].mxu0 %v66
  %v318 = vpop.f32.mrb[0].mxu0
  %v319 = vadd.f32 %v132, %v318
  %v320 = vpop.f32.mrb[0].mxu0
  %321 = vmatprep.mubr.f32.mxu0 %v71
  %322 = vmatmul.mubr.f32.gmra.mrb[0].mxu0 %v70
  %v323 = vpop.f32.mrb[0].mxu0
  %v324 = vadd.f32 %v132, %v323
  %v325 = vpop.f32.mrb[0].mxu0
  %326 = vmatprep.mubr.f32.mxu0 %v75
  %327 = vmatmul.mubr.f32.gmra.mrb[0].mxu0 %v74
  %v328 = vpop.f32.mrb[0].mxu0
  %v329 = vadd.f32 %v132, %v328
  %v330 = vpop.f32.mrb[0].mxu0
  %331 = vdwg.mxu0
  %332 = vmatprep.subr.mxu0 0.0
  %333 = vmatpush1.msra.mxu0 %v110
  %334 = vmatprep.subr.mxu0 0.0
  %335 = vmatpush1.msra.mxu0 %v111
  %336 = vmatprep.subr.mxu0 0.0
  %337 = vmatpush1.msra.mxu0 %v112
  %338 = vmatprep.subr.mxu0 0.0
  %339 = vmatpush1.msra.mxu0 %v113
  %340 = vmatprep.subr.mxu0 0.0
  %341 = vmatpush1.msra.mxu0 %v114
  %342 = vmatprep.subr.mxu0 0.0
  %343 = vmatpush1.msra.mxu0 %v115
  %344 = vmatprep.subr.mxu0 0.0
  %345 = vmatpush1.msra.mxu0 %v116
  %346 = vmatprep.subr.mxu0 0.0
  %347 = vmatpush1.msra.mxu0 %v117
  %348 = vmatprep.subr.mxu0 0.0
  %349 = vmatpush1.msra.mxu0 %v118
  %350 = vmatprep.subr.mxu0 0.0
  %351 = vmatpush1.msra.mxu0 %v119
  %352 = vmatprep.subr.mxu0 0.0
  %353 = vmatpush1.msra.mxu0 %v120
  %354 = vmatprep.subr.mxu0 0.0
  %355 = vmatpush1.msra.mxu0 %v121
  %356 = vmatprep.subr.mxu0 0.0
  %357 = vmatpush1.msra.mxu0 %v122
  %358 = vmatprep.subr.mxu0 0.0
  %359 = vmatpush1.msra.mxu0 %v123
  %360 = vmatprep.subr.mxu0 0.0
  %361 = vmatpush1.msra.mxu0 %v124
  %362 = vmatprep.subr.mxu0 0.0
  %363 = vmatpush1.msra.mxu0 %v125
  %364 = vmatprep.subr.mxu0 0.0
  %365 = vmatpush1.msra.mxu0 %v185
  %366 = vmatprep.subr.mxu0 0.0
  %367 = vmatpush1.msra.mxu0 0.0
  %368 = vmatprep.subr.mxu0 0.0
  %369 = vmatpush1.msra.mxu0 0.0
  %370 = vmatprep.subr.mxu0 0.0
  %371 = vmatpush1.msra.mxu0 0.0
  %372 = vmatprep.subr.mxu0 0.0
  %373 = vmatpush1.msra.mxu0 0.0
  %374 = vmatprep.subr.mxu0 0.0
  %375 = vmatpush1.msra.mxu0 0.0
  %376 = vmatprep.subr.mxu0 0.0
  %377 = vmatpush1.msra.mxu0 0.0
  %378 = vmatprep.subr.mxu0 0.0
  %379 = vmatpush1.msra.mxu0 0.0
  %380 = vmatprep.subr.mxu0 0.0
  %381 = vmatpush1.msra.mxu0 0.0
  %382 = vmatprep.subr.mxu0 0.0
  %383 = vmatpush1.msra.mxu0 0.0
  %384 = vmatprep.subr.mxu0 0.0
  %385 = vmatpush1.msra.mxu0 0.0
  %386 = vmatprep.subr.mxu0 0.0
  %387 = vmatpush1.msra.mxu0 0.0
  %388 = vmatprep.subr.mxu0 0.0
  %389 = vmatpush1.msra.mxu0 0.0
  %390 = vmatprep.subr.mxu0 0.0
  %391 = vmatpush1.msra.mxu0 0.0
  %392 = vmatprep.subr.mxu0 0.0
  %393 = vmatpush1.msra.mxu0 0.0
  %394 = vmatprep.subr.mxu0 0.0
  %395 = vmatpush1.msra.mxu0 0.0
  %396 = vmatprep.mubr.f32.mxu0 %v136
  %397 = vmatmul.mubr.f32.gmra.mrb[0].mxu0 %v16
  %v398 = vpop.f32.mrb[0].mxu0
  %v399 = vadd.f32 %v254, %v398
  %v400 = vpop.f32.mrb[0].mxu0
  %401 = vmatprep.mubr.f32.mxu0 %v139
  %402 = vmatmul.mubr.f32.gmra.mrb[0].mxu0 %v20
  %v403 = vpop.f32.mrb[0].mxu0
  %v404 = vadd.f32 %v259, %v403
  %v405 = vpop.f32.mrb[0].mxu0
  %406 = vmatprep.mubr.f32.mxu0 %v142
  %407 = vmatmul.mubr.f32.gmra.mrb[0].mxu0 %v24
  %v408 = vpop.f32.mrb[0].mxu0
  %v409 = vadd.f32 %v264, %v408
  %v410 = vpop.f32.mrb[0].mxu0
  %411 = vmatprep.mubr.f32.mxu0 %v145
  %412 = vmatmul.mubr.f32.gmra.mrb[0].mxu0 %v28
  %v413 = vpop.f32.mrb[0].mxu0
  %v414 = vadd.f32 %v269, %v413
  %v415 = vpop.f32.mrb[0].mxu0
  %416 = vmatprep.mubr.f32.mxu0 %v148
  %417 = vmatmul.mubr.f32.gmra.mrb[0].mxu0 %v32
  %v418 = vpop.f32.mrb[0].mxu0
  %v419 = vadd.f32 %v274, %v418
  %v420 = vpop.f32.mrb[0].mxu0
  %421 = vmatprep.mubr.f32.mxu0 %v151
  %422 = vmatmul.mubr.f32.gmra.mrb[0].mxu0 %v36
  %v423 = vpop.f32.mrb[0].mxu0
  %v424 = vadd.f32 %v279, %v423
  %v425 = vpop.f32.mrb[0].mxu0
  %426 = vmatprep.mubr.f32.mxu0 %v154
  %427 = vmatmul.mubr.f32.gmra.mrb[0].mxu0 %v40
  %v428 = vpop.f32.mrb[0].mxu0
  %v429 = vadd.f32 %v284, %v428
  %v430 = vpop.f32.mrb[0].mxu0
  %431 = vmatprep.mubr.f32.mxu0 %v157
  %432 = vmatmul.mubr.f32.gmra.mrb[0].mxu0 %v44
  %v433 = vpop.f32.mrb[0].mxu0
  %v434 = vadd.f32 %v289, %v433
  %v435 = vpop.f32.mrb[0].mxu0
  %436 = vmatprep.mubr.f32.mxu0 %v160
  %437 = vmatmul.mubr.f32.gmra.mrb[0].mxu0 %v48
  %v438 = vpop.f32.mrb[0].mxu0
  %v439 = vadd.f32 %v294, %v438
  %v440 = vpop.f32.mrb[0].mxu0
  %441 = vmatprep.mubr.f32.mxu0 %v163
  %442 = vmatmul.mubr.f32.gmra.mrb[0].mxu0 %v52
  %v443 = vpop.f32.mrb[0].mxu0
  %v444 = vadd.f32 %v299, %v443
  %v445 = vpop.f32.mrb[0].mxu0
  %446 = vmatprep.mubr.f32.mxu0 %v166
  %447 = vmatmul.mubr.f32.gmra.mrb[0].mxu0 %v56
  %v448 = vpop.f32.mrb[0].mxu0
  %v449 = vadd.f32 %v304, %v448
  %v450 = vpop.f32.mrb[0].mxu0
  %451 = vmatprep.mubr.f32.mxu0 %v169
  %452 = vmatmul.mubr.f32.gmra.mrb[0].mxu0 %v60
  %v453 = vpop.f32.mrb[0].mxu0
  %v454 = vadd.f32 %v309, %v453
  %v455 = vpop.f32.mrb[0].mxu0
  %456 = vmatprep.mubr.f32.mxu0 %v172
  %457 = vmatmul.mubr.f32.gmra.mrb[0].mxu0 %v64
  %v458 = vpop.f32.mrb[0].mxu0
  %v459 = vadd.f32 %v314, %v458
  %v460 = vpop.f32.mrb[0].mxu0
  %461 = vmatprep.mubr.f32.mxu0 %v175
  %462 = vmatmul.mubr.f32.gmra.mrb[0].mxu0 %v68
  %v463 = vpop.f32.mrb[0].mxu0
  %v464 = vadd.f32 %v319, %v463
  %v465 = vpop.f32.mrb[0].mxu0
  %466 = vmatprep.mubr.f32.mxu0 %v178
  %467 = vmatmul.mubr.f32.gmra.mrb[0].mxu0 %v72
  %v468 = vpop.f32.mrb[0].mxu0
  %v469 = vadd.f32 %v324, %v468
  %v470 = vpop.f32.mrb[0].mxu0
  %471 = vmatprep.mubr.f32.mxu0 %v181
  %472 = vmatmul.mubr.f32.gmra.mrb[0].mxu0 %v76
  %v473 = vpop.f32.mrb[0].mxu0
  %v474 = vadd.f32 %v329, %v473
  %v475 = vpop.f32.mrb[0].mxu0
  %476 = vdwg.mxu0
  %v477 = vmax.f32 %v399, 0.0
  %v478 = vmax.f32 %v404, 0.0
  %v479 = vmax.f32 %v409, 0.0
  %v480 = vmax.f32 %v414, 0.0
  %v481 = vmax.f32 %v419, 0.0
  %v482 = vmax.f32 %v424, 0.0
  %v483 = vmax.f32 %v429, 0.0
  %v484 = vmax.f32 %v434, 0.0
  %v485 = vmax.f32 %v439, 0.0
  %v486 = vmax.f32 %v444, 0.0
  %v487 = vmax.f32 %v449, 0.0
  %v488 = vmax.f32 %v454, 0.0
  %v489 = vmax.f32 %v459, 0.0
  %v490 = vmax.f32 %v464, 0.0
  %v491 = vmax.f32 %v469, 0.0
  %v492 = vmax.f32 %v474, 0.0
  %vm493 = vcmask 523264
  %494 = vst.msk [vmem:[%s3] sm:$0xff] %vm493, %v477
  %495 = vst.msk [vmem:[%s3 + $0x8] sm:$0xff] %vm493, %v478
  %496 = vst.msk [vmem:[%s3 + $0x10] sm:$0xff] %vm493, %v479
  %497 = vst.msk [vmem:[%s3 + $0x18] sm:$0xff] %vm493, %v480
  %498 = vst.msk [vmem:[%s3 + $0x20] sm:$0xff] %vm493, %v481
  %499 = vst.msk [vmem:[%s3 + $0x28] sm:$0xff] %vm493, %v482
  %500 = vst.msk [vmem:[%s3 + $0x30] sm:$0xff] %vm493, %v483
  %501 = vst.msk [vmem:[%s3 + $0x38] sm:$0xff] %vm493, %v484
  %502 = vst.msk [vmem:[%s3 + $0x40] sm:$0xff] %vm493, %v485
  %503 = vst.msk [vmem:[%s3 + $0x48] sm:$0xff] %vm493, %v486
  %504 = vst.msk [vmem:[%s3 + $0x50] sm:$0xff] %vm493, %v487
  %505 = vst.msk [vmem:[%s3 + $0x58] sm:$0xff] %vm493, %v488
  %506 = vst.msk [vmem:[%s3 + $0x60] sm:$0xff] %vm493, %v489
  %507 = vst.msk [vmem:[%s3 + $0x68] sm:$0xff] %vm493, %v490
  %508 = vst.msk [vmem:[%s3 + $0x70] sm:$0xff] %vm493, %v491
  %509 = vst.msk [vmem:[%s3 + $0x78] sm:$0xff] %vm493, %v492
  // Predicated region
  $region14: #{easy_upsample_pallas.5} parent=0 // pred_check
    _
  $region15: #{easy_upsample_pallas.5} parent=0 // pred_check_branch
    %511 = sbr.rel (0) target = $region17
  $region16: #{easy_upsample_pallas.5} parent=0 // pred_region
    _
  $region17: #{easy_upsample_pallas.5} parent=0 // pred_fallthru
    _
  // Predicated region
  $region18: #{easy_upsample_pallas.5} parent=0 // pred_check
    _
  $region19: #{easy_upsample_pallas.5} parent=0 // pred_check_branch
    %513 = sbr.rel (0) target = $region21
  $region20: #{easy_upsample_pallas.5} parent=0 // pred_region
    _
  $region21: #{easy_upsample_pallas.5} parent=0 // pred_fallthru
    _

// kernel: easy_upsample_pallas.6
$region0: #{easy_upsample_pallas.6}
  #allocation0 [shape = 'u32[]', space=smem, size = 0x4, offset = 0x4, fixed_abs, tag = 'smem constant byte address 0x4 - core index']
  #allocation1 [shape = 'u32[144,128]{1,0:T(1,128)}', space=vmem, size = 0x12000, scoped, tag = 'internal scratch']
  %s0 = inlined_call_operand.vmem [shape: f32[512,225], index: 0, kind: input, shape index: {}]
  %s1 = inlined_call_operand.vmem [shape: f32[225,32], index: 1, kind: input, shape index: {}]
  %s2 = inlined_call_operand.vmem [shape: f32[1,32], index: 2, kind: input, shape index: {}]
  %s3 = inlined_call_operand.vmem [shape: f32[512,32], index: 3, kind: output, shape index: {}]
  %s4 = sld [smem:[#allocation0]]
  $region22: #{easy_upsample_pallas.6} parent=0
    _
  %s6 = ssub.s32 1, %s4
  %s7 = scalar_select 0, %s6, %s4
  // Predicated region
  $region2: #{easy_upsample_pallas.6} parent=0 // pred_check
    _
  $region3: #{easy_upsample_pallas.6} parent=0 // pred_check_branch
    %9 = sbr.rel (0) target = $region5
  $region4: #{easy_upsample_pallas.6} parent=0 // pred_region
    _
  $region5: #{easy_upsample_pallas.6} parent=0 // pred_fallthru
    _
  // Predicated region
  $region6: #{easy_upsample_pallas.6} parent=0 // pred_check
    _
  $region7: #{easy_upsample_pallas.6} parent=0 // pred_check_branch
    %11 = sbr.rel (0) target = $region9
  $region8: #{easy_upsample_pallas.6} parent=0 // pred_region
    _
  $region9: #{easy_upsample_pallas.6} parent=0 // pred_fallthru
    _
  // Predicated region
  $region10: #{easy_upsample_pallas.6} parent=0 // pred_check
    _
  $region11: #{easy_upsample_pallas.6} parent=0 // pred_check_branch
    %13 = sbr.rel (0) target = $region13
  $region12: #{easy_upsample_pallas.6} parent=0 // pred_region
    _
  $region13: #{easy_upsample_pallas.6} parent=0 // pred_fallthru
    _
  %v14 = vld [vmem:[%s0] sm:$0xff]
  %v15 = vld [vmem:[%s0 + $0x8] sm:$0xff]
  %v16 = vld [vmem:[%s0 + $0x10] sm:$0xff]
  %v17 = vld [vmem:[%s0 + $0x18] sm:$0xff]
  %v18 = vld [vmem:[%s0 + $0x20] sm:$0xff]
  %v19 = vld [vmem:[%s0 + $0x28] sm:$0xff]
  %v20 = vld [vmem:[%s0 + $0x30] sm:$0xff]
  %v21 = vld [vmem:[%s0 + $0x38] sm:$0xff]
  %v22 = vld [vmem:[%s0 + $0x40] sm:$0xff]
  %v23 = vld [vmem:[%s0 + $0x48] sm:$0xff]
  %v24 = vld [vmem:[%s0 + $0x50] sm:$0xff]
  %v25 = vld [vmem:[%s0 + $0x58] sm:$0xff]
  %v26 = vld [vmem:[%s0 + $0x60] sm:$0xff]
  %v27 = vld [vmem:[%s0 + $0x68] sm:$0xff]
  %v28 = vld [vmem:[%s0 + $0x70] sm:$0xff]
  %v29 = vld [vmem:[%s0 + $0x78] sm:$0xff]
  %v30 = vld [vmem:[%s0 + $0x80] sm:$0xff]
  %v31 = vld [vmem:[%s0 + $0x88] sm:$0xff]
  %v32 = vld [vmem:[%s0 + $0x90] sm:$0xff]
  %v33 = vld [vmem:[%s0 + $0x98] sm:$0xff]
  %v34 = vld [vmem:[%s0 + $0xa0] sm:$0xff]
  %v35 = vld [vmem:[%s0 + $0xa8] sm:$0xff]
  %v36 = vld [vmem:[%s0 + $0xb0] sm:$0xff]
  %v37 = vld [vmem:[%s0 + $0xb8] sm:$0xff]
  %v38 = vld [vmem:[%s0 + $0xc0] sm:$0xff]
  %v39 = vld [vmem:[%s0 + $0xc8] sm:$0xff]
  %v40 = vld [vmem:[%s0 + $0xd0] sm:$0xff]
  %v41 = vld [vmem:[%s0 + $0xd8] sm:$0xff]
  %v42 = vld [vmem:[%s0 + $0xe0] sm:$0xff]
  %v43 = vld [vmem:[%s0 + $0xe8] sm:$0xff]
  %v44 = vld [vmem:[%s0 + $0xf0] sm:$0xff]
  %v45 = vld [vmem:[%s0 + $0xf8] sm:$0xff]
  %v46 = vld [vmem:[%s0 + $0x100] sm:$0xff]
  %v47 = vld [vmem:[%s0 + $0x108] sm:$0xff]
  %v48 = vld [vmem:[%s0 + $0x110] sm:$0xff]
  %v49 = vld [vmem:[%s0 + $0x118] sm:$0xff]
  %v50 = vld [vmem:[%s0 + $0x120] sm:$0xff]
  %v51 = vld [vmem:[%s0 + $0x128] sm:$0xff]
  %v52 = vld [vmem:[%s0 + $0x130] sm:$0xff]
  %v53 = vld [vmem:[%s0 + $0x138] sm:$0xff]
  %v54 = vld [vmem:[%s0 + $0x140] sm:$0xff]
  %v55 = vld [vmem:[%s0 + $0x148] sm:$0xff]
  %v56 = vld [vmem:[%s0 + $0x150] sm:$0xff]
  %v57 = vld [vmem:[%s0 + $0x158] sm:$0xff]
  %v58 = vld [vmem:[%s0 + $0x160] sm:$0xff]
  %v59 = vld [vmem:[%s0 + $0x168] sm:$0xff]
  %v60 = vld [vmem:[%s0 + $0x170] sm:$0xff]
  %v61 = vld [vmem:[%s0 + $0x178] sm:$0xff]
  %v62 = vld [vmem:[%s0 + $0x180] sm:$0xff]
  %v63 = vld [vmem:[%s0 + $0x188] sm:$0xff]
  %v64 = vld [vmem:[%s0 + $0x190] sm:$0xff]
  %v65 = vld [vmem:[%s0 + $0x198] sm:$0xff]
  %v66 = vld [vmem:[%s0 + $0x1a0] sm:$0xff]
  %v67 = vld [vmem:[%s0 + $0x1a8] sm:$0xff]
  %v68 = vld [vmem:[%s0 + $0x1b0] sm:$0xff]
  %v69 = vld [vmem:[%s0 + $0x1b8] sm:$0xff]
  %v70 = vld [vmem:[%s0 + $0x1c0] sm:$0xff]
  %v71 = vld [vmem:[%s0 + $0x1c8] sm:$0xff]
  %v72 = vld [vmem:[%s0 + $0x1d0] sm:$0xff]
  %v73 = vld [vmem:[%s0 + $0x1d8] sm:$0xff]
  %v74 = vld [vmem:[%s0 + $0x1e0] sm:$0xff]
  %v75 = vld [vmem:[%s0 + $0x1e8] sm:$0xff]
  %v76 = vld [vmem:[%s0 + $0x1f0] sm:$0xff]
  %v77 = vld [vmem:[%s0 + $0x1f8] sm:$0xff]
  %v78 = vld [vmem:[%s0 + $0x200] sm:$0xff]
  %v79 = vld [vmem:[%s0 + $0x208] sm:$0xff]
  %v80 = vld [vmem:[%s0 + $0x210] sm:$0xff]
  %v81 = vld [vmem:[%s0 + $0x218] sm:$0xff]
  %v82 = vld [vmem:[%s0 + $0x220] sm:$0xff]
  %v83 = vld [vmem:[%s0 + $0x228] sm:$0xff]
  %v84 = vld [vmem:[%s0 + $0x230] sm:$0xff]
  %v85 = vld [vmem:[%s0 + $0x238] sm:$0xff]
  %v86 = vld [vmem:[%s0 + $0x240] sm:$0xff]
  %v87 = vld [vmem:[%s0 + $0x248] sm:$0xff]
  %v88 = vld [vmem:[%s0 + $0x250] sm:$0xff]
  %v89 = vld [vmem:[%s0 + $0x258] sm:$0xff]
  %v90 = vld [vmem:[%s0 + $0x260] sm:$0xff]
  %v91 = vld [vmem:[%s0 + $0x268] sm:$0xff]
  %v92 = vld [vmem:[%s0 + $0x270] sm:$0xff]
  %v93 = vld [vmem:[%s0 + $0x278] sm:$0xff]
  %v94 = vld [vmem:[%s0 + $0x280] sm:$0xff]
  %v95 = vld [vmem:[%s0 + $0x288] sm:$0xff]
  %v96 = vld [vmem:[%s0 + $0x290] sm:$0xff]
  %v97 = vld [vmem:[%s0 + $0x298] sm:$0xff]
  %v98 = vld [vmem:[%s0 + $0x2a0] sm:$0xff]
  %v99 = vld [vmem:[%s0 + $0x2a8] sm:$0xff]
  %v100 = vld [vmem:[%s0 + $0x2b0] sm:$0xff]
  %v101 = vld [vmem:[%s0 + $0x2b8] sm:$0xff]
  %v102 = vld [vmem:[%s0 + $0x2c0] sm:$0xff]
  %v103 = vld [vmem:[%s0 + $0x2c8] sm:$0xff]
  %v104 = vld [vmem:[%s0 + $0x2d0] sm:$0xff]
  %v105 = vld [vmem:[%s0 + $0x2d8] sm:$0xff]
  %v106 = vld [vmem:[%s0 + $0x2e0] sm:$0xff]
  %v107 = vld [vmem:[%s0 + $0x2e8] sm:$0xff]
  %v108 = vld [vmem:[%s0 + $0x2f0] sm:$0xff]
  %v109 = vld [vmem:[%s0 + $0x2f8] sm:$0xff]
  %v110 = vld [vmem:[%s0 + $0x300] sm:$0xff]
  %v111 = vld [vmem:[%s0 + $0x308] sm:$0xff]
  %v112 = vld [vmem:[%s0 + $0x310] sm:$0xff]
  %v113 = vld [vmem:[%s0 + $0x318] sm:$0xff]
  %v114 = vld [vmem:[%s0 + $0x320] sm:$0xff]
  %v115 = vld [vmem:[%s0 + $0x328] sm:$0xff]
  %v116 = vld [vmem:[%s0 + $0x330] sm:$0xff]
  %v117 = vld [vmem:[%s0 + $0x338] sm:$0xff]
  %v118 = vld [vmem:[%s0 + $0x340] sm:$0xff]
  %v119 = vld [vmem:[%s0 + $0x348] sm:$0xff]
  %v120 = vld [vmem:[%s0 + $0x350] sm:$0xff]
  %v121 = vld [vmem:[%s0 + $0x358] sm:$0xff]
  %v122 = vld [vmem:[%s0 + $0x360] sm:$0xff]
  %v123 = vld [vmem:[%s0 + $0x368] sm:$0xff]
  %v124 = vld [vmem:[%s0 + $0x370] sm:$0xff]
  %v125 = vld [vmem:[%s0 + $0x378] sm:$0xff]
  %v126 = vld [vmem:[%s0 + $0x380] sm:$0xff]
  %v127 = vld [vmem:[%s0 + $0x388] sm:$0xff]
  %v128 = vld [vmem:[%s0 + $0x390] sm:$0xff]
  %v129 = vld [vmem:[%s0 + $0x398] sm:$0xff]
  %v130 = vld [vmem:[%s0 + $0x3a0] sm:$0xff]
  %v131 = vld [vmem:[%s0 + $0x3a8] sm:$0xff]
  %v132 = vld [vmem:[%s0 + $0x3b0] sm:$0xff]
  %v133 = vld [vmem:[%s0 + $0x3b8] sm:$0xff]
  %v134 = vld [vmem:[%s0 + $0x3c0] sm:$0xff]
  %v135 = vld [vmem:[%s0 + $0x3c8] sm:$0xff]
  %v136 = vld [vmem:[%s0 + $0x3d0] sm:$0xff]
  %v137 = vld [vmem:[%s0 + $0x3d8] sm:$0xff]
  %v138 = vld [vmem:[%s0 + $0x3e0] sm:$0xff]
  %v139 = vld [vmem:[%s0 + $0x3e8] sm:$0xff]
  %v140 = vld [vmem:[%s0 + $0x3f0] sm:$0xff]
  %v141 = vld [vmem:[%s0 + $0x3f8] sm:$0xff]
  %v142 = vld [vmem:[%s1] sm:$0xff]
  %v143 = vld [vmem:[%s1 + $0x8] sm:$0xff]
  %v144 = vld [vmem:[%s1 + $0x10] sm:$0xff]
  %v145 = vld [vmem:[%s1 + $0x18] sm:$0xff]
  %v146 = vld [vmem:[%s1 + $0x20] sm:$0xff]
  %v147 = vld [vmem:[%s1 + $0x28] sm:$0xff]
  %v148 = vld [vmem:[%s1 + $0x30] sm:$0xff]
  %v149 = vld [vmem:[%s1 + $0x38] sm:$0xff]
  %v150 = vld [vmem:[%s1 + $0x40] sm:$0xff]
  %v151 = vld [vmem:[%s1 + $0x48] sm:$0xff]
  %v152 = vld [vmem:[%s1 + $0x50] sm:$0xff]
  %v153 = vld [vmem:[%s1 + $0x58] sm:$0xff]
  %v154 = vld [vmem:[%s1 + $0x60] sm:$0xff]
  %v155 = vld [vmem:[%s1 + $0x68] sm:$0xff]
  %v156 = vld [vmem:[%s1 + $0x70] sm:$0xff]
  %v157 = vld [vmem:[%s1 + $0x78] sm:$0xff]
  %v158 = vld [vmem:[%s1 + $0x80] sm:$0xff]
  %v159 = vld [vmem:[%s1 + $0x88] sm:$0xff]
  %v160 = vld [vmem:[%s1 + $0x90] sm:$0xff]
  %v161 = vld [vmem:[%s1 + $0x98] sm:$0xff]
  %v162 = vld [vmem:[%s1 + $0xa0] sm:$0xff]
  %v163 = vld [vmem:[%s1 + $0xa8] sm:$0xff]
  %v164 = vld [vmem:[%s1 + $0xb0] sm:$0xff]
  %v165 = vld [vmem:[%s1 + $0xb8] sm:$0xff]
  %v166 = vld [vmem:[%s1 + $0xc0] sm:$0xff]
  %v167 = vld [vmem:[%s1 + $0xc8] sm:$0xff]
  %v168 = vld [vmem:[%s1 + $0xd0] sm:$0xff]
  %v169 = vld [vmem:[%s1 + $0xd8] sm:$0xff]
  %v170 = vld [vmem:[%s1 + $0xe0] sm:$0x1]
  %v171 = vld [vmem:[%s2] sm:$0x1]
  %v173 = vlaneseq
  %v174 = vshrl.u32 %v173, 7
  %v175 = vsub.s32 0, %v174
  %v176 = vrot.slane %v171, %v175
  %vm178 = vcmask 793600
  %v180 = vsel %vm178, %v15, 0
  %v183 = vsel %vm178, %v17, 0
  %v186 = vsel %vm178, %v19, 0
  %v189 = vsel %vm178, %v21, 0
  %v192 = vsel %vm178, %v23, 0
  %v195 = vsel %vm178, %v25, 0
  %v198 = vsel %vm178, %v27, 0
  %v201 = vsel %vm178, %v29, 0
  %v204 = vsel %vm178, %v31, 0
  %v207 = vsel %vm178, %v33, 0
  %v210 = vsel %vm178, %v35, 0
  %v213 = vsel %vm178, %v37, 0
  %v216 = vsel %vm178, %v39, 0
  %v219 = vsel %vm178, %v41, 0
  %v222 = vsel %vm178, %v43, 0
  %v225 = vsel %vm178, %v45, 0
  %v228 = vsel %vm178, %v47, 0
  %v231 = vsel %vm178, %v49, 0
  %v234 = vsel %vm178, %v51, 0
  %v237 = vsel %vm178, %v53, 0
  %v240 = vsel %vm178, %v55, 0
  %v243 = vsel %vm178, %v57, 0
  %v246 = vsel %vm178, %v59, 0
  %v249 = vsel %vm178, %v61, 0
  %v252 = vsel %vm178, %v63, 0
  %v255 = vsel %vm178, %v65, 0
  %v258 = vsel %vm178, %v67, 0
  %v261 = vsel %vm178, %v69, 0
  %v264 = vsel %vm178, %v71, 0
  %v267 = vsel %vm178, %v73, 0
  %v270 = vsel %vm178, %v75, 0
  %v273 = vsel %vm178, %v77, 0
  %v276 = vsel %vm178, %v79, 0
  %v279 = vsel %vm178, %v81, 0
  %v282 = vsel %vm178, %v83, 0
  %v285 = vsel %vm178, %v85, 0
  %v288 = vsel %vm178, %v87, 0
  %v291 = vsel %vm178, %v89, 0
  %v294 = vsel %vm178, %v91, 0
  %v297 = vsel %vm178, %v93, 0
  %v300 = vsel %vm178, %v95, 0
  %v303 = vsel %vm178, %v97, 0
  %v306 = vsel %vm178, %v99, 0
  %v309 = vsel %vm178, %v101, 0
  %v312 = vsel %vm178, %v103, 0
  %v315 = vsel %vm178, %v105, 0
  %v318 = vsel %vm178, %v107, 0
  %v321 = vsel %vm178, %v109, 0
  %v324 = vsel %vm178, %v111, 0
  %v327 = vsel %vm178, %v113, 0
  %v330 = vsel %vm178, %v115, 0
  %v333 = vsel %vm178, %v117, 0
  %v336 = vsel %vm178, %v119, 0
  %v339 = vsel %vm178, %v121, 0
  %v342 = vsel %vm178, %v123, 0
  %v345 = vsel %vm178, %v125, 0
  %v348 = vsel %vm178, %v127, 0
  %v351 = vsel %vm178, %v129, 0
  %v354 = vsel %vm178, %v131, 0
  %v357 = vsel %vm178, %v133, 0
  %v360 = vsel %vm178, %v135, 0
  %v363 = vsel %vm178, %v137, 0
  %v366 = vsel %vm178, %v139, 0
  %v369 = vsel %vm178, %v141, 0
  %vm371 = vcmask 1040384
  %v373 = vsel %vm371, %v170, 0
  %375 = vmatprep.subr.mxu0 0.0
  %376 = vmatpush1.msra.mxu0 %v142
  %377 = vmatprep.subr.mxu0 0.0
  %378 = vmatpush1.msra.mxu0 %v143
  %379 = vmatprep.subr.mxu0 0.0
  %380 = vmatpush1.msra.mxu0 %v144
  %381 = vmatprep.subr.mxu0 0.0
  %382 = vmatpush1.msra.mxu0 %v145
  %383 = vmatprep.subr.mxu0 0.0
  %384 = vmatpush1.msra.mxu0 %v146
  %385 = vmatprep.subr.mxu0 0.0
  %386 = vmatpush1.msra.mxu0 %v147
  %387 = vmatprep.subr.mxu0 0.0
  %388 = vmatpush1.msra.mxu0 %v148
  %389 = vmatprep.subr.mxu0 0.0
  %390 = vmatpush1.msra.mxu0 %v149
  %391 = vmatprep.subr.mxu0 0.0
  %392 = vmatpush1.msra.mxu0 %v150
  %393 = vmatprep.subr.mxu0 0.0
  %394 = vmatpush1.msra.mxu0 %v151
  %395 = vmatprep.subr.mxu0 0.0
  %396 = vmatpush1.msra.mxu0 %v152
  %397 = vmatprep.subr.mxu0 0.0
  %398 = vmatpush1.msra.mxu0 %v153
  %399 = vmatprep.subr.mxu0 0.0
  %400 = vmatpush1.msra.mxu0 %v154
  %401 = vmatprep.subr.mxu0 0.0
  %402 = vmatpush1.msra.mxu0 %v155
  %403 = vmatprep.subr.mxu0 0.0
  %404 = vmatpush1.msra.mxu0 %v156
  %405 = vmatprep.subr.mxu0 0.0
  %406 = vmatpush1.msra.mxu0 %v157
  %407 = vmatprep.subr.mxu0 0.0
  %408 = vmatpush1.msra.mxu0 %v158
  %409 = vmatprep.subr.mxu0 0.0
  %410 = vmatpush1.msra.mxu0 %v159
  %411 = vmatprep.subr.mxu0 0.0
  %412 = vmatpush1.msra.mxu0 %v160
  %413 = vmatprep.subr.mxu0 0.0
  %414 = vmatpush1.msra.mxu0 %v161
  %415 = vmatprep.subr.mxu0 0.0
  %416 = vmatpush1.msra.mxu0 %v162
  %417 = vmatprep.subr.mxu0 0.0
  %418 = vmatpush1.msra.mxu0 %v163
  %419 = vmatprep.subr.mxu0 0.0
  %420 = vmatpush1.msra.mxu0 %v164
  %421 = vmatprep.subr.mxu0 0.0
  %422 = vmatpush1.msra.mxu0 %v165
  %423 = vmatprep.subr.mxu0 0.0
  %424 = vmatpush1.msra.mxu0 %v166
  %425 = vmatprep.subr.mxu0 0.0
  %426 = vmatpush1.msra.mxu0 %v167
  %427 = vmatprep.subr.mxu0 0.0
  %428 = vmatpush1.msra.mxu0 %v168
  %429 = vmatprep.subr.mxu0 0.0
  %430 = vmatpush1.msra.mxu0 %v169
  %431 = vmatprep.subr.mxu0 0.0
  %432 = vmatpush1.msra.mxu0 %v373
  %433 = vmatprep.subr.mxu0 0.0
  %434 = vmatpush1.msra.mxu0 0.0
  %435 = vmatprep.subr.mxu0 0.0
  %436 = vmatpush1.msra.mxu0 0.0
  %437 = vmatprep.subr.mxu0 0.0
  %438 = vmatpush1.msra.mxu0 0.0
  %439 = vmatprep.mubr.f32.mxu0 %v180
  %440 = vmatmul.mubr.f32.gmra.mrb[0].mxu0 %v14
  %v441 = vpop.f32.mrb[0].mxu0
  %v442 = vadd.f32 %v176, %v441
  %v443 = vpop.f32.mrb[0].mxu0
  %444 = vmatprep.mubr.f32.mxu0 %v183
  %445 = vmatmul.mubr.f32.gmra.mrb[0].mxu0 %v16
  %v446 = vpop.f32.mrb[0].mxu0
  %v447 = vadd.f32 %v176, %v446
  %v448 = vpop.f32.mrb[0].mxu0
  %449 = vmatprep.mubr.f32.mxu0 %v186
  %450 = vmatmul.mubr.f32.gmra.mrb[0].mxu0 %v18
  %v451 = vpop.f32.mrb[0].mxu0
  %v452 = vadd.f32 %v176, %v451
  %v453 = vpop.f32.mrb[0].mxu0
  %454 = vmatprep.mubr.f32.mxu0 %v189
  %455 = vmatmul.mubr.f32.gmra.mrb[0].mxu0 %v20
  %v456 = vpop.f32.mrb[0].mxu0
  %v457 = vadd.f32 %v176, %v456
  %v458 = vpop.f32.mrb[0].mxu0
  %459 = vmatprep.mubr.f32.mxu0 %v192
  %460 = vmatmul.mubr.f32.gmra.mrb[0].mxu0 %v22
  %v461 = vpop.f32.mrb[0].mxu0
  %v462 = vadd.f32 %v176, %v461
  %v463 = vpop.f32.mrb[0].mxu0
  %464 = vmatprep.mubr.f32.mxu0 %v195
  %465 = vmatmul.mubr.f32.gmra.mrb[0].mxu0 %v24
  %v466 = vpop.f32.mrb[0].mxu0
  %v467 = vadd.f32 %v176, %v466
  %v468 = vpop.f32.mrb[0].mxu0
  %469 = vmatprep.mubr.f32.mxu0 %v198
  %470 = vmatmul.mubr.f32.gmra.mrb[0].mxu0 %v26
  %v471 = vpop.f32.mrb[0].mxu0
  %v472 = vadd.f32 %v176, %v471
  %v473 = vpop.f32.mrb[0].mxu0
  %474 = vmatprep.mubr.f32.mxu0 %v201
  %475 = vmatmul.mubr.f32.gmra.mrb[0].mxu0 %v28
  %v476 = vpop.f32.mrb[0].mxu0
  %v477 = vadd.f32 %v176, %v476
  %v478 = vpop.f32.mrb[0].mxu0
  %479 = vmatprep.mubr.f32.mxu0 %v204
  %480 = vmatmul.mubr.f32.gmra.mrb[0].mxu0 %v30
  %v481 = vpop.f32.mrb[0].mxu0
  %v482 = vadd.f32 %v176, %v481
  %v483 = vpop.f32.mrb[0].mxu0
  %484 = vmatprep.mubr.f32.mxu0 %v207
  %485 = vmatmul.mubr.f32.gmra.mrb[0].mxu0 %v32
  %v486 = vpop.f32.mrb[0].mxu0
  %v487 = vadd.f32 %v176, %v486
  %v488 = vpop.f32.mrb[0].mxu0
  %489 = vmatprep.mubr.f32.mxu0 %v210
  %490 = vmatmul.mubr.f32.gmra.mrb[0].mxu0 %v34
  %v491 = vpop.f32.mrb[0].mxu0
  %v492 = vadd.f32 %v176, %v491
  %v493 = vpop.f32.mrb[0].mxu0
  %494 = vmatprep.mubr.f32.mxu0 %v213
  %495 = vmatmul.mubr.f32.gmra.mrb[0].mxu0 %v36
  %v496 = vpop.f32.mrb[0].mxu0
  %v497 = vadd.f32 %v176, %v496
  %v498 = vpop.f32.mrb[0].mxu0
  %499 = vmatprep.mubr.f32.mxu0 %v216
  %500 = vmatmul.mubr.f32.gmra.mrb[0].mxu0 %v38
  %v501 = vpop.f32.mrb[0].mxu0
  %v502 = vadd.f32 %v176, %v501
  %v503 = vpop.f32.mrb[0].mxu0
  %504 = vmatprep.mubr.f32.mxu0 %v219
  %505 = vmatmul.mubr.f32.gmra.mrb[0].mxu0 %v40
  %v506 = vpop.f32.mrb[0].mxu0
  %v507 = vadd.f32 %v176, %v506
  %v508 = vpop.f32.mrb[0].mxu0
  %509 = vmatprep.mubr.f32.mxu0 %v222
  %510 = vmatmul.mubr.f32.gmra.mrb[0].mxu0 %v42
  %v511 = vpop.f32.mrb[0].mxu0
  %v512 = vadd.f32 %v176, %v511
  %v513 = vpop.f32.mrb[0].mxu0
  %514 = vmatprep.mubr.f32.mxu0 %v225
  %515 = vmatmul.mubr.f32.gmra.mrb[0].mxu0 %v44
  %v516 = vpop.f32.mrb[0].mxu0
  %v517 = vadd.f32 %v176, %v516
  %v518 = vpop.f32.mrb[0].mxu0
  %519 = vmatprep.mubr.f32.mxu0 %v228
  %520 = vmatmul.mubr.f32.gmra.mrb[0].mxu0 %v46
  %v521 = vpop.f32.mrb[0].mxu0
  %v522 = vadd.f32 %v176, %v521
  %v523 = vpop.f32.mrb[0].mxu0
  %524 = vmatprep.mubr.f32.mxu0 %v231
  %525 = vmatmul.mubr.f32.gmra.mrb[0].mxu0 %v48
  %v526 = vpop.f32.mrb[0].mxu0
  %v527 = vadd.f32 %v176, %v526
  %v528 = vpop.f32.mrb[0].mxu0
  %529 = vmatprep.mubr.f32.mxu0 %v234
  %530 = vmatmul.mubr.f32.gmra.mrb[0].mxu0 %v50
  %v531 = vpop.f32.mrb[0].mxu0
  %v532 = vadd.f32 %v176, %v531
  %v533 = vpop.f32.mrb[0].mxu0
  %534 = vmatprep.mubr.f32.mxu0 %v237
  %535 = vmatmul.mubr.f32.gmra.mrb[0].mxu0 %v52
  %v536 = vpop.f32.mrb[0].mxu0
  %v537 = vadd.f32 %v176, %v536
  %v538 = vpop.f32.mrb[0].mxu0
  %539 = vmatprep.mubr.f32.mxu0 %v240
  %540 = vmatmul.mubr.f32.gmra.mrb[0].mxu0 %v54
  %v541 = vpop.f32.mrb[0].mxu0
  %v542 = vadd.f32 %v176, %v541
  %v543 = vpop.f32.mrb[0].mxu0
  %544 = vmatprep.mubr.f32.mxu0 %v243
  %545 = vmatmul.mubr.f32.gmra.mrb[0].mxu0 %v56
  %v546 = vpop.f32.mrb[0].mxu0
  %v547 = vadd.f32 %v176, %v546
  %v548 = vpop.f32.mrb[0].mxu0
  %549 = vmatprep.mubr.f32.mxu0 %v246
  %550 = vmatmul.mubr.f32.gmra.mrb[0].mxu0 %v58
  %v551 = vpop.f32.mrb[0].mxu0
  %v552 = vadd.f32 %v176, %v551
  %v553 = vpop.f32.mrb[0].mxu0
  %554 = vmatprep.mubr.f32.mxu0 %v249
  %555 = vmatmul.mubr.f32.gmra.mrb[0].mxu0 %v60
  %v556 = vpop.f32.mrb[0].mxu0
  %v557 = vadd.f32 %v176, %v556
  %v558 = vpop.f32.mrb[0].mxu0
  %559 = vmatprep.mubr.f32.mxu0 %v252
  %560 = vmatmul.mubr.f32.gmra.mrb[0].mxu0 %v62
  %v561 = vpop.f32.mrb[0].mxu0
  %v562 = vadd.f32 %v176, %v561
  %v563 = vpop.f32.mrb[0].mxu0
  %564 = vmatprep.mubr.f32.mxu0 %v255
  %565 = vmatmul.mubr.f32.gmra.mrb[0].mxu0 %v64
  %v566 = vpop.f32.mrb[0].mxu0
  %v567 = vadd.f32 %v176, %v566
  %v568 = vpop.f32.mrb[0].mxu0
  %569 = vmatprep.mubr.f32.mxu0 %v258
  %570 = vmatmul.mubr.f32.gmra.mrb[0].mxu0 %v66
  %v571 = vpop.f32.mrb[0].mxu0
  %v572 = vadd.f32 %v176, %v571
  %v573 = vpop.f32.mrb[0].mxu0
  %574 = vmatprep.mubr.f32.mxu0 %v261
  %575 = vmatmul.mubr.f32.gmra.mrb[0].mxu0 %v68
  %v576 = vpop.f32.mrb[0].mxu0
  %v577 = vadd.f32 %v176, %v576
  %v578 = vpop.f32.mrb[0].mxu0
  %579 = vmatprep.mubr.f32.mxu0 %v264
  %580 = vmatmul.mubr.f32.gmra.mrb[0].mxu0 %v70
  %v581 = vpop.f32.mrb[0].mxu0
  %v582 = vadd.f32 %v176, %v581
  %v583 = vpop.f32.mrb[0].mxu0
  %584 = vmatprep.mubr.f32.mxu0 %v267
  %585 = vmatmul.mubr.f32.gmra.mrb[0].mxu0 %v72
  %v586 = vpop.f32.mrb[0].mxu0
  %v587 = vadd.f32 %v176, %v586
  %v588 = vpop.f32.mrb[0].mxu0
  %589 = vmatprep.mubr.f32.mxu0 %v270
  %590 = vmatmul.mubr.f32.gmra.mrb[0].mxu0 %v74
  %v591 = vpop.f32.mrb[0].mxu0
  %v592 = vadd.f32 %v176, %v591
  %v593 = vpop.f32.mrb[0].mxu0
  %594 = vmatprep.mubr.f32.mxu0 %v273
  %595 = vmatmul.mubr.f32.gmra.mrb[0].mxu0 %v76
  %v596 = vpop.f32.mrb[0].mxu0
  %v597 = vadd.f32 %v176, %v596
  %v598 = vpop.f32.mrb[0].mxu0
  %599 = vmatprep.mubr.f32.mxu0 %v276
  %600 = vmatmul.mubr.f32.gmra.mrb[0].mxu0 %v78
  %v601 = vpop.f32.mrb[0].mxu0
  %v602 = vadd.f32 %v176, %v601
  %v603 = vpop.f32.mrb[0].mxu0
  %604 = vmatprep.mubr.f32.mxu0 %v279
  %605 = vmatmul.mubr.f32.gmra.mrb[0].mxu0 %v80
  %v606 = vpop.f32.mrb[0].mxu0
  %v607 = vadd.f32 %v176, %v606
  %v608 = vpop.f32.mrb[0].mxu0
  %609 = vmatprep.mubr.f32.mxu0 %v282
  %610 = vmatmul.mubr.f32.gmra.mrb[0].mxu0 %v82
  %v611 = vpop.f32.mrb[0].mxu0
  %v612 = vadd.f32 %v176, %v611
  %v613 = vpop.f32.mrb[0].mxu0
  %614 = vmatprep.mubr.f32.mxu0 %v285
  %615 = vmatmul.mubr.f32.gmra.mrb[0].mxu0 %v84
  %v616 = vpop.f32.mrb[0].mxu0
  %v617 = vadd.f32 %v176, %v616
  %v618 = vpop.f32.mrb[0].mxu0
  %619 = vmatprep.mubr.f32.mxu0 %v288
  %620 = vmatmul.mubr.f32.gmra.mrb[0].mxu0 %v86
  %v621 = vpop.f32.mrb[0].mxu0
  %v622 = vadd.f32 %v176, %v621
  %v623 = vpop.f32.mrb[0].mxu0
  %624 = vmatprep.mubr.f32.mxu0 %v291
  %625 = vmatmul.mubr.f32.gmra.mrb[0].mxu0 %v88
  %v626 = vpop.f32.mrb[0].mxu0
  %v627 = vadd.f32 %v176, %v626
  %v628 = vpop.f32.mrb[0].mxu0
  %629 = vmatprep.mubr.f32.mxu0 %v294
  %630 = vmatmul.mubr.f32.gmra.mrb[0].mxu0 %v90
  %v631 = vpop.f32.mrb[0].mxu0
  %v632 = vadd.f32 %v176, %v631
  %v633 = vpop.f32.mrb[0].mxu0
  %634 = vmatprep.mubr.f32.mxu0 %v297
  %635 = vmatmul.mubr.f32.gmra.mrb[0].mxu0 %v92
  %v636 = vpop.f32.mrb[0].mxu0
  %v637 = vadd.f32 %v176, %v636
  %v638 = vpop.f32.mrb[0].mxu0
  %639 = vmatprep.mubr.f32.mxu0 %v300
  %640 = vmatmul.mubr.f32.gmra.mrb[0].mxu0 %v94
  %v641 = vpop.f32.mrb[0].mxu0
  %v642 = vadd.f32 %v176, %v641
  %v643 = vpop.f32.mrb[0].mxu0
  %644 = vmatprep.mubr.f32.mxu0 %v303
  %645 = vmatmul.mubr.f32.gmra.mrb[0].mxu0 %v96
  %v646 = vpop.f32.mrb[0].mxu0
  %v647 = vadd.f32 %v176, %v646
  %v648 = vpop.f32.mrb[0].mxu0
  %649 = vmatprep.mubr.f32.mxu0 %v306
  %650 = vmatmul.mubr.f32.gmra.mrb[0].mxu0 %v98
  %v651 = vpop.f32.mrb[0].mxu0
  %v652 = vadd.f32 %v176, %v651
  %v653 = vpop.f32.mrb[0].mxu0
  %654 = vmatprep.mubr.f32.mxu0 %v309
  %655 = vmatmul.mubr.f32.gmra.mrb[0].mxu0 %v100
  %v656 = vpop.f32.mrb[0].mxu0
  %v657 = vadd.f32 %v176, %v656
  %v658 = vpop.f32.mrb[0].mxu0
  %659 = vmatprep.mubr.f32.mxu0 %v312
  %660 = vmatmul.mubr.f32.gmra.mrb[0].mxu0 %v102
  %v661 = vpop.f32.mrb[0].mxu0
  %v662 = vadd.f32 %v176, %v661
  %v663 = vpop.f32.mrb[0].mxu0
  %664 = vmatprep.mubr.f32.mxu0 %v315
  %665 = vmatmul.mubr.f32.gmra.mrb[0].mxu0 %v104
  %v666 = vpop.f32.mrb[0].mxu0
  %v667 = vadd.f32 %v176, %v666
  %v668 = vpop.f32.mrb[0].mxu0
  %669 = vmatprep.mubr.f32.mxu0 %v318
  %670 = vmatmul.mubr.f32.gmra.mrb[0].mxu0 %v106
  %v671 = vpop.f32.mrb[0].mxu0
  %v672 = vadd.f32 %v176, %v671
  %v673 = vpop.f32.mrb[0].mxu0
  %674 = vmatprep.mubr.f32.mxu0 %v321
  %675 = vmatmul.mubr.f32.gmra.mrb[0].mxu0 %v108
  %v676 = vpop.f32.mrb[0].mxu0
  %v677 = vadd.f32 %v176, %v676
  %v678 = vpop.f32.mrb[0].mxu0
  %679 = vmatprep.mubr.f32.mxu0 %v324
  %680 = vmatmul.mubr.f32.gmra.mrb[0].mxu0 %v110
  %v681 = vpop.f32.mrb[0].mxu0
  %v682 = vadd.f32 %v176, %v681
  %v683 = vpop.f32.mrb[0].mxu0
  %684 = vmatprep.mubr.f32.mxu0 %v327
  %685 = vmatmul.mubr.f32.gmra.mrb[0].mxu0 %v112
  %v686 = vpop.f32.mrb[0].mxu0
  %v687 = vadd.f32 %v176, %v686
  %v688 = vpop.f32.mrb[0].mxu0
  %689 = vmatprep.mubr.f32.mxu0 %v330
  %690 = vmatmul.mubr.f32.gmra.mrb[0].mxu0 %v114
  %v691 = vpop.f32.mrb[0].mxu0
  %v692 = vadd.f32 %v176, %v691
  %v693 = vpop.f32.mrb[0].mxu0
  %694 = vmatprep.mubr.f32.mxu0 %v333
  %695 = vmatmul.mubr.f32.gmra.mrb[0].mxu0 %v116
  %v696 = vpop.f32.mrb[0].mxu0
  %v697 = vadd.f32 %v176, %v696
  %v698 = vpop.f32.mrb[0].mxu0
  %699 = vmatprep.mubr.f32.mxu0 %v336
  %700 = vmatmul.mubr.f32.gmra.mrb[0].mxu0 %v118
  %v701 = vpop.f32.mrb[0].mxu0
  %v702 = vadd.f32 %v176, %v701
  %v703 = vpop.f32.mrb[0].mxu0
  %704 = vmatprep.mubr.f32.mxu0 %v339
  %705 = vmatmul.mubr.f32.gmra.mrb[0].mxu0 %v120
  %v706 = vpop.f32.mrb[0].mxu0
  %v707 = vadd.f32 %v176, %v706
  %v708 = vpop.f32.mrb[0].mxu0
  %709 = vmatprep.mubr.f32.mxu0 %v342
  %710 = vmatmul.mubr.f32.gmra.mrb[0].mxu0 %v122
  %v711 = vpop.f32.mrb[0].mxu0
  %v712 = vadd.f32 %v176, %v711
  %v713 = vpop.f32.mrb[0].mxu0
  %714 = vmatprep.mubr.f32.mxu0 %v345
  %715 = vmatmul.mubr.f32.gmra.mrb[0].mxu0 %v124
  %v716 = vpop.f32.mrb[0].mxu0
  %v717 = vadd.f32 %v176, %v716
  %v718 = vpop.f32.mrb[0].mxu0
  %719 = vmatprep.mubr.f32.mxu0 %v348
  %720 = vmatmul.mubr.f32.gmra.mrb[0].mxu0 %v126
  %v721 = vpop.f32.mrb[0].mxu0
  %v722 = vadd.f32 %v176, %v721
  %v723 = vpop.f32.mrb[0].mxu0
  %724 = vmatprep.mubr.f32.mxu0 %v351
  %725 = vmatmul.mubr.f32.gmra.mrb[0].mxu0 %v128
  %v726 = vpop.f32.mrb[0].mxu0
  %v727 = vadd.f32 %v176, %v726
  %v728 = vpop.f32.mrb[0].mxu0
  %729 = vmatprep.mubr.f32.mxu0 %v354
  %730 = vmatmul.mubr.f32.gmra.mrb[0].mxu0 %v130
  %v731 = vpop.f32.mrb[0].mxu0
  %v732 = vadd.f32 %v176, %v731
  %v733 = vpop.f32.mrb[0].mxu0
  %734 = vmatprep.mubr.f32.mxu0 %v357
  %735 = vmatmul.mubr.f32.gmra.mrb[0].mxu0 %v132
  %v736 = vpop.f32.mrb[0].mxu0
  %v737 = vadd.f32 %v176, %v736
  %v738 = vpop.f32.mrb[0].mxu0
  %739 = vmatprep.mubr.f32.mxu0 %v360
  %740 = vmatmul.mubr.f32.gmra.mrb[0].mxu0 %v134
  %v741 = vpop.f32.mrb[0].mxu0
  %v742 = vadd.f32 %v176, %v741
  %v743 = vpop.f32.mrb[0].mxu0
  %744 = vmatprep.mubr.f32.mxu0 %v363
  %745 = vmatmul.mubr.f32.gmra.mrb[0].mxu0 %v136
  %v746 = vpop.f32.mrb[0].mxu0
  %v747 = vadd.f32 %v176, %v746
  %v748 = vpop.f32.mrb[0].mxu0
  %749 = vmatprep.mubr.f32.mxu0 %v366
  %750 = vmatmul.mubr.f32.gmra.mrb[0].mxu0 %v138
  %v751 = vpop.f32.mrb[0].mxu0
  %v752 = vadd.f32 %v176, %v751
  %v753 = vpop.f32.mrb[0].mxu0
  %754 = vmatprep.mubr.f32.mxu0 %v369
  %755 = vmatmul.mubr.f32.gmra.mrb[0].mxu0 %v140
  %v756 = vpop.f32.mrb[0].mxu0
  %v757 = vadd.f32 %v176, %v756
  %v758 = vpop.f32.mrb[0].mxu0
  %759 = vdwg.mxu0
  %v760 = vmax.f32 %v442, 0.0
  %v761 = vmax.f32 %v447, 0.0
  %v762 = vmax.f32 %v452, 0.0
  %v763 = vmax.f32 %v457, 0.0
  %v764 = vmax.f32 %v462, 0.0
  %v765 = vmax.f32 %v467, 0.0
  %v766 = vmax.f32 %v472, 0.0
  %v767 = vmax.f32 %v477, 0.0
  %v768 = vmax.f32 %v482, 0.0
  %v769 = vmax.f32 %v487, 0.0
  %v770 = vmax.f32 %v492, 0.0
  %v771 = vmax.f32 %v497, 0.0
  %v772 = vmax.f32 %v502, 0.0
  %v773 = vmax.f32 %v507, 0.0
  %v774 = vmax.f32 %v512, 0.0
  %v775 = vmax.f32 %v517, 0.0
  %v776 = vmax.f32 %v522, 0.0
  %v777 = vmax.f32 %v527, 0.0
  %v778 = vmax.f32 %v532, 0.0
  %v779 = vmax.f32 %v537, 0.0
  %v780 = vmax.f32 %v542, 0.0
  %v781 = vmax.f32 %v547, 0.0
  %v782 = vmax.f32 %v552, 0.0
  %v783 = vmax.f32 %v557, 0.0
  %v784 = vmax.f32 %v562, 0.0
  %v785 = vmax.f32 %v567, 0.0
  %v786 = vmax.f32 %v572, 0.0
  %v787 = vmax.f32 %v577, 0.0
  %v788 = vmax.f32 %v582, 0.0
  %v789 = vmax.f32 %v587, 0.0
  %v790 = vmax.f32 %v592, 0.0
  %v791 = vmax.f32 %v597, 0.0
  %v792 = vmax.f32 %v602, 0.0
  %v793 = vmax.f32 %v607, 0.0
  %v794 = vmax.f32 %v612, 0.0
  %v795 = vmax.f32 %v617, 0.0
  %v796 = vmax.f32 %v622, 0.0
  %v797 = vmax.f32 %v627, 0.0
  %v798 = vmax.f32 %v632, 0.0
  %v799 = vmax.f32 %v637, 0.0
  %v800 = vmax.f32 %v642, 0.0
  %v801 = vmax.f32 %v647, 0.0
  %v802 = vmax.f32 %v652, 0.0
  %v803 = vmax.f32 %v657, 0.0
  %v804 = vmax.f32 %v662, 0.0
  %v805 = vmax.f32 %v667, 0.0
  %v806 = vmax.f32 %v672, 0.0
  %v807 = vmax.f32 %v677, 0.0
  %v808 = vmax.f32 %v682, 0.0
  %v809 = vmax.f32 %v687, 0.0
  %v810 = vmax.f32 %v692, 0.0
  %v811 = vmax.f32 %v697, 0.0
  %v812 = vmax.f32 %v702, 0.0
  %v813 = vmax.f32 %v707, 0.0
  %v814 = vmax.f32 %v712, 0.0
  %v815 = vmax.f32 %v717, 0.0
  %v816 = vmax.f32 %v722, 0.0
  %v817 = vmax.f32 %v727, 0.0
  %v818 = vmax.f32 %v732, 0.0
  %v819 = vmax.f32 %v737, 0.0
  %v820 = vmax.f32 %v742, 0.0
  %v821 = vmax.f32 %v747, 0.0
  %v822 = vmax.f32 %v752, 0.0
  %v823 = vmax.f32 %v757, 0.0
  %vm824 = vcmask 261120
  %825 = vst.msk [vmem:[%s3] sm:$0xff] %vm824, %v760
  %826 = vst.msk [vmem:[%s3 + $0x8] sm:$0xff] %vm824, %v761
  %827 = vst.msk [vmem:[%s3 + $0x10] sm:$0xff] %vm824, %v762
  %828 = vst.msk [vmem:[%s3 + $0x18] sm:$0xff] %vm824, %v763
  %829 = vst.msk [vmem:[%s3 + $0x20] sm:$0xff] %vm824, %v764
  %830 = vst.msk [vmem:[%s3 + $0x28] sm:$0xff] %vm824, %v765
  %831 = vst.msk [vmem:[%s3 + $0x30] sm:$0xff] %vm824, %v766
  %832 = vst.msk [vmem:[%s3 + $0x38] sm:$0xff] %vm824, %v767
  %833 = vst.msk [vmem:[%s3 + $0x40] sm:$0xff] %vm824, %v768
  %834 = vst.msk [vmem:[%s3 + $0x48] sm:$0xff] %vm824, %v769
  %835 = vst.msk [vmem:[%s3 + $0x50] sm:$0xff] %vm824, %v770
  %836 = vst.msk [vmem:[%s3 + $0x58] sm:$0xff] %vm824, %v771
  %837 = vst.msk [vmem:[%s3 + $0x60] sm:$0xff] %vm824, %v772
  %838 = vst.msk [vmem:[%s3 + $0x68] sm:$0xff] %vm824, %v773
  %839 = vst.msk [vmem:[%s3 + $0x70] sm:$0xff] %vm824, %v774
  %840 = vst.msk [vmem:[%s3 + $0x78] sm:$0xff] %vm824, %v775
  %841 = vst.msk [vmem:[%s3 + $0x80] sm:$0xff] %vm824, %v776
  %842 = vst.msk [vmem:[%s3 + $0x88] sm:$0xff] %vm824, %v777
  %843 = vst.msk [vmem:[%s3 + $0x90] sm:$0xff] %vm824, %v778
  %844 = vst.msk [vmem:[%s3 + $0x98] sm:$0xff] %vm824, %v779
  %845 = vst.msk [vmem:[%s3 + $0xa0] sm:$0xff] %vm824, %v780
  %846 = vst.msk [vmem:[%s3 + $0xa8] sm:$0xff] %vm824, %v781
  %847 = vst.msk [vmem:[%s3 + $0xb0] sm:$0xff] %vm824, %v782
  %848 = vst.msk [vmem:[%s3 + $0xb8] sm:$0xff] %vm824, %v783
  %849 = vst.msk [vmem:[%s3 + $0xc0] sm:$0xff] %vm824, %v784
  %850 = vst.msk [vmem:[%s3 + $0xc8] sm:$0xff] %vm824, %v785
  %851 = vst.msk [vmem:[%s3 + $0xd0] sm:$0xff] %vm824, %v786
  %852 = vst.msk [vmem:[%s3 + $0xd8] sm:$0xff] %vm824, %v787
  %853 = vst.msk [vmem:[%s3 + $0xe0] sm:$0xff] %vm824, %v788
  %854 = vst.msk [vmem:[%s3 + $0xe8] sm:$0xff] %vm824, %v789
  %855 = vst.msk [vmem:[%s3 + $0xf0] sm:$0xff] %vm824, %v790
  %856 = vst.msk [vmem:[%s3 + $0xf8] sm:$0xff] %vm824, %v791
  %857 = vst.msk [vmem:[%s3 + $0x100] sm:$0xff] %vm824, %v792
  %858 = vst.msk [vmem:[%s3 + $0x108] sm:$0xff] %vm824, %v793
  %859 = vst.msk [vmem:[%s3 + $0x110] sm:$0xff] %vm824, %v794
  %860 = vst.msk [vmem:[%s3 + $0x118] sm:$0xff] %vm824, %v795
  %861 = vst.msk [vmem:[%s3 + $0x120] sm:$0xff] %vm824, %v796
  %862 = vst.msk [vmem:[%s3 + $0x128] sm:$0xff] %vm824, %v797
  %863 = vst.msk [vmem:[%s3 + $0x130] sm:$0xff] %vm824, %v798
  %864 = vst.msk [vmem:[%s3 + $0x138] sm:$0xff] %vm824, %v799
  %865 = vst.msk [vmem:[%s3 + $0x140] sm:$0xff] %vm824, %v800
  %866 = vst.msk [vmem:[%s3 + $0x148] sm:$0xff] %vm824, %v801
  %867 = vst.msk [vmem:[%s3 + $0x150] sm:$0xff] %vm824, %v802
  %868 = vst.msk [vmem:[%s3 + $0x158] sm:$0xff] %vm824, %v803
  %869 = vst.msk [vmem:[%s3 + $0x160] sm:$0xff] %vm824, %v804
  %870 = vst.msk [vmem:[%s3 + $0x168] sm:$0xff] %vm824, %v805
  %871 = vst.msk [vmem:[%s3 + $0x170] sm:$0xff] %vm824, %v806
  %872 = vst.msk [vmem:[%s3 + $0x178] sm:$0xff] %vm824, %v807
  %873 = vst.msk [vmem:[%s3 + $0x180] sm:$0xff] %vm824, %v808
  %874 = vst.msk [vmem:[%s3 + $0x188] sm:$0xff] %vm824, %v809
  %875 = vst.msk [vmem:[%s3 + $0x190] sm:$0xff] %vm824, %v810
  %876 = vst.msk [vmem:[%s3 + $0x198] sm:$0xff] %vm824, %v811
  %877 = vst.msk [vmem:[%s3 + $0x1a0] sm:$0xff] %vm824, %v812
  %878 = vst.msk [vmem:[%s3 + $0x1a8] sm:$0xff] %vm824, %v813
  %879 = vst.msk [vmem:[%s3 + $0x1b0] sm:$0xff] %vm824, %v814
  %880 = vst.msk [vmem:[%s3 + $0x1b8] sm:$0xff] %vm824, %v815
  %881 = vst.msk [vmem:[%s3 + $0x1c0] sm:$0xff] %vm824, %v816
  %882 = vst.msk [vmem:[%s3 + $0x1c8] sm:$0xff] %vm824, %v817
  %883 = vst.msk [vmem:[%s3 + $0x1d0] sm:$0xff] %vm824, %v818
  %884 = vst.msk [vmem:[%s3 + $0x1d8] sm:$0xff] %vm824, %v819
  %885 = vst.msk [vmem:[%s3 + $0x1e0] sm:$0xff] %vm824, %v820
  %886 = vst.msk [vmem:[%s3 + $0x1e8] sm:$0xff] %vm824, %v821
  %887 = vst.msk [vmem:[%s3 + $0x1f0] sm:$0xff] %vm824, %v822
  %888 = vst.msk [vmem:[%s3 + $0x1f8] sm:$0xff] %vm824, %v823
  // Predicated region
  $region14: #{easy_upsample_pallas.6} parent=0 // pred_check
    _
  $region15: #{easy_upsample_pallas.6} parent=0 // pred_check_branch
    %890 = sbr.rel (0) target = $region17
  $region16: #{easy_upsample_pallas.6} parent=0 // pred_region
    _
  $region17: #{easy_upsample_pallas.6} parent=0 // pred_fallthru
    _
  // Predicated region
  $region18: #{easy_upsample_pallas.6} parent=0 // pred_check
    _
  $region19: #{easy_upsample_pallas.6} parent=0 // pred_check_branch
    %892 = sbr.rel (0) target = $region21
  $region20: #{easy_upsample_pallas.6} parent=0 // pred_region
    _
  $region21: #{easy_upsample_pallas.6} parent=0 // pred_fallthru
    _

// kernel: easy_upsample_pallas.7
$region0: #{easy_upsample_pallas.7}
  #allocation0 [shape = 'u32[]', space=smem, size = 0x4, offset = 0x4, fixed_abs, tag = 'smem constant byte address 0x4 - core index']
  #allocation1 [shape = 'u32[144,128]{1,0:T(1,128)}', space=vmem, size = 0x12000, scoped, tag = 'internal scratch']
  %s0 = inlined_call_operand.vmem [shape: f32[2048,135], index: 0, kind: input, shape index: {}]
  %s1 = inlined_call_operand.vmem [shape: f32[135,16], index: 1, kind: input, shape index: {}]
  %s2 = inlined_call_operand.vmem [shape: f32[1,16], index: 2, kind: input, shape index: {}]
  %s3 = inlined_call_operand.vmem [shape: f32[16,4], index: 3, kind: input, shape index: {}]
  %s4 = inlined_call_operand.vmem [shape: f32[1,4], index: 4, kind: input, shape index: {}]
  %s5 = inlined_call_operand.vmem [shape: f32[2048,4], index: 5, kind: output, shape index: {}]
  %s6 = sld [smem:[#allocation0]]
  $region53: #{easy_upsample_pallas.7} parent=0
    _
  %s8 = ssub.s32 1, %s6
  %s9 = scalar_select 0, %s8, %s6
  loop: start=0, step=1, limit=4
  $region2: #{easy_upsample_pallas.7} parent=0 // loop_pre_header
    _
  $region3: #{easy_upsample_pallas.7} parent=0 // loop_header
    %s11 = sphi 0, %s15
    %p12 = scmp.ge.s32.totalorder %s11, 4
    %s21 = sphi 0, %s23
    %s24 = sphi 0, %s21
    %s25 = sphi 0, %s24
    %s41 = sphi 0, %s25
    %s45 = sphi 0, %s45
    %s47 = sphi 0, %s45
    %s48 = sphi 0, %s47
    %s62 = sphi 0, %s48
    %s66 = sphi 0, %s66
    %s68 = sphi 0, %s66
    %s69 = sphi 0, %s68
    %s83 = sphi 0, %s69
    %s87 = sphi 0, %s87
    %s89 = sphi 0, %s87
    %s90 = sphi 0, %s89
    %s104 = sphi 0, %s90
    %s108 = sphi 0, %s108
    %s110 = sphi 0, %s108
    %s111 = sphi 0, %s110
    %s125 = sphi 0, %s111
    %s131 = sphi 0, %s133
    %s134 = sphi 0, %s131
    %s135 = sphi 0, %s134
    %s151 = sphi 0, %s135
  $region4: #{easy_upsample_pallas.7} parent=0 // loop_header_branch
    %14 = sbr.rel (%p12) target = $region8
  $region5: #{easy_upsample_pallas.7} parent=0 // loop_body
    %s16 = ssub.s32 %s11, 1
    %s17 = ssub.s32 %s11, 2
    %s18 = sadd.s32 %s11, 1
    %s19 = ssub.s32 %s11, %s18
    %p20 = scmp.eq.s32.totalorder %s19, 0
    %s22 = sadd.s32 %s21, 1
    %s23 = scalar_select %p20, %s21, %s22
    %p26 = pneg %p20
    %p27 = scmp.eq.s32.totalorder %s11, 1
    %p28 = por %p26, %p27
    %p29 = scmp.ne.s32.totalorder %s21, %s24
    %p30 = scmp.eq.s32.totalorder %s11, 0
    %p31 = por %p29, %p30
    %p32 = scmp.ne.s32.totalorder %s21, %s24
    %p33 = scmp.eq.s32.totalorder %s16, 1
    %p34 = por %p32, %p33
    %p35 = scmp.ne.s32.totalorder %s24, %s25
    %p36 = scmp.eq.s32.totalorder %s16, 0
    %p37 = por %p35, %p36
    %p38 = scmp.ne.s32.totalorder %s24, %s25
    %p39 = scmp.eq.s32.totalorder %s17, 1
    %p40 = por %p38, %p39
    %p42 = scmp.ne.s32.totalorder %s25, %s41
    %p43 = scmp.eq.s32.totalorder %s17, 0
    %p44 = por %p42, %p43
    %s46 = sadd.s32 %s45, 1
    %p49 = scmp.eq.s32.totalorder %s11, 1
    %p50 = scmp.ne.s32.totalorder %s45, %s47
    %p51 = scmp.eq.s32.totalorder %s11, 0
    %p52 = por %p50, %p51
    %p53 = scmp.ne.s32.totalorder %s45, %s47
    %p54 = scmp.eq.s32.totalorder %s16, 1
    %p55 = por %p53, %p54
    %p56 = scmp.ne.s32.totalorder %s47, %s48
    %p57 = scmp.eq.s32.totalorder %s16, 0
    %p58 = por %p56, %p57
    %p59 = scmp.ne.s32.totalorder %s47, %s48
    %p60 = scmp.eq.s32.totalorder %s17, 1
    %p61 = por %p59, %p60
    %p63 = scmp.ne.s32.totalorder %s48, %s62
    %p64 = scmp.eq.s32.totalorder %s17, 0
    %p65 = por %p63, %p64
    %s67 = sadd.s32 %s66, 1
    %p70 = scmp.eq.s32.totalorder %s11, 1
    %p71 = scmp.ne.s32.totalorder %s66, %s68
    %p72 = scmp.eq.s32.totalorder %s11, 0
    %p73 = por %p71, %p72
    %p74 = scmp.ne.s32.totalorder %s66, %s68
    %p75 = scmp.eq.s32.totalorder %s16, 1
    %p76 = por %p74, %p75
    %p77 = scmp.ne.s32.totalorder %s68, %s69
    %p78 = scmp.eq.s32.totalorder %s16, 0
    %p79 = por %p77, %p78
    %p80 = scmp.ne.s32.totalorder %s68, %s69
    %p81 = scmp.eq.s32.totalorder %s17, 1
    %p82 = por %p80, %p81
    %p84 = scmp.ne.s32.totalorder %s69, %s83
    %p85 = scmp.eq.s32.totalorder %s17, 0
    %p86 = por %p84, %p85
    %s88 = sadd.s32 %s87, 1
    %p91 = scmp.eq.s32.totalorder %s11, 1
    %p92 = scmp.ne.s32.totalorder %s87, %s89
    %p93 = scmp.eq.s32.totalorder %s11, 0
    %p94 = por %p92, %p93
    %p95 = scmp.ne.s32.totalorder %s87, %s89
    %p96 = scmp.eq.s32.totalorder %s16, 1
    %p97 = por %p95, %p96
    %p98 = scmp.ne.s32.totalorder %s89, %s90
    %p99 = scmp.eq.s32.totalorder %s16, 0
    %p100 = por %p98, %p99
    %p101 = scmp.ne.s32.totalorder %s89, %s90
    %p102 = scmp.eq.s32.totalorder %s17, 1
    %p103 = por %p101, %p102
    %p105 = scmp.ne.s32.totalorder %s90, %s104
    %p106 = scmp.eq.s32.totalorder %s17, 0
    %p107 = por %p105, %p106
    %s109 = sadd.s32 %s108, 1
    %p112 = scmp.eq.s32.totalorder %s11, 1
    %p113 = scmp.ne.s32.totalorder %s108, %s110
    %p114 = scmp.eq.s32.totalorder %s11, 0
    %p115 = por %p113, %p114
    %p116 = scmp.ne.s32.totalorder %s108, %s110
    %p117 = scmp.eq.s32.totalorder %s16, 1
    %p118 = por %p116, %p117
    %p119 = scmp.ne.s32.totalorder %s110, %s111
    %p120 = scmp.eq.s32.totalorder %s16, 0
    %p121 = por %p119, %p120
    %p122 = scmp.ne.s32.totalorder %s110, %s111
    %p123 = scmp.eq.s32.totalorder %s17, 1
    %p124 = por %p122, %p123
    %p126 = scmp.ne.s32.totalorder %s111, %s125
    %p127 = scmp.eq.s32.totalorder %s17, 0
    %p128 = por %p126, %p127
    %s129 = ssub.s32 %s11, %s18
    %p130 = scmp.eq.s32.totalorder %s129, 0
    %s132 = sadd.s32 %s131, 1
    %s133 = scalar_select %p130, %s131, %s132
    %p136 = pneg %p130
    %p137 = scmp.eq.s32.totalorder %s11, 1
    %p138 = por %p136, %p137
    %p139 = scmp.ne.s32.totalorder %s131, %s134
    %p140 = scmp.eq.s32.totalorder %s11, 0
    %p141 = por %p139, %p140
    %p142 = scmp.ne.s32.totalorder %s131, %s134
    %p143 = scmp.eq.s32.totalorder %s16, 1
    %p144 = por %p142, %p143
    %p145 = scmp.ne.s32.totalorder %s134, %s135
    %p146 = scmp.eq.s32.totalorder %s16, 0
    %p147 = por %p145, %p146
    %p148 = scmp.ne.s32.totalorder %s134, %s135
    %p149 = scmp.eq.s32.totalorder %s17, 1
    %p150 = por %p148, %p149
    %p152 = scmp.ne.s32.totalorder %s135, %s151
    %p153 = scmp.eq.s32.totalorder %s17, 0
    %p154 = por %p152, %p153
    %p155 = scmp.le.s32.totalorder 1, %s11
    %p156 = scmp.lt.s32.totalorder %s11, 3
    %p157 = pnand %p155, %p156
    %p158 = pneg %p157
    // Predicated region
    $region9: #{easy_upsample_pallas.7} parent=5 // pred_check
      _
    $region10: #{easy_upsample_pallas.7} parent=5 // pred_check_branch
      %160 = sbr.rel (%p157) target = $region12
    $region11: #{easy_upsample_pallas.7} parent=5 // pred_region
      %s161 = ssub.s32 %s11, 1
      // Predicated region
      $region13: #{easy_upsample_pallas.7} parent=11 // pred_check
        %p162 = pneg %p58
      $region14: #{easy_upsample_pallas.7} parent=11 // pred_check_branch
        %164 = sbr.rel (%p162) target = $region16
      $region15: #{easy_upsample_pallas.7} parent=11 // pred_region
        _
      $region16: #{easy_upsample_pallas.7} parent=11 // pred_fallthru
        _
      // Predicated region
      $region17: #{easy_upsample_pallas.7} parent=11 // pred_check
        %p165 = pneg %p79
      $region18: #{easy_upsample_pallas.7} parent=11 // pred_check_branch
        %167 = sbr.rel (%p165) target = $region20
      $region19: #{easy_upsample_pallas.7} parent=11 // pred_region
        _
      $region20: #{easy_upsample_pallas.7} parent=11 // pred_fallthru
        _
      // Predicated region
      $region21: #{easy_upsample_pallas.7} parent=11 // pred_check
        %p168 = pneg %p100
      $region22: #{easy_upsample_pallas.7} parent=11 // pred_check_branch
        %170 = sbr.rel (%p168) target = $region24
      $region23: #{easy_upsample_pallas.7} parent=11 // pred_region
        _
      $region24: #{easy_upsample_pallas.7} parent=11 // pred_fallthru
        _
      // Predicated region
      $region25: #{easy_upsample_pallas.7} parent=11 // pred_check
        %p171 = pneg %p121
      $region26: #{easy_upsample_pallas.7} parent=11 // pred_check_branch
        %173 = sbr.rel (%p171) target = $region28
      $region27: #{easy_upsample_pallas.7} parent=11 // pred_region
        _
      $region28: #{easy_upsample_pallas.7} parent=11 // pred_fallthru
        _
    $region12: #{easy_upsample_pallas.7} parent=5 // pred_fallthru
      _
    %p174 = scmp.lt.s32.totalorder %s11, 2
    // Predicated region
    $region29: #{easy_upsample_pallas.7} parent=5 // pred_check
      %p175 = pneg %p174
    $region30: #{easy_upsample_pallas.7} parent=5 // pred_check_branch
      %177 = sbr.rel (%p175) target = $region32
    $region31: #{easy_upsample_pallas.7} parent=5 // pred_region
      // Predicated region
      $region33: #{easy_upsample_pallas.7} parent=31 // pred_check
        %p178 = pneg %p31
      $region34: #{easy_upsample_pallas.7} parent=31 // pred_check_branch
        %180 = sbr.rel (%p178) target = $region36
      $region35: #{easy_upsample_pallas.7} parent=31 // pred_region
        %s181 = smul.u32 128, %s11
        %p182 = scmp.lt.s32.totalorder %s181, 255
        %s183 = scalar_select %p182, %s181, 255
        %s184 = smul.addr %s183, 2
        %s185 = smul.addr %s184, 8
        %s186 = scalar_lea.vmem %s0, %s185
        %s187 = smul.u32 128, %s11
      $region36: #{easy_upsample_pallas.7} parent=31 // pred_fallthru
        _
    $region32: #{easy_upsample_pallas.7} parent=5 // pred_fallthru
      _
    %p188 = scmp.le.s32.totalorder 1, %s11
    %p189 = scmp.lt.s32.totalorder %s11, 3
    %p190 = pnand %p188, %p189
    %p191 = pneg %p190
    // Predicated region
    $region37: #{easy_upsample_pallas.7} parent=5 // pred_check
      _
    $region38: #{easy_upsample_pallas.7} parent=5 // pred_check_branch
      %193 = sbr.rel (%p190) target = $region40
    $region39: #{easy_upsample_pallas.7} parent=5 // pred_region
      %s194 = ssub.s32 %s11, 1
      %s195 = smul.u32 128, %s16
      %p196 = scmp.lt.s32.totalorder %s195, 255
      %s197 = scalar_select %p196, %s195, 255
      %s198 = smul.addr %s197, 2
      %s199 = smul.addr %s198, 8
      %s200 = scalar_lea.vmem %s0, %s199
      %p201 = pneg %p37
      %p202 = pneg %p34
      %p203 = pneg %p58
      %p204 = pneg %p55
      %p205 = pneg %p79
      %p206 = pneg %p76
      %p207 = pneg %p100
      %p208 = pneg %p97
      %p209 = pneg %p121
      %p210 = pneg %p118
      %p211 = pneg %p147
      %p212 = pneg %p144
      %s213 = smul.u32 128, %s16
      %p214 = scmp.lt.s32.totalorder %s213, 255
      %s215 = scalar_select %p214, %s213, 255
      %s216 = smul.addr %s215, 8
      %s217 = scalar_lea.vmem %s5, %s216
      %s218 = smul.u32 128, %s16
      %p219 = scmp.lt.s32.totalorder %s218, 255
      %s220 = scalar_select %p219, %s218, 255
      %s221 = smul.addr %s220, 2
      %s222 = smul.addr %s221, 8
      %s223 = scalar_lea.vmem %s0, %s222
      %s224 = smul.u32 128, %s16
      %s225 = smul.u32 128, %s16
      %p226 = scmp.lt.s32.totalorder %s225, 255
      %s227 = scalar_select %p226, %s225, 255
      %s228 = smul.addr %s227, 8
      %s229 = scalar_lea.vmem %s5, %s228
      %s230 = smul.u32 128, %s16
      %v231 = vld [vmem:[%s223] sm:$0xff]
      %v232 = vld [vmem:[%s223 + $0x8] sm:$0xff]
      %v233 = vld [vmem:[%s223 + $0x10] sm:$0xff]
      %v234 = vld [vmem:[%s223 + $0x18] sm:$0xff]
      %v235 = vld [vmem:[%s223 + $0x20] sm:$0xff]
      %v236 = vld [vmem:[%s223 + $0x28] sm:$0xff]
      %v237 = vld [vmem:[%s223 + $0x30] sm:$0xff]
      %v238 = vld [vmem:[%s223 + $0x38] sm:$0xff]
      %v239 = vld [vmem:[%s223 + $0x40] sm:$0xff]
      %v240 = vld [vmem:[%s223 + $0x48] sm:$0xff]
      %v241 = vld [vmem:[%s223 + $0x50] sm:$0xff]
      %v242 = vld [vmem:[%s223 + $0x58] sm:$0xff]
      %v243 = vld [vmem:[%s223 + $0x60] sm:$0xff]
      %v244 = vld [vmem:[%s223 + $0x68] sm:$0xff]
      %v245 = vld [vmem:[%s223 + $0x70] sm:$0xff]
      %v246 = vld [vmem:[%s223 + $0x78] sm:$0xff]
      %v247 = vld [vmem:[%s223 + $0x80] sm:$0xff]
      %v248 = vld [vmem:[%s223 + $0x88] sm:$0xff]
      %v249 = vld [vmem:[%s223 + $0x90] sm:$0xff]
      %v250 = vld [vmem:[%s223 + $0x98] sm:$0xff]
      %v251 = vld [vmem:[%s223 + $0xa0] sm:$0xff]
      %v252 = vld [vmem:[%s223 + $0xa8] sm:$0xff]
      %v253 = vld [vmem:[%s223 + $0xb0] sm:$0xff]
      %v254 = vld [vmem:[%s223 + $0xb8] sm:$0xff]
      %v255 = vld [vmem:[%s223 + $0xc0] sm:$0xff]
      %v256 = vld [vmem:[%s223 + $0xc8] sm:$0xff]
      %v257 = vld [vmem:[%s223 + $0xd0] sm:$0xff]
      %v258 = vld [vmem:[%s223 + $0xd8] sm:$0xff]
      %v259 = vld [vmem:[%s223 + $0xe0] sm:$0xff]
      %v260 = vld [vmem:[%s223 + $0xe8] sm:$0xff]
      %v261 = vld [vmem:[%s223 + $0xf0] sm:$0xff]
      %v262 = vld [vmem:[%s223 + $0xf8] sm:$0xff]
      %v263 = vld [vmem:[%s223 + $0x100] sm:$0xff]
      %v264 = vld [vmem:[%s223 + $0x108] sm:$0xff]
      %v265 = vld [vmem:[%s223 + $0x110] sm:$0xff]
      %v266 = vld [vmem:[%s223 + $0x118] sm:$0xff]
      %v267 = vld [vmem:[%s223 + $0x120] sm:$0xff]
      %v268 = vld [vmem:[%s223 + $0x128] sm:$0xff]
      %v269 = vld [vmem:[%s223 + $0x130] sm:$0xff]
      %v270 = vld [vmem:[%s223 + $0x138] sm:$0xff]
      %v271 = vld [vmem:[%s223 + $0x140] sm:$0xff]
      %v272 = vld [vmem:[%s223 + $0x148] sm:$0xff]
      %v273 = vld [vmem:[%s223 + $0x150] sm:$0xff]
      %v274 = vld [vmem:[%s223 + $0x158] sm:$0xff]
      %v275 = vld [vmem:[%s223 + $0x160] sm:$0xff]
      %v276 = vld [vmem:[%s223 + $0x168] sm:$0xff]
      %v277 = vld [vmem:[%s223 + $0x170] sm:$0xff]
      %v278 = vld [vmem:[%s223 + $0x178] sm:$0xff]
      %v279 = vld [vmem:[%s223 + $0x180] sm:$0xff]
      %v280 = vld [vmem:[%s223 + $0x188] sm:$0xff]
      %v281 = vld [vmem:[%s223 + $0x190] sm:$0xff]
      %v282 = vld [vmem:[%s223 + $0x198] sm:$0xff]
      %v283 = vld [vmem:[%s223 + $0x1a0] sm:$0xff]
      %v284 = vld [vmem:[%s223 + $0x1a8] sm:$0xff]
      %v285 = vld [vmem:[%s223 + $0x1b0] sm:$0xff]
      %v286 = vld [vmem:[%s223 + $0x1b8] sm:$0xff]
      %v287 = vld [vmem:[%s223 + $0x1c0] sm:$0xff]
      %v288 = vld [vmem:[%s223 + $0x1c8] sm:$0xff]
      %v289 = vld [vmem:[%s223 + $0x1d0] sm:$0xff]
      %v290 = vld [vmem:[%s223 + $0x1d8] sm:$0xff]
      %v291 = vld [vmem:[%s223 + $0x1e0] sm:$0xff]
      %v292 = vld [vmem:[%s223 + $0x1e8] sm:$0xff]
      %v293 = vld [vmem:[%s223 + $0x1f0] sm:$0xff]
      %v294 = vld [vmem:[%s223 + $0x1f8] sm:$0xff]
      %v295 = vld [vmem:[%s223 + $0x200] sm:$0xff]
      %v296 = vld [vmem:[%s223 + $0x208] sm:$0xff]
      %v297 = vld [vmem:[%s223 + $0x210] sm:$0xff]
      %v298 = vld [vmem:[%s223 + $0x218] sm:$0xff]
      %v299 = vld [vmem:[%s223 + $0x220] sm:$0xff]
      %v300 = vld [vmem:[%s223 + $0x228] sm:$0xff]
      %v301 = vld [vmem:[%s223 + $0x230] sm:$0xff]
      %v302 = vld [vmem:[%s223 + $0x238] sm:$0xff]
      %v303 = vld [vmem:[%s223 + $0x240] sm:$0xff]
      %v304 = vld [vmem:[%s223 + $0x248] sm:$0xff]
      %v305 = vld [vmem:[%s223 + $0x250] sm:$0xff]
      %v306 = vld [vmem:[%s223 + $0x258] sm:$0xff]
      %v307 = vld [vmem:[%s223 + $0x260] sm:$0xff]
      %v308 = vld [vmem:[%s223 + $0x268] sm:$0xff]
      %v309 = vld [vmem:[%s223 + $0x270] sm:$0xff]
      %v310 = vld [vmem:[%s223 + $0x278] sm:$0xff]
      %v311 = vld [vmem:[%s223 + $0x280] sm:$0xff]
      %v312 = vld [vmem:[%s223 + $0x288] sm:$0xff]
      %v313 = vld [vmem:[%s223 + $0x290] sm:$0xff]
      %v314 = vld [vmem:[%s223 + $0x298] sm:$0xff]
      %v315 = vld [vmem:[%s223 + $0x2a0] sm:$0xff]
      %v316 = vld [vmem:[%s223 + $0x2a8] sm:$0xff]
      %v317 = vld [vmem:[%s223 + $0x2b0] sm:$0xff]
      %v318 = vld [vmem:[%s223 + $0x2b8] sm:$0xff]
      %v319 = vld [vmem:[%s223 + $0x2c0] sm:$0xff]
      %v320 = vld [vmem:[%s223 + $0x2c8] sm:$0xff]
      %v321 = vld [vmem:[%s223 + $0x2d0] sm:$0xff]
      %v322 = vld [vmem:[%s223 + $0x2d8] sm:$0xff]
      %v323 = vld [vmem:[%s223 + $0x2e0] sm:$0xff]
      %v324 = vld [vmem:[%s223 + $0x2e8] sm:$0xff]
      %v325 = vld [vmem:[%s223 + $0x2f0] sm:$0xff]
      %v326 = vld [vmem:[%s223 + $0x2f8] sm:$0xff]
      %v327 = vld [vmem:[%s223 + $0x300] sm:$0xff]
      %v328 = vld [vmem:[%s223 + $0x308] sm:$0xff]
      %v329 = vld [vmem:[%s223 + $0x310] sm:$0xff]
      %v330 = vld [vmem:[%s223 + $0x318] sm:$0xff]
      %v331 = vld [vmem:[%s223 + $0x320] sm:$0xff]
      %v332 = vld [vmem:[%s223 + $0x328] sm:$0xff]
      %v333 = vld [vmem:[%s223 + $0x330] sm:$0xff]
      %v334 = vld [vmem:[%s223 + $0x338] sm:$0xff]
      %v335 = vld [vmem:[%s223 + $0x340] sm:$0xff]
      %v336 = vld [vmem:[%s223 + $0x348] sm:$0xff]
      %v337 = vld [vmem:[%s223 + $0x350] sm:$0xff]
      %v338 = vld [vmem:[%s223 + $0x358] sm:$0xff]
      %v339 = vld [vmem:[%s223 + $0x360] sm:$0xff]
      %v340 = vld [vmem:[%s223 + $0x368] sm:$0xff]
      %v341 = vld [vmem:[%s223 + $0x370] sm:$0xff]
      %v342 = vld [vmem:[%s223 + $0x378] sm:$0xff]
      %v343 = vld [vmem:[%s223 + $0x380] sm:$0xff]
      %v344 = vld [vmem:[%s223 + $0x388] sm:$0xff]
      %v345 = vld [vmem:[%s223 + $0x390] sm:$0xff]
      %v346 = vld [vmem:[%s223 + $0x398] sm:$0xff]
      %v347 = vld [vmem:[%s223 + $0x3a0] sm:$0xff]
      %v348 = vld [vmem:[%s223 + $0x3a8] sm:$0xff]
      %v349 = vld [vmem:[%s223 + $0x3b0] sm:$0xff]
      %v350 = vld [vmem:[%s223 + $0x3b8] sm:$0xff]
      %v351 = vld [vmem:[%s223 + $0x3c0] sm:$0xff]
      %v352 = vld [vmem:[%s223 + $0x3c8] sm:$0xff]
      %v353 = vld [vmem:[%s223 + $0x3d0] sm:$0xff]
      %v354 = vld [vmem:[%s223 + $0x3d8] sm:$0xff]
      %v355 = vld [vmem:[%s223 + $0x3e0] sm:$0xff]
      %v356 = vld [vmem:[%s223 + $0x3e8] sm:$0xff]
      %v357 = vld [vmem:[%s223 + $0x3f0] sm:$0xff]
      %v358 = vld [vmem:[%s223 + $0x3f8] sm:$0xff]
      %v359 = vld [vmem:[%s223 + $0x400] sm:$0xff]
      %v360 = vld [vmem:[%s223 + $0x408] sm:$0xff]
      %v361 = vld [vmem:[%s223 + $0x410] sm:$0xff]
      %v362 = vld [vmem:[%s223 + $0x418] sm:$0xff]
      %v363 = vld [vmem:[%s223 + $0x420] sm:$0xff]
      %v364 = vld [vmem:[%s223 + $0x428] sm:$0xff]
      %v365 = vld [vmem:[%s223 + $0x430] sm:$0xff]
      %v366 = vld [vmem:[%s223 + $0x438] sm:$0xff]
      %v367 = vld [vmem:[%s223 + $0x440] sm:$0xff]
      %v368 = vld [vmem:[%s223 + $0x448] sm:$0xff]
      %v369 = vld [vmem:[%s223 + $0x450] sm:$0xff]
      %v370 = vld [vmem:[%s223 + $0x458] sm:$0xff]
      %v371 = vld [vmem:[%s223 + $0x460] sm:$0xff]
      %v372 = vld [vmem:[%s223 + $0x468] sm:$0xff]
      %v373 = vld [vmem:[%s223 + $0x470] sm:$0xff]
      %v374 = vld [vmem:[%s223 + $0x478] sm:$0xff]
      %v375 = vld [vmem:[%s223 + $0x480] sm:$0xff]
      %v376 = vld [vmem:[%s223 + $0x488] sm:$0xff]
      %v377 = vld [vmem:[%s223 + $0x490] sm:$0xff]
      %v378 = vld [vmem:[%s223 + $0x498] sm:$0xff]
      %v379 = vld [vmem:[%s223 + $0x4a0] sm:$0xff]
      %v380 = vld [vmem:[%s223 + $0x4a8] sm:$0xff]
      %v381 = vld [vmem:[%s223 + $0x4b0] sm:$0xff]
      %v382 = vld [vmem:[%s223 + $0x4b8] sm:$0xff]
      %v383 = vld [vmem:[%s223 + $0x4c0] sm:$0xff]
      %v384 = vld [vmem:[%s223 + $0x4c8] sm:$0xff]
      %v385 = vld [vmem:[%s223 + $0x4d0] sm:$0xff]
      %v386 = vld [vmem:[%s223 + $0x4d8] sm:$0xff]
      %v387 = vld [vmem:[%s223 + $0x4e0] sm:$0xff]
      %v388 = vld [vmem:[%s223 + $0x4e8] sm:$0xff]
      %v389 = vld [vmem:[%s223 + $0x4f0] sm:$0xff]
      %v390 = vld [vmem:[%s223 + $0x4f8] sm:$0xff]
      %v391 = vld [vmem:[%s223 + $0x500] sm:$0xff]
      %v392 = vld [vmem:[%s223 + $0x508] sm:$0xff]
      %v393 = vld [vmem:[%s223 + $0x510] sm:$0xff]
      %v394 = vld [vmem:[%s223 + $0x518] sm:$0xff]
      %v395 = vld [vmem:[%s223 + $0x520] sm:$0xff]
      %v396 = vld [vmem:[%s223 + $0x528] sm:$0xff]
      %v397 = vld [vmem:[%s223 + $0x530] sm:$0xff]
      %v398 = vld [vmem:[%s223 + $0x538] sm:$0xff]
      %v399 = vld [vmem:[%s223 + $0x540] sm:$0xff]
      %v400 = vld [vmem:[%s223 + $0x548] sm:$0xff]
      %v401 = vld [vmem:[%s223 + $0x550] sm:$0xff]
      %v402 = vld [vmem:[%s223 + $0x558] sm:$0xff]
      %v403 = vld [vmem:[%s223 + $0x560] sm:$0xff]
      %v404 = vld [vmem:[%s223 + $0x568] sm:$0xff]
      %v405 = vld [vmem:[%s223 + $0x570] sm:$0xff]
      %v406 = vld [vmem:[%s223 + $0x578] sm:$0xff]
      %v407 = vld [vmem:[%s223 + $0x580] sm:$0xff]
      %v408 = vld [vmem:[%s223 + $0x588] sm:$0xff]
      %v409 = vld [vmem:[%s223 + $0x590] sm:$0xff]
      %v410 = vld [vmem:[%s223 + $0x598] sm:$0xff]
      %v411 = vld [vmem:[%s223 + $0x5a0] sm:$0xff]
      %v412 = vld [vmem:[%s223 + $0x5a8] sm:$0xff]
      %v413 = vld [vmem:[%s223 + $0x5b0] sm:$0xff]
      %v414 = vld [vmem:[%s223 + $0x5b8] sm:$0xff]
      %v415 = vld [vmem:[%s223 + $0x5c0] sm:$0xff]
      %v416 = vld [vmem:[%s223 + $0x5c8] sm:$0xff]
      %v417 = vld [vmem:[%s223 + $0x5d0] sm:$0xff]
      %v418 = vld [vmem:[%s223 + $0x5d8] sm:$0xff]
      %v419 = vld [vmem:[%s223 + $0x5e0] sm:$0xff]
      %v420 = vld [vmem:[%s223 + $0x5e8] sm:$0xff]
      %v421 = vld [vmem:[%s223 + $0x5f0] sm:$0xff]
      %v422 = vld [vmem:[%s223 + $0x5f8] sm:$0xff]
      %v423 = vld [vmem:[%s223 + $0x600] sm:$0xff]
      %v424 = vld [vmem:[%s223 + $0x608] sm:$0xff]
      %v425 = vld [vmem:[%s223 + $0x610] sm:$0xff]
      %v426 = vld [vmem:[%s223 + $0x618] sm:$0xff]
      %v427 = vld [vmem:[%s223 + $0x620] sm:$0xff]
      %v428 = vld [vmem:[%s223 + $0x628] sm:$0xff]
      %v429 = vld [vmem:[%s223 + $0x630] sm:$0xff]
      %v430 = vld [vmem:[%s223 + $0x638] sm:$0xff]
      %v431 = vld [vmem:[%s223 + $0x640] sm:$0xff]
      %v432 = vld [vmem:[%s223 + $0x648] sm:$0xff]
      %v433 = vld [vmem:[%s223 + $0x650] sm:$0xff]
      %v434 = vld [vmem:[%s223 + $0x658] sm:$0xff]
      %v435 = vld [vmem:[%s223 + $0x660] sm:$0xff]
      %v436 = vld [vmem:[%s223 + $0x668] sm:$0xff]
      %v437 = vld [vmem:[%s223 + $0x670] sm:$0xff]
      %v438 = vld [vmem:[%s223 + $0x678] sm:$0xff]
      %v439 = vld [vmem:[%s223 + $0x680] sm:$0xff]
      %v440 = vld [vmem:[%s223 + $0x688] sm:$0xff]
      %v441 = vld [vmem:[%s223 + $0x690] sm:$0xff]
      %v442 = vld [vmem:[%s223 + $0x698] sm:$0xff]
      %v443 = vld [vmem:[%s223 + $0x6a0] sm:$0xff]
      %v444 = vld [vmem:[%s223 + $0x6a8] sm:$0xff]
      %v445 = vld [vmem:[%s223 + $0x6b0] sm:$0xff]
      %v446 = vld [vmem:[%s223 + $0x6b8] sm:$0xff]
      %v447 = vld [vmem:[%s223 + $0x6c0] sm:$0xff]
      %v448 = vld [vmem:[%s223 + $0x6c8] sm:$0xff]
      %v449 = vld [vmem:[%s223 + $0x6d0] sm:$0xff]
      %v450 = vld [vmem:[%s223 + $0x6d8] sm:$0xff]
      %v451 = vld [vmem:[%s223 + $0x6e0] sm:$0xff]
      %v452 = vld [vmem:[%s223 + $0x6e8] sm:$0xff]
      %v453 = vld [vmem:[%s223 + $0x6f0] sm:$0xff]
      %v454 = vld [vmem:[%s223 + $0x6f8] sm:$0xff]
      %v455 = vld [vmem:[%s223 + $0x700] sm:$0xff]
      %v456 = vld [vmem:[%s223 + $0x708] sm:$0xff]
      %v457 = vld [vmem:[%s223 + $0x710] sm:$0xff]
      %v458 = vld [vmem:[%s223 + $0x718] sm:$0xff]
      %v459 = vld [vmem:[%s223 + $0x720] sm:$0xff]
      %v460 = vld [vmem:[%s223 + $0x728] sm:$0xff]
      %v461 = vld [vmem:[%s223 + $0x730] sm:$0xff]
      %v462 = vld [vmem:[%s223 + $0x738] sm:$0xff]
      %v463 = vld [vmem:[%s223 + $0x740] sm:$0xff]
      %v464 = vld [vmem:[%s223 + $0x748] sm:$0xff]
      %v465 = vld [vmem:[%s223 + $0x750] sm:$0xff]
      %v466 = vld [vmem:[%s223 + $0x758] sm:$0xff]
      %v467 = vld [vmem:[%s223 + $0x760] sm:$0xff]
      %v468 = vld [vmem:[%s223 + $0x768] sm:$0xff]
      %v469 = vld [vmem:[%s223 + $0x770] sm:$0xff]
      %v470 = vld [vmem:[%s223 + $0x778] sm:$0xff]
      %v471 = vld [vmem:[%s223 + $0x780] sm:$0xff]
      %v472 = vld [vmem:[%s223 + $0x788] sm:$0xff]
      %v473 = vld [vmem:[%s223 + $0x790] sm:$0xff]
      %v474 = vld [vmem:[%s223 + $0x798] sm:$0xff]
      %v475 = vld [vmem:[%s223 + $0x7a0] sm:$0xff]
      %v476 = vld [vmem:[%s223 + $0x7a8] sm:$0xff]
      %v477 = vld [vmem:[%s223 + $0x7b0] sm:$0xff]
      %v478 = vld [vmem:[%s223 + $0x7b8] sm:$0xff]
      %v479 = vld [vmem:[%s223 + $0x7c0] sm:$0xff]
      %v480 = vld [vmem:[%s223 + $0x7c8] sm:$0xff]
      %v481 = vld [vmem:[%s223 + $0x7d0] sm:$0xff]
      %v482 = vld [vmem:[%s223 + $0x7d8] sm:$0xff]
      %v483 = vld [vmem:[%s223 + $0x7e0] sm:$0xff]
      %v484 = vld [vmem:[%s223 + $0x7e8] sm:$0xff]
      %v485 = vld [vmem:[%s223 + $0x7f0] sm:$0xff]
      %v486 = vld [vmem:[%s223 + $0x7f8] sm:$0xff]
      %v487 = vld [vmem:[%s1] sm:$0xff]
      %v488 = vld [vmem:[%s1 + $0x8] sm:$0xff]
      %v489 = vld [vmem:[%s1 + $0x10] sm:$0xff]
      %v490 = vld [vmem:[%s1 + $0x18] sm:$0xff]
      %v491 = vld [vmem:[%s1 + $0x20] sm:$0xff]
      %v492 = vld [vmem:[%s1 + $0x28] sm:$0xff]
      %v493 = vld [vmem:[%s1 + $0x30] sm:$0xff]
      %v494 = vld [vmem:[%s1 + $0x38] sm:$0xff]
      %v495 = vld [vmem:[%s1 + $0x40] sm:$0xff]
      %v496 = vld [vmem:[%s1 + $0x48] sm:$0xff]
      %v497 = vld [vmem:[%s1 + $0x50] sm:$0xff]
      %v498 = vld [vmem:[%s1 + $0x58] sm:$0xff]
      %v499 = vld [vmem:[%s1 + $0x60] sm:$0xff]
      %v500 = vld [vmem:[%s1 + $0x68] sm:$0xff]
      %v501 = vld [vmem:[%s1 + $0x70] sm:$0xff]
      %v502 = vld [vmem:[%s1 + $0x78] sm:$0xff]
      %v503 = vld [vmem:[%s1 + $0x80] sm:$0x7f]
      %v504 = vld [vmem:[%s2] sm:$0x1]
      %v506 = vlaneseq
      %v507 = vshrl.u32 %v506, 7
      %v508 = vsub.s32 0, %v507
      %v509 = vrot.slane %v504, %v508
      %vm511 = vcmask 56320
      %v513 = vsel %vm511, %v232, 0
      %v516 = vsel %vm511, %v234, 0
      %v519 = vsel %vm511, %v236, 0
      %v522 = vsel %vm511, %v238, 0
      %v525 = vsel %vm511, %v240, 0
      %v528 = vsel %vm511, %v242, 0
      %v531 = vsel %vm511, %v244, 0
      %v534 = vsel %vm511, %v246, 0
      %v537 = vsel %vm511, %v248, 0
      %v540 = vsel %vm511, %v250, 0
      %v543 = vsel %vm511, %v252, 0
      %v546 = vsel %vm511, %v254, 0
      %v549 = vsel %vm511, %v256, 0
      %v552 = vsel %vm511, %v258, 0
      %v555 = vsel %vm511, %v260, 0
      %v558 = vsel %vm511, %v262, 0
      %v561 = vsel %vm511, %v264, 0
      %v564 = vsel %vm511, %v266, 0
      %v567 = vsel %vm511, %v268, 0
      %v570 = vsel %vm511, %v270, 0
      %v573 = vsel %vm511, %v272, 0
      %v576 = vsel %vm511, %v274, 0
      %v579 = vsel %vm511, %v276, 0
      %v582 = vsel %vm511, %v278, 0
      %v585 = vsel %vm511, %v280, 0
      %v588 = vsel %vm511, %v282, 0
      %v591 = vsel %vm511, %v284, 0
      %v594 = vsel %vm511, %v286, 0
      %v597 = vsel %vm511, %v288, 0
      %v600 = vsel %vm511, %v290, 0
      %v603 = vsel %vm511, %v292, 0
      %v606 = vsel %vm511, %v294, 0
      %v609 = vsel %vm511, %v296, 0
      %v612 = vsel %vm511, %v298, 0
      %v615 = vsel %vm511, %v300, 0
      %v618 = vsel %vm511, %v302, 0
      %v621 = vsel %vm511, %v304, 0
      %v624 = vsel %vm511, %v306, 0
      %v627 = vsel %vm511, %v308, 0
      %v630 = vsel %vm511, %v310, 0
      %v633 = vsel %vm511, %v312, 0
      %v636 = vsel %vm511, %v314, 0
      %v639 = vsel %vm511, %v316, 0
      %v642 = vsel %vm511, %v318, 0
      %v645 = vsel %vm511, %v320, 0
      %v648 = vsel %vm511, %v322, 0
      %v651 = vsel %vm511, %v324, 0
      %v654 = vsel %vm511, %v326, 0
      %v657 = vsel %vm511, %v328, 0
      %v660 = vsel %vm511, %v330, 0
      %v663 = vsel %vm511, %v332, 0
      %v666 = vsel %vm511, %v334, 0
      %v669 = vsel %vm511, %v336, 0
      %v672 = vsel %vm511, %v338, 0
      %v675 = vsel %vm511, %v340, 0
      %v678 = vsel %vm511, %v342, 0
      %v681 = vsel %vm511, %v344, 0
      %v684 = vsel %vm511, %v346, 0
      %v687 = vsel %vm511, %v348, 0
      %v690 = vsel %vm511, %v350, 0
      %v693 = vsel %vm511, %v352, 0
      %v696 = vsel %vm511, %v354, 0
      %v699 = vsel %vm511, %v356, 0
      %v702 = vsel %vm511, %v358, 0
      %v705 = vsel %vm511, %v360, 0
      %v708 = vsel %vm511, %v362, 0
      %v711 = vsel %vm511, %v364, 0
      %v714 = vsel %vm511, %v366, 0
      %v717 = vsel %vm511, %v368, 0
      %v720 = vsel %vm511, %v370, 0
      %v723 = vsel %vm511, %v372, 0
      %v726 = vsel %vm511, %v374, 0
      %v729 = vsel %vm511, %v376, 0
      %v732 = vsel %vm511, %v378, 0
      %v735 = vsel %vm511, %v380, 0
      %v738 = vsel %vm511, %v382, 0
      %v741 = vsel %vm511, %v384, 0
      %v744 = vsel %vm511, %v386, 0
      %v747 = vsel %vm511, %v388, 0
      %v750 = vsel %vm511, %v390, 0
      %v753 = vsel %vm511, %v392, 0
      %v756 = vsel %vm511, %v394, 0
      %v759 = vsel %vm511, %v396, 0
      %v762 = vsel %vm511, %v398, 0
      %v765 = vsel %vm511, %v400, 0
      %v768 = vsel %vm511, %v402, 0
      %v771 = vsel %vm511, %v404, 0
      %v774 = vsel %vm511, %v406, 0
      %v777 = vsel %vm511, %v408, 0
      %v780 = vsel %vm511, %v410, 0
      %v783 = vsel %vm511, %v412, 0
      %v786 = vsel %vm511, %v414, 0
      %v789 = vsel %vm511, %v416, 0
      %v792 = vsel %vm511, %v418, 0
      %v795 = vsel %vm511, %v420, 0
      %v798 = vsel %vm511, %v422, 0
      %v801 = vsel %vm511, %v424, 0
      %v804 = vsel %vm511, %v426, 0
      %v807 = vsel %vm511, %v428, 0
      %v810 = vsel %vm511, %v430, 0
      %v813 = vsel %vm511, %v432, 0
      %v816 = vsel %vm511, %v434, 0
      %v819 = vsel %vm511, %v436, 0
      %v822 = vsel %vm511, %v438, 0
      %v825 = vsel %vm511, %v440, 0
      %v828 = vsel %vm511, %v442, 0
      %v831 = vsel %vm511, %v444, 0
      %v834 = vsel %vm511, %v446, 0
      %v837 = vsel %vm511, %v448, 0
      %v840 = vsel %vm511, %v450, 0
      %v843 = vsel %vm511, %v452, 0
      %v846 = vsel %vm511, %v454, 0
      %v849 = vsel %vm511, %v456, 0
      %v852 = vsel %vm511, %v458, 0
      %v855 = vsel %vm511, %v460, 0
      %v858 = vsel %vm511, %v462, 0
      %v861 = vsel %vm511, %v464, 0
      %v864 = vsel %vm511, %v466, 0
      %v867 = vsel %vm511, %v468, 0
      %v870 = vsel %vm511, %v470, 0
      %v873 = vsel %vm511, %v472, 0
      %v876 = vsel %vm511, %v474, 0
      %v879 = vsel %vm511, %v476, 0
      %v882 = vsel %vm511, %v478, 0
      %v885 = vsel %vm511, %v480, 0
      %v888 = vsel %vm511, %v482, 0
      %v891 = vsel %vm511, %v484, 0
      %v894 = vsel %vm511, %v486, 0
      %vm896 = vcmask 1046528
      %v898 = vsel %vm896, %v503, 0
      %900 = vmatprep.subr.mxu0 0.0
      %901 = vmatpush1.msra.mxu0 %v487
      %902 = vmatprep.subr.mxu0 0.0
      %903 = vmatpush1.msra.mxu0 %v488
      %904 = vmatprep.subr.mxu0 0.0
      %905 = vmatpush1.msra.mxu0 %v489
      %906 = vmatprep.subr.mxu0 0.0
      %907 = vmatpush1.msra.mxu0 %v490
      %908 = vmatprep.subr.mxu0 0.0
      %909 = vmatpush1.msra.mxu0 %v491
      %910 = vmatprep.subr.mxu0 0.0
      %911 = vmatpush1.msra.mxu0 %v492
      %912 = vmatprep.subr.mxu0 0.0
      %913 = vmatpush1.msra.mxu0 %v493
      %914 = vmatprep.subr.mxu0 0.0
      %915 = vmatpush1.msra.mxu0 %v494
      %916 = vmatprep.subr.mxu0 0.0
      %917 = vmatpush1.msra.mxu0 %v495
      %918 = vmatprep.subr.mxu0 0.0
      %919 = vmatpush1.msra.mxu0 %v496
      %920 = vmatprep.subr.mxu0 0.0
      %921 = vmatpush1.msra.mxu0 %v497
      %922 = vmatprep.subr.mxu0 0.0
      %923 = vmatpush1.msra.mxu0 %v498
      %924 = vmatprep.subr.mxu0 0.0
      %925 = vmatpush1.msra.mxu0 %v499
      %926 = vmatprep.subr.mxu0 0.0
      %927 = vmatpush1.msra.mxu0 %v500
      %928 = vmatprep.subr.mxu0 0.0
      %929 = vmatpush1.msra.mxu0 %v501
      %930 = vmatprep.subr.mxu0 0.0
      %931 = vmatpush1.msra.mxu0 %v502
      %932 = vmatprep.subr.mxu0 0.0
      %933 = vmatpush1.msra.mxu0 %v898
      %934 = vmatprep.subr.mxu0 0.0
      %935 = vmatpush1.msra.mxu0 0.0
      %936 = vmatprep.subr.mxu0 0.0
      %937 = vmatpush1.msra.mxu0 0.0
      %938 = vmatprep.subr.mxu0 0.0
      %939 = vmatpush1.msra.mxu0 0.0
      %940 = vmatprep.subr.mxu0 0.0
      %941 = vmatpush1.msra.mxu0 0.0
      %942 = vmatprep.subr.mxu0 0.0
      %943 = vmatpush1.msra.mxu0 0.0
      %944 = vmatprep.subr.mxu0 0.0
      %945 = vmatpush1.msra.mxu0 0.0
      %946 = vmatprep.subr.mxu0 0.0
      %947 = vmatpush1.msra.mxu0 0.0
      %948 = vmatprep.subr.mxu0 0.0
      %949 = vmatpush1.msra.mxu0 0.0
      %950 = vmatprep.subr.mxu0 0.0
      %951 = vmatpush1.msra.mxu0 0.0
      %952 = vmatprep.subr.mxu0 0.0
      %953 = vmatpush1.msra.mxu0 0.0
      %954 = vmatprep.subr.mxu0 0.0
      %955 = vmatpush1.msra.mxu0 0.0
      %956 = vmatprep.subr.mxu0 0.0
      %957 = vmatpush1.msra.mxu0 0.0
      %958 = vmatprep.subr.mxu0 0.0
      %959 = vmatpush1.msra.mxu0 0.0
      %960 = vmatprep.subr.mxu0 0.0
      %961 = vmatpush1.msra.mxu0 0.0
      %962 = vmatprep.subr.mxu0 0.0
      %963 = vmatpush1.msra.mxu0 0.0
      %964 = vmatprep.mubr.f32.mxu0 %v513
      %965 = vmatmul.mubr.f32.gmra.mrb[0].mxu0 %v231
      %v966 = vpop.f32.mrb[0].mxu0
      %v967 = vadd.f32 %v509, %v966
      %v968 = vpop.f32.mrb[0].mxu0
      %969 = vmatprep.mubr.f32.mxu0 %v516
      %970 = vmatmul.mubr.f32.gmra.mrb[0].mxu0 %v233
      %v971 = vpop.f32.mrb[0].mxu0
      %v972 = vadd.f32 %v509, %v971
      %v973 = vpop.f32.mrb[0].mxu0
      %974 = vmatprep.mubr.f32.mxu0 %v519
      %975 = vmatmul.mubr.f32.gmra.mrb[0].mxu0 %v235
      %v976 = vpop.f32.mrb[0].mxu0
      %v977 = vadd.f32 %v509, %v976
      %v978 = vpop.f32.mrb[0].mxu0
      %979 = vmatprep.mubr.f32.mxu0 %v522
      %980 = vmatmul.mubr.f32.gmra.mrb[0].mxu0 %v237
      %v981 = vpop.f32.mrb[0].mxu0
      %v982 = vadd.f32 %v509, %v981
      %v983 = vpop.f32.mrb[0].mxu0
      %984 = vmatprep.mubr.f32.mxu0 %v525
      %985 = vmatmul.mubr.f32.gmra.mrb[0].mxu0 %v239
      %v986 = vpop.f32.mrb[0].mxu0
      %v987 = vadd.f32 %v509, %v986
      %v988 = vpop.f32.mrb[0].mxu0
      %989 = vmatprep.mubr.f32.mxu0 %v528
      %990 = vmatmul.mubr.f32.gmra.mrb[0].mxu0 %v241
      %v991 = vpop.f32.mrb[0].mxu0
      %v992 = vadd.f32 %v509, %v991
      %v993 = vpop.f32.mrb[0].mxu0
      %994 = vmatprep.mubr.f32.mxu0 %v531
      %995 = vmatmul.mubr.f32.gmra.mrb[0].mxu0 %v243
      %v996 = vpop.f32.mrb[0].mxu0
      %v997 = vadd.f32 %v509, %v996
      %v998 = vpop.f32.mrb[0].mxu0
      %999 = vmatprep.mubr.f32.mxu0 %v534
      %1000 = vmatmul.mubr.f32.gmra.mrb[0].mxu0 %v245
      %v1001 = vpop.f32.mrb[0].mxu0
      %v1002 = vadd.f32 %v509, %v1001
      %v1003 = vpop.f32.mrb[0].mxu0
      %1004 = vmatprep.mubr.f32.mxu0 %v537
      %1005 = vmatmul.mubr.f32.gmra.mrb[0].mxu0 %v247
      %v1006 = vpop.f32.mrb[0].mxu0
      %v1007 = vadd.f32 %v509, %v1006
      %v1008 = vpop.f32.mrb[0].mxu0
      %1009 = vmatprep.mubr.f32.mxu0 %v540
      %1010 = vmatmul.mubr.f32.gmra.mrb[0].mxu0 %v249
      %v1011 = vpop.f32.mrb[0].mxu0
      %v1012 = vadd.f32 %v509, %v1011
      %v1013 = vpop.f32.mrb[0].mxu0
      %1014 = vmatprep.mubr.f32.mxu0 %v543
      %1015 = vmatmul.mubr.f32.gmra.mrb[0].mxu0 %v251
      %v1016 = vpop.f32.mrb[0].mxu0
      %v1017 = vadd.f32 %v509, %v1016
      %v1018 = vpop.f32.mrb[0].mxu0
      %1019 = vmatprep.mubr.f32.mxu0 %v546
      %1020 = vmatmul.mubr.f32.gmra.mrb[0].mxu0 %v253
      %v1021 = vpop.f32.mrb[0].mxu0
      %v1022 = vadd.f32 %v509, %v1021
      %v1023 = vpop.f32.mrb[0].mxu0
      %1024 = vmatprep.mubr.f32.mxu0 %v549
      %1025 = vmatmul.mubr.f32.gmra.mrb[0].mxu0 %v255
      %v1026 = vpop.f32.mrb[0].mxu0
      %v1027 = vadd.f32 %v509, %v1026
      %v1028 = vpop.f32.mrb[0].mxu0
      %1029 = vmatprep.mubr.f32.mxu0 %v552
      %1030 = vmatmul.mubr.f32.gmra.mrb[0].mxu0 %v257
      %v1031 = vpop.f32.mrb[0].mxu0
      %v1032 = vadd.f32 %v509, %v1031
      %v1033 = vpop.f32.mrb[0].mxu0
      %1034 = vmatprep.mubr.f32.mxu0 %v555
      %1035 = vmatmul.mubr.f32.gmra.mrb[0].mxu0 %v259
      %v1036 = vpop.f32.mrb[0].mxu0
      %v1037 = vadd.f32 %v509, %v1036
      %v1038 = vpop.f32.mrb[0].mxu0
      %1039 = vmatprep.mubr.f32.mxu0 %v558
      %1040 = vmatmul.mubr.f32.gmra.mrb[0].mxu0 %v261
      %v1041 = vpop.f32.mrb[0].mxu0
      %v1042 = vadd.f32 %v509, %v1041
      %v1043 = vpop.f32.mrb[0].mxu0
      %1044 = vmatprep.mubr.f32.mxu0 %v561
      %1045 = vmatmul.mubr.f32.gmra.mrb[0].mxu0 %v263
      %v1046 = vpop.f32.mrb[0].mxu0
      %v1047 = vadd.f32 %v509, %v1046
      %v1048 = vpop.f32.mrb[0].mxu0
      %1049 = vmatprep.mubr.f32.mxu0 %v564
      %1050 = vmatmul.mubr.f32.gmra.mrb[0].mxu0 %v265
      %v1051 = vpop.f32.mrb[0].mxu0
      %v1052 = vadd.f32 %v509, %v1051
      %v1053 = vpop.f32.mrb[0].mxu0
      %1054 = vmatprep.mubr.f32.mxu0 %v567
      %1055 = vmatmul.mubr.f32.gmra.mrb[0].mxu0 %v267
      %v1056 = vpop.f32.mrb[0].mxu0
      %v1057 = vadd.f32 %v509, %v1056
      %v1058 = vpop.f32.mrb[0].mxu0
      %1059 = vmatprep.mubr.f32.mxu0 %v570
      %1060 = vmatmul.mubr.f32.gmra.mrb[0].mxu0 %v269
      %v1061 = vpop.f32.mrb[0].mxu0
      %v1062 = vadd.f32 %v509, %v1061
      %v1063 = vpop.f32.mrb[0].mxu0
      %1064 = vmatprep.mubr.f32.mxu0 %v573
      %1065 = vmatmul.mubr.f32.gmra.mrb[0].mxu0 %v271
      %v1066 = vpop.f32.mrb[0].mxu0
      %v1067 = vadd.f32 %v509, %v1066
      %v1068 = vpop.f32.mrb[0].mxu0
      %1069 = vmatprep.mubr.f32.mxu0 %v576
      %1070 = vmatmul.mubr.f32.gmra.mrb[0].mxu0 %v273
      %v1071 = vpop.f32.mrb[0].mxu0
      %v1072 = vadd.f32 %v509, %v1071
      %v1073 = vpop.f32.mrb[0].mxu0
      %1074 = vmatprep.mubr.f32.mxu0 %v579
      %1075 = vmatmul.mubr.f32.gmra.mrb[0].mxu0 %v275
      %v1076 = vpop.f32.mrb[0].mxu0
      %v1077 = vadd.f32 %v509, %v1076
      %v1078 = vpop.f32.mrb[0].mxu0
      %1079 = vmatprep.mubr.f32.mxu0 %v582
      %1080 = vmatmul.mubr.f32.gmra.mrb[0].mxu0 %v277
      %v1081 = vpop.f32.mrb[0].mxu0
      %v1082 = vadd.f32 %v509, %v1081
      %v1083 = vpop.f32.mrb[0].mxu0
      %1084 = vmatprep.mubr.f32.mxu0 %v585
      %1085 = vmatmul.mubr.f32.gmra.mrb[0].mxu0 %v279
      %v1086 = vpop.f32.mrb[0].mxu0
      %v1087 = vadd.f32 %v509, %v1086
      %v1088 = vpop.f32.mrb[0].mxu0
      %1089 = vmatprep.mubr.f32.mxu0 %v588
      %1090 = vmatmul.mubr.f32.gmra.mrb[0].mxu0 %v281
      %v1091 = vpop.f32.mrb[0].mxu0
      %v1092 = vadd.f32 %v509, %v1091
      %v1093 = vpop.f32.mrb[0].mxu0
      %1094 = vmatprep.mubr.f32.mxu0 %v591
      %1095 = vmatmul.mubr.f32.gmra.mrb[0].mxu0 %v283
      %v1096 = vpop.f32.mrb[0].mxu0
      %v1097 = vadd.f32 %v509, %v1096
      %v1098 = vpop.f32.mrb[0].mxu0
      %1099 = vmatprep.mubr.f32.mxu0 %v594
      %1100 = vmatmul.mubr.f32.gmra.mrb[0].mxu0 %v285
      %v1101 = vpop.f32.mrb[0].mxu0
      %v1102 = vadd.f32 %v509, %v1101
      %v1103 = vpop.f32.mrb[0].mxu0
      %1104 = vmatprep.mubr.f32.mxu0 %v597
      %1105 = vmatmul.mubr.f32.gmra.mrb[0].mxu0 %v287
      %v1106 = vpop.f32.mrb[0].mxu0
      %v1107 = vadd.f32 %v509, %v1106
      %v1108 = vpop.f32.mrb[0].mxu0
      %1109 = vmatprep.mubr.f32.mxu0 %v600
      %1110 = vmatmul.mubr.f32.gmra.mrb[0].mxu0 %v289
      %v1111 = vpop.f32.mrb[0].mxu0
      %v1112 = vadd.f32 %v509, %v1111
      %v1113 = vpop.f32.mrb[0].mxu0
      %1114 = vmatprep.mubr.f32.mxu0 %v603
      %1115 = vmatmul.mubr.f32.gmra.mrb[0].mxu0 %v291
      %v1116 = vpop.f32.mrb[0].mxu0
      %v1117 = vadd.f32 %v509, %v1116
      %v1118 = vpop.f32.mrb[0].mxu0
      %1119 = vmatprep.mubr.f32.mxu0 %v606
      %1120 = vmatmul.mubr.f32.gmra.mrb[0].mxu0 %v293
      %v1121 = vpop.f32.mrb[0].mxu0
      %v1122 = vadd.f32 %v509, %v1121
      %v1123 = vpop.f32.mrb[0].mxu0
      %1124 = vmatprep.mubr.f32.mxu0 %v609
      %1125 = vmatmul.mubr.f32.gmra.mrb[0].mxu0 %v295
      %v1126 = vpop.f32.mrb[0].mxu0
      %v1127 = vadd.f32 %v509, %v1126
      %v1128 = vpop.f32.mrb[0].mxu0
      %1129 = vmatprep.mubr.f32.mxu0 %v612
      %1130 = vmatmul.mubr.f32.gmra.mrb[0].mxu0 %v297
      %v1131 = vpop.f32.mrb[0].mxu0
      %v1132 = vadd.f32 %v509, %v1131
      %v1133 = vpop.f32.mrb[0].mxu0
      %1134 = vmatprep.mubr.f32.mxu0 %v615
      %1135 = vmatmul.mubr.f32.gmra.mrb[0].mxu0 %v299
      %v1136 = vpop.f32.mrb[0].mxu0
      %v1137 = vadd.f32 %v509, %v1136
      %v1138 = vpop.f32.mrb[0].mxu0
      %1139 = vmatprep.mubr.f32.mxu0 %v618
      %1140 = vmatmul.mubr.f32.gmra.mrb[0].mxu0 %v301
      %v1141 = vpop.f32.mrb[0].mxu0
      %v1142 = vadd.f32 %v509, %v1141
      %v1143 = vpop.f32.mrb[0].mxu0
      %1144 = vmatprep.mubr.f32.mxu0 %v621
      %1145 = vmatmul.mubr.f32.gmra.mrb[0].mxu0 %v303
      %v1146 = vpop.f32.mrb[0].mxu0
      %v1147 = vadd.f32 %v509, %v1146
      %v1148 = vpop.f32.mrb[0].mxu0
      %1149 = vmatprep.mubr.f32.mxu0 %v624
      %1150 = vmatmul.mubr.f32.gmra.mrb[0].mxu0 %v305
      %v1151 = vpop.f32.mrb[0].mxu0
      %v1152 = vadd.f32 %v509, %v1151
      %v1153 = vpop.f32.mrb[0].mxu0
      %1154 = vmatprep.mubr.f32.mxu0 %v627
      %1155 = vmatmul.mubr.f32.gmra.mrb[0].mxu0 %v307
      %v1156 = vpop.f32.mrb[0].mxu0
      %v1157 = vadd.f32 %v509, %v1156
      %v1158 = vpop.f32.mrb[0].mxu0
      %1159 = vmatprep.mubr.f32.mxu0 %v630
      %1160 = vmatmul.mubr.f32.gmra.mrb[0].mxu0 %v309
      %v1161 = vpop.f32.mrb[0].mxu0
      %v1162 = vadd.f32 %v509, %v1161
      %v1163 = vpop.f32.mrb[0].mxu0
      %1164 = vmatprep.mubr.f32.mxu0 %v633
      %1165 = vmatmul.mubr.f32.gmra.mrb[0].mxu0 %v311
      %v1166 = vpop.f32.mrb[0].mxu0
      %v1167 = vadd.f32 %v509, %v1166
      %v1168 = vpop.f32.mrb[0].mxu0
      %1169 = vmatprep.mubr.f32.mxu0 %v636
      %1170 = vmatmul.mubr.f32.gmra.mrb[0].mxu0 %v313
      %v1171 = vpop.f32.mrb[0].mxu0
      %v1172 = vadd.f32 %v509, %v1171
      %v1173 = vpop.f32.mrb[0].mxu0
      %1174 = vmatprep.mubr.f32.mxu0 %v639
      %1175 = vmatmul.mubr.f32.gmra.mrb[0].mxu0 %v315
      %v1176 = vpop.f32.mrb[0].mxu0
      %v1177 = vadd.f32 %v509, %v1176
      %v1178 = vpop.f32.mrb[0].mxu0
      %1179 = vmatprep.mubr.f32.mxu0 %v642
      %1180 = vmatmul.mubr.f32.gmra.mrb[0].mxu0 %v317
      %v1181 = vpop.f32.mrb[0].mxu0
      %v1182 = vadd.f32 %v509, %v1181
      %v1183 = vpop.f32.mrb[0].mxu0
      %1184 = vmatprep.mubr.f32.mxu0 %v645
      %1185 = vmatmul.mubr.f32.gmra.mrb[0].mxu0 %v319
      %v1186 = vpop.f32.mrb[0].mxu0
      %v1187 = vadd.f32 %v509, %v1186
      %v1188 = vpop.f32.mrb[0].mxu0
      %1189 = vmatprep.mubr.f32.mxu0 %v648
      %1190 = vmatmul.mubr.f32.gmra.mrb[0].mxu0 %v321
      %v1191 = vpop.f32.mrb[0].mxu0
      %v1192 = vadd.f32 %v509, %v1191
      %v1193 = vpop.f32.mrb[0].mxu0
      %1194 = vmatprep.mubr.f32.mxu0 %v651
      %1195 = vmatmul.mubr.f32.gmra.mrb[0].mxu0 %v323
      %v1196 = vpop.f32.mrb[0].mxu0
      %v1197 = vadd.f32 %v509, %v1196
      %v1198 = vpop.f32.mrb[0].mxu0
      %1199 = vmatprep.mubr.f32.mxu0 %v654
      %1200 = vmatmul.mubr.f32.gmra.mrb[0].mxu0 %v325
      %v1201 = vpop.f32.mrb[0].mxu0
      %v1202 = vadd.f32 %v509, %v1201
      %v1203 = vpop.f32.mrb[0].mxu0
      %1204 = vmatprep.mubr.f32.mxu0 %v657
      %1205 = vmatmul.mubr.f32.gmra.mrb[0].mxu0 %v327
      %v1206 = vpop.f32.mrb[0].mxu0
      %v1207 = vadd.f32 %v509, %v1206
      %v1208 = vpop.f32.mrb[0].mxu0
      %1209 = vmatprep.mubr.f32.mxu0 %v660
      %1210 = vmatmul.mubr.f32.gmra.mrb[0].mxu0 %v329
      %v1211 = vpop.f32.mrb[0].mxu0
      %v1212 = vadd.f32 %v509, %v1211
      %v1213 = vpop.f32.mrb[0].mxu0
      %1214 = vmatprep.mubr.f32.mxu0 %v663
      %1215 = vmatmul.mubr.f32.gmra.mrb[0].mxu0 %v331
      %v1216 = vpop.f32.mrb[0].mxu0
      %v1217 = vadd.f32 %v509, %v1216
      %v1218 = vpop.f32.mrb[0].mxu0
      %1219 = vmatprep.mubr.f32.mxu0 %v666
      %1220 = vmatmul.mubr.f32.gmra.mrb[0].mxu0 %v333
      %v1221 = vpop.f32.mrb[0].mxu0
      %v1222 = vadd.f32 %v509, %v1221
      %v1223 = vpop.f32.mrb[0].mxu0
      %1224 = vmatprep.mubr.f32.mxu0 %v669
      %1225 = vmatmul.mubr.f32.gmra.mrb[0].mxu0 %v335
      %v1226 = vpop.f32.mrb[0].mxu0
      %v1227 = vadd.f32 %v509, %v1226
      %v1228 = vpop.f32.mrb[0].mxu0
      %1229 = vmatprep.mubr.f32.mxu0 %v672
      %1230 = vmatmul.mubr.f32.gmra.mrb[0].mxu0 %v337
      %v1231 = vpop.f32.mrb[0].mxu0
      %v1232 = vadd.f32 %v509, %v1231
      %v1233 = vpop.f32.mrb[0].mxu0
      %1234 = vmatprep.mubr.f32.mxu0 %v675
      %1235 = vmatmul.mubr.f32.gmra.mrb[0].mxu0 %v339
      %v1236 = vpop.f32.mrb[0].mxu0
      %v1237 = vadd.f32 %v509, %v1236
      %v1238 = vpop.f32.mrb[0].mxu0
      %1239 = vmatprep.mubr.f32.mxu0 %v678
      %1240 = vmatmul.mubr.f32.gmra.mrb[0].mxu0 %v341
      %v1241 = vpop.f32.mrb[0].mxu0
      %v1242 = vadd.f32 %v509, %v1241
      %v1243 = vpop.f32.mrb[0].mxu0
      %1244 = vmatprep.mubr.f32.mxu0 %v681
      %1245 = vmatmul.mubr.f32.gmra.mrb[0].mxu0 %v343
      %v1246 = vpop.f32.mrb[0].mxu0
      %v1247 = vadd.f32 %v509, %v1246
      %v1248 = vpop.f32.mrb[0].mxu0
      %1249 = vmatprep.mubr.f32.mxu0 %v684
      %1250 = vmatmul.mubr.f32.gmra.mrb[0].mxu0 %v345
      %v1251 = vpop.f32.mrb[0].mxu0
      %v1252 = vadd.f32 %v509, %v1251
      %v1253 = vpop.f32.mrb[0].mxu0
      %1254 = vmatprep.mubr.f32.mxu0 %v687
      %1255 = vmatmul.mubr.f32.gmra.mrb[0].mxu0 %v347
      %v1256 = vpop.f32.mrb[0].mxu0
      %v1257 = vadd.f32 %v509, %v1256
      %v1258 = vpop.f32.mrb[0].mxu0
      %1259 = vmatprep.mubr.f32.mxu0 %v690
      %1260 = vmatmul.mubr.f32.gmra.mrb[0].mxu0 %v349
      %v1261 = vpop.f32.mrb[0].mxu0
      %v1262 = vadd.f32 %v509, %v1261
      %v1263 = vpop.f32.mrb[0].mxu0
      %1264 = vmatprep.mubr.f32.mxu0 %v693
      %1265 = vmatmul.mubr.f32.gmra.mrb[0].mxu0 %v351
      %v1266 = vpop.f32.mrb[0].mxu0
      %v1267 = vadd.f32 %v509, %v1266
      %v1268 = vpop.f32.mrb[0].mxu0
      %1269 = vmatprep.mubr.f32.mxu0 %v696
      %1270 = vmatmul.mubr.f32.gmra.mrb[0].mxu0 %v353
      %v1271 = vpop.f32.mrb[0].mxu0
      %v1272 = vadd.f32 %v509, %v1271
      %v1273 = vpop.f32.mrb[0].mxu0
      %1274 = vmatprep.mubr.f32.mxu0 %v699
      %1275 = vmatmul.mubr.f32.gmra.mrb[0].mxu0 %v355
      %v1276 = vpop.f32.mrb[0].mxu0
      %v1277 = vadd.f32 %v509, %v1276
      %v1278 = vpop.f32.mrb[0].mxu0
      %1279 = vmatprep.mubr.f32.mxu0 %v702
      %1280 = vmatmul.mubr.f32.gmra.mrb[0].mxu0 %v357
      %v1281 = vpop.f32.mrb[0].mxu0
      %v1282 = vadd.f32 %v509, %v1281
      %v1283 = vpop.f32.mrb[0].mxu0
      %1284 = vmatprep.mubr.f32.mxu0 %v705
      %1285 = vmatmul.mubr.f32.gmra.mrb[0].mxu0 %v359
      %v1286 = vpop.f32.mrb[0].mxu0
      %v1287 = vadd.f32 %v509, %v1286
      %v1288 = vpop.f32.mrb[0].mxu0
      %1289 = vmatprep.mubr.f32.mxu0 %v708
      %1290 = vmatmul.mubr.f32.gmra.mrb[0].mxu0 %v361
      %v1291 = vpop.f32.mrb[0].mxu0
      %v1292 = vadd.f32 %v509, %v1291
      %v1293 = vpop.f32.mrb[0].mxu0
      %1294 = vmatprep.mubr.f32.mxu0 %v711
      %1295 = vmatmul.mubr.f32.gmra.mrb[0].mxu0 %v363
      %v1296 = vpop.f32.mrb[0].mxu0
      %v1297 = vadd.f32 %v509, %v1296
      %v1298 = vpop.f32.mrb[0].mxu0
      %1299 = vmatprep.mubr.f32.mxu0 %v714
      %1300 = vmatmul.mubr.f32.gmra.mrb[0].mxu0 %v365
      %v1301 = vpop.f32.mrb[0].mxu0
      %v1302 = vadd.f32 %v509, %v1301
      %v1303 = vpop.f32.mrb[0].mxu0
      %1304 = vmatprep.mubr.f32.mxu0 %v717
      %1305 = vmatmul.mubr.f32.gmra.mrb[0].mxu0 %v367
      %v1306 = vpop.f32.mrb[0].mxu0
      %v1307 = vadd.f32 %v509, %v1306
      %v1308 = vpop.f32.mrb[0].mxu0
      %1309 = vmatprep.mubr.f32.mxu0 %v720
      %1310 = vmatmul.mubr.f32.gmra.mrb[0].mxu0 %v369
      %v1311 = vpop.f32.mrb[0].mxu0
      %v1312 = vadd.f32 %v509, %v1311
      %v1313 = vpop.f32.mrb[0].mxu0
      %1314 = vmatprep.mubr.f32.mxu0 %v723
      %1315 = vmatmul.mubr.f32.gmra.mrb[0].mxu0 %v371
      %v1316 = vpop.f32.mrb[0].mxu0
      %v1317 = vadd.f32 %v509, %v1316
      %v1318 = vpop.f32.mrb[0].mxu0
      %1319 = vmatprep.mubr.f32.mxu0 %v726
      %1320 = vmatmul.mubr.f32.gmra.mrb[0].mxu0 %v373
      %v1321 = vpop.f32.mrb[0].mxu0
      %v1322 = vadd.f32 %v509, %v1321
      %v1323 = vpop.f32.mrb[0].mxu0
      %1324 = vmatprep.mubr.f32.mxu0 %v729
      %1325 = vmatmul.mubr.f32.gmra.mrb[0].mxu0 %v375
      %v1326 = vpop.f32.mrb[0].mxu0
      %v1327 = vadd.f32 %v509, %v1326
      %v1328 = vpop.f32.mrb[0].mxu0
      %1329 = vmatprep.mubr.f32.mxu0 %v732
      %1330 = vmatmul.mubr.f32.gmra.mrb[0].mxu0 %v377
      %v1331 = vpop.f32.mrb[0].mxu0
      %v1332 = vadd.f32 %v509, %v1331
      %v1333 = vpop.f32.mrb[0].mxu0
      %1334 = vmatprep.mubr.f32.mxu0 %v735
      %1335 = vmatmul.mubr.f32.gmra.mrb[0].mxu0 %v379
      %v1336 = vpop.f32.mrb[0].mxu0
      %v1337 = vadd.f32 %v509, %v1336
      %v1338 = vpop.f32.mrb[0].mxu0
      %1339 = vmatprep.mubr.f32.mxu0 %v738
      %1340 = vmatmul.mubr.f32.gmra.mrb[0].mxu0 %v381
      %v1341 = vpop.f32.mrb[0].mxu0
      %v1342 = vadd.f32 %v509, %v1341
      %v1343 = vpop.f32.mrb[0].mxu0
      %1344 = vmatprep.mubr.f32.mxu0 %v741
      %1345 = vmatmul.mubr.f32.gmra.mrb[0].mxu0 %v383
      %v1346 = vpop.f32.mrb[0].mxu0
      %v1347 = vadd.f32 %v509, %v1346
      %v1348 = vpop.f32.mrb[0].mxu0
      %1349 = vmatprep.mubr.f32.mxu0 %v744
      %1350 = vmatmul.mubr.f32.gmra.mrb[0].mxu0 %v385
      %v1351 = vpop.f32.mrb[0].mxu0
      %v1352 = vadd.f32 %v509, %v1351
      %v1353 = vpop.f32.mrb[0].mxu0
      %1354 = vmatprep.mubr.f32.mxu0 %v747
      %1355 = vmatmul.mubr.f32.gmra.mrb[0].mxu0 %v387
      %v1356 = vpop.f32.mrb[0].mxu0
      %v1357 = vadd.f32 %v509, %v1356
      %v1358 = vpop.f32.mrb[0].mxu0
      %1359 = vmatprep.mubr.f32.mxu0 %v750
      %1360 = vmatmul.mubr.f32.gmra.mrb[0].mxu0 %v389
      %v1361 = vpop.f32.mrb[0].mxu0
      %v1362 = vadd.f32 %v509, %v1361
      %v1363 = vpop.f32.mrb[0].mxu0
      %1364 = vmatprep.mubr.f32.mxu0 %v753
      %1365 = vmatmul.mubr.f32.gmra.mrb[0].mxu0 %v391
      %v1366 = vpop.f32.mrb[0].mxu0
      %v1367 = vadd.f32 %v509, %v1366
      %v1368 = vpop.f32.mrb[0].mxu0
      %1369 = vmatprep.mubr.f32.mxu0 %v756
      %1370 = vmatmul.mubr.f32.gmra.mrb[0].mxu0 %v393
      %v1371 = vpop.f32.mrb[0].mxu0
      %v1372 = vadd.f32 %v509, %v1371
      %v1373 = vpop.f32.mrb[0].mxu0
      %1374 = vmatprep.mubr.f32.mxu0 %v759
      %1375 = vmatmul.mubr.f32.gmra.mrb[0].mxu0 %v395
      %v1376 = vpop.f32.mrb[0].mxu0
      %v1377 = vadd.f32 %v509, %v1376
      %v1378 = vpop.f32.mrb[0].mxu0
      %1379 = vmatprep.mubr.f32.mxu0 %v762
      %1380 = vmatmul.mubr.f32.gmra.mrb[0].mxu0 %v397
      %v1381 = vpop.f32.mrb[0].mxu0
      %v1382 = vadd.f32 %v509, %v1381
      %v1383 = vpop.f32.mrb[0].mxu0
      %1384 = vmatprep.mubr.f32.mxu0 %v765
      %1385 = vmatmul.mubr.f32.gmra.mrb[0].mxu0 %v399
      %v1386 = vpop.f32.mrb[0].mxu0
      %v1387 = vadd.f32 %v509, %v1386
      %v1388 = vpop.f32.mrb[0].mxu0
      %1389 = vmatprep.mubr.f32.mxu0 %v768
      %1390 = vmatmul.mubr.f32.gmra.mrb[0].mxu0 %v401
      %v1391 = vpop.f32.mrb[0].mxu0
      %v1392 = vadd.f32 %v509, %v1391
      %v1393 = vpop.f32.mrb[0].mxu0
      %1394 = vmatprep.mubr.f32.mxu0 %v771
      %1395 = vmatmul.mubr.f32.gmra.mrb[0].mxu0 %v403
      %v1396 = vpop.f32.mrb[0].mxu0
      %v1397 = vadd.f32 %v509, %v1396
      %v1398 = vpop.f32.mrb[0].mxu0
      %1399 = vmatprep.mubr.f32.mxu0 %v774
      %1400 = vmatmul.mubr.f32.gmra.mrb[0].mxu0 %v405
      %v1401 = vpop.f32.mrb[0].mxu0
      %v1402 = vadd.f32 %v509, %v1401
      %v1403 = vpop.f32.mrb[0].mxu0
      %1404 = vmatprep.mubr.f32.mxu0 %v777
      %1405 = vmatmul.mubr.f32.gmra.mrb[0].mxu0 %v407
      %v1406 = vpop.f32.mrb[0].mxu0
      %v1407 = vadd.f32 %v509, %v1406
      %v1408 = vpop.f32.mrb[0].mxu0
      %1409 = vmatprep.mubr.f32.mxu0 %v780
      %1410 = vmatmul.mubr.f32.gmra.mrb[0].mxu0 %v409
      %v1411 = vpop.f32.mrb[0].mxu0
      %v1412 = vadd.f32 %v509, %v1411
      %v1413 = vpop.f32.mrb[0].mxu0
      %1414 = vmatprep.mubr.f32.mxu0 %v783
      %1415 = vmatmul.mubr.f32.gmra.mrb[0].mxu0 %v411
      %v1416 = vpop.f32.mrb[0].mxu0
      %v1417 = vadd.f32 %v509, %v1416
      %v1418 = vpop.f32.mrb[0].mxu0
      %1419 = vmatprep.mubr.f32.mxu0 %v786
      %1420 = vmatmul.mubr.f32.gmra.mrb[0].mxu0 %v413
      %v1421 = vpop.f32.mrb[0].mxu0
      %v1422 = vadd.f32 %v509, %v1421
      %v1423 = vpop.f32.mrb[0].mxu0
      %1424 = vmatprep.mubr.f32.mxu0 %v789
      %1425 = vmatmul.mubr.f32.gmra.mrb[0].mxu0 %v415
      %v1426 = vpop.f32.mrb[0].mxu0
      %v1427 = vadd.f32 %v509, %v1426
      %v1428 = vpop.f32.mrb[0].mxu0
      %1429 = vmatprep.mubr.f32.mxu0 %v792
      %1430 = vmatmul.mubr.f32.gmra.mrb[0].mxu0 %v417
      %v1431 = vpop.f32.mrb[0].mxu0
      %v1432 = vadd.f32 %v509, %v1431
      %v1433 = vpop.f32.mrb[0].mxu0
      %1434 = vmatprep.mubr.f32.mxu0 %v795
      %1435 = vmatmul.mubr.f32.gmra.mrb[0].mxu0 %v419
      %v1436 = vpop.f32.mrb[0].mxu0
      %v1437 = vadd.f32 %v509, %v1436
      %v1438 = vpop.f32.mrb[0].mxu0
      %1439 = vmatprep.mubr.f32.mxu0 %v798
      %1440 = vmatmul.mubr.f32.gmra.mrb[0].mxu0 %v421
      %v1441 = vpop.f32.mrb[0].mxu0
      %v1442 = vadd.f32 %v509, %v1441
      %v1443 = vpop.f32.mrb[0].mxu0
      %1444 = vmatprep.mubr.f32.mxu0 %v801
      %1445 = vmatmul.mubr.f32.gmra.mrb[0].mxu0 %v423
      %v1446 = vpop.f32.mrb[0].mxu0
      %v1447 = vadd.f32 %v509, %v1446
      %v1448 = vpop.f32.mrb[0].mxu0
      %1449 = vmatprep.mubr.f32.mxu0 %v804
      %1450 = vmatmul.mubr.f32.gmra.mrb[0].mxu0 %v425
      %v1451 = vpop.f32.mrb[0].mxu0
      %v1452 = vadd.f32 %v509, %v1451
      %v1453 = vpop.f32.mrb[0].mxu0
      %1454 = vmatprep.mubr.f32.mxu0 %v807
      %1455 = vmatmul.mubr.f32.gmra.mrb[0].mxu0 %v427
      %v1456 = vpop.f32.mrb[0].mxu0
      %v1457 = vadd.f32 %v509, %v1456
      %v1458 = vpop.f32.mrb[0].mxu0
      %1459 = vmatprep.mubr.f32.mxu0 %v810
      %1460 = vmatmul.mubr.f32.gmra.mrb[0].mxu0 %v429
      %v1461 = vpop.f32.mrb[0].mxu0
      %v1462 = vadd.f32 %v509, %v1461
      %v1463 = vpop.f32.mrb[0].mxu0
      %1464 = vmatprep.mubr.f32.mxu0 %v813
      %1465 = vmatmul.mubr.f32.gmra.mrb[0].mxu0 %v431
      %v1466 = vpop.f32.mrb[0].mxu0
      %v1467 = vadd.f32 %v509, %v1466
      %v1468 = vpop.f32.mrb[0].mxu0
      %1469 = vmatprep.mubr.f32.mxu0 %v816
      %1470 = vmatmul.mubr.f32.gmra.mrb[0].mxu0 %v433
      %v1471 = vpop.f32.mrb[0].mxu0
      %v1472 = vadd.f32 %v509, %v1471
      %v1473 = vpop.f32.mrb[0].mxu0
      %1474 = vmatprep.mubr.f32.mxu0 %v819
      %1475 = vmatmul.mubr.f32.gmra.mrb[0].mxu0 %v435
      %v1476 = vpop.f32.mrb[0].mxu0
      %v1477 = vadd.f32 %v509, %v1476
      %v1478 = vpop.f32.mrb[0].mxu0
      %1479 = vmatprep.mubr.f32.mxu0 %v822
      %1480 = vmatmul.mubr.f32.gmra.mrb[0].mxu0 %v437
      %v1481 = vpop.f32.mrb[0].mxu0
      %v1482 = vadd.f32 %v509, %v1481
      %v1483 = vpop.f32.mrb[0].mxu0
      %1484 = vmatprep.mubr.f32.mxu0 %v825
      %1485 = vmatmul.mubr.f32.gmra.mrb[0].mxu0 %v439
      %v1486 = vpop.f32.mrb[0].mxu0
      %v1487 = vadd.f32 %v509, %v1486
      %v1488 = vpop.f32.mrb[0].mxu0
      %1489 = vmatprep.mubr.f32.mxu0 %v828
      %1490 = vmatmul.mubr.f32.gmra.mrb[0].mxu0 %v441
      %v1491 = vpop.f32.mrb[0].mxu0
      %v1492 = vadd.f32 %v509, %v1491
      %v1493 = vpop.f32.mrb[0].mxu0
      %1494 = vmatprep.mubr.f32.mxu0 %v831
      %1495 = vmatmul.mubr.f32.gmra.mrb[0].mxu0 %v443
      %v1496 = vpop.f32.mrb[0].mxu0
      %v1497 = vadd.f32 %v509, %v1496
      %v1498 = vpop.f32.mrb[0].mxu0
      %1499 = vmatprep.mubr.f32.mxu0 %v834
      %1500 = vmatmul.mubr.f32.gmra.mrb[0].mxu0 %v445
      %v1501 = vpop.f32.mrb[0].mxu0
      %v1502 = vadd.f32 %v509, %v1501
      %v1503 = vpop.f32.mrb[0].mxu0
      %1504 = vmatprep.mubr.f32.mxu0 %v837
      %1505 = vmatmul.mubr.f32.gmra.mrb[0].mxu0 %v447
      %v1506 = vpop.f32.mrb[0].mxu0
      %v1507 = vadd.f32 %v509, %v1506
      %v1508 = vpop.f32.mrb[0].mxu0
      %1509 = vmatprep.mubr.f32.mxu0 %v840
      %1510 = vmatmul.mubr.f32.gmra.mrb[0].mxu0 %v449
      %v1511 = vpop.f32.mrb[0].mxu0
      %v1512 = vadd.f32 %v509, %v1511
      %v1513 = vpop.f32.mrb[0].mxu0
      %1514 = vmatprep.mubr.f32.mxu0 %v843
      %1515 = vmatmul.mubr.f32.gmra.mrb[0].mxu0 %v451
      %v1516 = vpop.f32.mrb[0].mxu0
      %v1517 = vadd.f32 %v509, %v1516
      %v1518 = vpop.f32.mrb[0].mxu0
      %1519 = vmatprep.mubr.f32.mxu0 %v846
      %1520 = vmatmul.mubr.f32.gmra.mrb[0].mxu0 %v453
      %v1521 = vpop.f32.mrb[0].mxu0
      %v1522 = vadd.f32 %v509, %v1521
      %v1523 = vpop.f32.mrb[0].mxu0
      %1524 = vmatprep.mubr.f32.mxu0 %v849
      %1525 = vmatmul.mubr.f32.gmra.mrb[0].mxu0 %v455
      %v1526 = vpop.f32.mrb[0].mxu0
      %v1527 = vadd.f32 %v509, %v1526
      %v1528 = vpop.f32.mrb[0].mxu0
      %1529 = vmatprep.mubr.f32.mxu0 %v852
      %1530 = vmatmul.mubr.f32.gmra.mrb[0].mxu0 %v457
      %v1531 = vpop.f32.mrb[0].mxu0
      %v1532 = vadd.f32 %v509, %v1531
      %v1533 = vpop.f32.mrb[0].mxu0
      %1534 = vmatprep.mubr.f32.mxu0 %v855
      %1535 = vmatmul.mubr.f32.gmra.mrb[0].mxu0 %v459
      %v1536 = vpop.f32.mrb[0].mxu0
      %v1537 = vadd.f32 %v509, %v1536
      %v1538 = vpop.f32.mrb[0].mxu0
      %1539 = vmatprep.mubr.f32.mxu0 %v858
      %1540 = vmatmul.mubr.f32.gmra.mrb[0].mxu0 %v461
      %v1541 = vpop.f32.mrb[0].mxu0
      %v1542 = vadd.f32 %v509, %v1541
      %v1543 = vpop.f32.mrb[0].mxu0
      %1544 = vmatprep.mubr.f32.mxu0 %v861
      %1545 = vmatmul.mubr.f32.gmra.mrb[0].mxu0 %v463
      %v1546 = vpop.f32.mrb[0].mxu0
      %v1547 = vadd.f32 %v509, %v1546
      %v1548 = vpop.f32.mrb[0].mxu0
      %1549 = vmatprep.mubr.f32.mxu0 %v864
      %1550 = vmatmul.mubr.f32.gmra.mrb[0].mxu0 %v465
      %v1551 = vpop.f32.mrb[0].mxu0
      %v1552 = vadd.f32 %v509, %v1551
      %v1553 = vpop.f32.mrb[0].mxu0
      %1554 = vmatprep.mubr.f32.mxu0 %v867
      %1555 = vmatmul.mubr.f32.gmra.mrb[0].mxu0 %v467
      %v1556 = vpop.f32.mrb[0].mxu0
      %v1557 = vadd.f32 %v509, %v1556
      %v1558 = vpop.f32.mrb[0].mxu0
      %1559 = vmatprep.mubr.f32.mxu0 %v870
      %1560 = vmatmul.mubr.f32.gmra.mrb[0].mxu0 %v469
      %v1561 = vpop.f32.mrb[0].mxu0
      %v1562 = vadd.f32 %v509, %v1561
      %v1563 = vpop.f32.mrb[0].mxu0
      %1564 = vmatprep.mubr.f32.mxu0 %v873
      %1565 = vmatmul.mubr.f32.gmra.mrb[0].mxu0 %v471
      %v1566 = vpop.f32.mrb[0].mxu0
      %v1567 = vadd.f32 %v509, %v1566
      %v1568 = vpop.f32.mrb[0].mxu0
      %1569 = vmatprep.mubr.f32.mxu0 %v876
      %1570 = vmatmul.mubr.f32.gmra.mrb[0].mxu0 %v473
      %v1571 = vpop.f32.mrb[0].mxu0
      %v1572 = vadd.f32 %v509, %v1571
      %v1573 = vpop.f32.mrb[0].mxu0
      %1574 = vmatprep.mubr.f32.mxu0 %v879
      %1575 = vmatmul.mubr.f32.gmra.mrb[0].mxu0 %v475
      %v1576 = vpop.f32.mrb[0].mxu0
      %v1577 = vadd.f32 %v509, %v1576
      %v1578 = vpop.f32.mrb[0].mxu0
      %1579 = vmatprep.mubr.f32.mxu0 %v882
      %1580 = vmatmul.mubr.f32.gmra.mrb[0].mxu0 %v477
      %v1581 = vpop.f32.mrb[0].mxu0
      %v1582 = vadd.f32 %v509, %v1581
      %v1583 = vpop.f32.mrb[0].mxu0
      %1584 = vmatprep.mubr.f32.mxu0 %v885
      %1585 = vmatmul.mubr.f32.gmra.mrb[0].mxu0 %v479
      %v1586 = vpop.f32.mrb[0].mxu0
      %v1587 = vadd.f32 %v509, %v1586
      %v1588 = vpop.f32.mrb[0].mxu0
      %1589 = vmatprep.mubr.f32.mxu0 %v888
      %1590 = vmatmul.mubr.f32.gmra.mrb[0].mxu0 %v481
      %v1591 = vpop.f32.mrb[0].mxu0
      %v1592 = vadd.f32 %v509, %v1591
      %v1593 = vpop.f32.mrb[0].mxu0
      %1594 = vmatprep.mubr.f32.mxu0 %v891
      %1595 = vmatmul.mubr.f32.gmra.mrb[0].mxu0 %v483
      %v1596 = vpop.f32.mrb[0].mxu0
      %v1597 = vadd.f32 %v509, %v1596
      %v1598 = vpop.f32.mrb[0].mxu0
      %1599 = vmatprep.mubr.f32.mxu0 %v894
      %1600 = vmatmul.mubr.f32.gmra.mrb[0].mxu0 %v485
      %v1601 = vpop.f32.mrb[0].mxu0
      %v1602 = vadd.f32 %v509, %v1601
      %v1603 = vpop.f32.mrb[0].mxu0
      %1604 = vdwg.mxu0
      %v1605 = vmax.f32 %v967, 0.0
      %v1606 = vmax.f32 %v972, 0.0
      %v1607 = vmax.f32 %v977, 0.0
      %v1608 = vmax.f32 %v982, 0.0
      %v1609 = vmax.f32 %v987, 0.0
      %v1610 = vmax.f32 %v992, 0.0
      %v1611 = vmax.f32 %v997, 0.0
      %v1612 = vmax.f32 %v1002, 0.0
      %v1613 = vmax.f32 %v1007, 0.0
      %v1614 = vmax.f32 %v1012, 0.0
      %v1615 = vmax.f32 %v1017, 0.0
      %v1616 = vmax.f32 %v1022, 0.0
      %v1617 = vmax.f32 %v1027, 0.0
      %v1618 = vmax.f32 %v1032, 0.0
      %v1619 = vmax.f32 %v1037, 0.0
      %v1620 = vmax.f32 %v1042, 0.0
      %v1621 = vmax.f32 %v1047, 0.0
      %v1622 = vmax.f32 %v1052, 0.0
      %v1623 = vmax.f32 %v1057, 0.0
      %v1624 = vmax.f32 %v1062, 0.0
      %v1625 = vmax.f32 %v1067, 0.0
      %v1626 = vmax.f32 %v1072, 0.0
      %v1627 = vmax.f32 %v1077, 0.0
      %v1628 = vmax.f32 %v1082, 0.0
      %v1629 = vmax.f32 %v1087, 0.0
      %v1630 = vmax.f32 %v1092, 0.0
      %v1631 = vmax.f32 %v1097, 0.0
      %v1632 = vmax.f32 %v1102, 0.0
      %v1633 = vmax.f32 %v1107, 0.0
      %v1634 = vmax.f32 %v1112, 0.0
      %v1635 = vmax.f32 %v1117, 0.0
      %v1636 = vmax.f32 %v1122, 0.0
      %v1637 = vmax.f32 %v1127, 0.0
      %v1638 = vmax.f32 %v1132, 0.0
      %v1639 = vmax.f32 %v1137, 0.0
      %v1640 = vmax.f32 %v1142, 0.0
      %v1641 = vmax.f32 %v1147, 0.0
      %v1642 = vmax.f32 %v1152, 0.0
      %v1643 = vmax.f32 %v1157, 0.0
      %v1644 = vmax.f32 %v1162, 0.0
      %v1645 = vmax.f32 %v1167, 0.0
      %v1646 = vmax.f32 %v1172, 0.0
      %v1647 = vmax.f32 %v1177, 0.0
      %v1648 = vmax.f32 %v1182, 0.0
      %v1649 = vmax.f32 %v1187, 0.0
      %v1650 = vmax.f32 %v1192, 0.0
      %v1651 = vmax.f32 %v1197, 0.0
      %v1652 = vmax.f32 %v1202, 0.0
      %v1653 = vmax.f32 %v1207, 0.0
      %v1654 = vmax.f32 %v1212, 0.0
      %v1655 = vmax.f32 %v1217, 0.0
      %v1656 = vmax.f32 %v1222, 0.0
      %v1657 = vmax.f32 %v1227, 0.0
      %v1658 = vmax.f32 %v1232, 0.0
      %v1659 = vmax.f32 %v1237, 0.0
      %v1660 = vmax.f32 %v1242, 0.0
      %v1661 = vmax.f32 %v1247, 0.0
      %v1662 = vmax.f32 %v1252, 0.0
      %v1663 = vmax.f32 %v1257, 0.0
      %v1664 = vmax.f32 %v1262, 0.0
      %v1665 = vmax.f32 %v1267, 0.0
      %v1666 = vmax.f32 %v1272, 0.0
      %v1667 = vmax.f32 %v1277, 0.0
      %v1668 = vmax.f32 %v1282, 0.0
      %v1669 = vmax.f32 %v1287, 0.0
      %v1670 = vmax.f32 %v1292, 0.0
      %v1671 = vmax.f32 %v1297, 0.0
      %v1672 = vmax.f32 %v1302, 0.0
      %v1673 = vmax.f32 %v1307, 0.0
      %v1674 = vmax.f32 %v1312, 0.0
      %v1675 = vmax.f32 %v1317, 0.0
      %v1676 = vmax.f32 %v1322, 0.0
      %v1677 = vmax.f32 %v1327, 0.0
      %v1678 = vmax.f32 %v1332, 0.0
      %v1679 = vmax.f32 %v1337, 0.0
      %v1680 = vmax.f32 %v1342, 0.0
      %v1681 = vmax.f32 %v1347, 0.0
      %v1682 = vmax.f32 %v1352, 0.0
      %v1683 = vmax.f32 %v1357, 0.0
      %v1684 = vmax.f32 %v1362, 0.0
      %v1685 = vmax.f32 %v1367, 0.0
      %v1686 = vmax.f32 %v1372, 0.0
      %v1687 = vmax.f32 %v1377, 0.0
      %v1688 = vmax.f32 %v1382, 0.0
      %v1689 = vmax.f32 %v1387, 0.0
      %v1690 = vmax.f32 %v1392, 0.0
      %v1691 = vmax.f32 %v1397, 0.0
      %v1692 = vmax.f32 %v1402, 0.0
      %v1693 = vmax.f32 %v1407, 0.0
      %v1694 = vmax.f32 %v1412, 0.0
      %v1695 = vmax.f32 %v1417, 0.0
      %v1696 = vmax.f32 %v1422, 0.0
      %v1697 = vmax.f32 %v1427, 0.0
      %v1698 = vmax.f32 %v1432, 0.0
      %v1699 = vmax.f32 %v1437, 0.0
      %v1700 = vmax.f32 %v1442, 0.0
      %v1701 = vmax.f32 %v1447, 0.0
      %v1702 = vmax.f32 %v1452, 0.0
      %v1703 = vmax.f32 %v1457, 0.0
      %v1704 = vmax.f32 %v1462, 0.0
      %v1705 = vmax.f32 %v1467, 0.0
      %v1706 = vmax.f32 %v1472, 0.0
      %v1707 = vmax.f32 %v1477, 0.0
      %v1708 = vmax.f32 %v1482, 0.0
      %v1709 = vmax.f32 %v1487, 0.0
      %v1710 = vmax.f32 %v1492, 0.0
      %v1711 = vmax.f32 %v1497, 0.0
      %v1712 = vmax.f32 %v1502, 0.0
      %v1713 = vmax.f32 %v1507, 0.0
      %v1714 = vmax.f32 %v1512, 0.0
      %v1715 = vmax.f32 %v1517, 0.0
      %v1716 = vmax.f32 %v1522, 0.0
      %v1717 = vmax.f32 %v1527, 0.0
      %v1718 = vmax.f32 %v1532, 0.0
      %v1719 = vmax.f32 %v1537, 0.0
      %v1720 = vmax.f32 %v1542, 0.0
      %v1721 = vmax.f32 %v1547, 0.0
      %v1722 = vmax.f32 %v1552, 0.0
      %v1723 = vmax.f32 %v1557, 0.0
      %v1724 = vmax.f32 %v1562, 0.0
      %v1725 = vmax.f32 %v1567, 0.0
      %v1726 = vmax.f32 %v1572, 0.0
      %v1727 = vmax.f32 %v1577, 0.0
      %v1728 = vmax.f32 %v1582, 0.0
      %v1729 = vmax.f32 %v1587, 0.0
      %v1730 = vmax.f32 %v1592, 0.0
      %v1731 = vmax.f32 %v1597, 0.0
      %v1732 = vmax.f32 %v1602, 0.0
      %v1733 = vld [vmem:[%s3] sm:$0xff]
      %v1734 = vld [vmem:[%s3 + $0x8] sm:$0xff]
      %v1735 = vld [vmem:[%s4] sm:$0x1]
      %v1737 = vlaneseq
      %v1738 = vshrl.u32 %v1737, 7
      %v1739 = vsub.s32 0, %v1738
      %v1740 = vrot.slane %v1735, %v1739
      %vm1742 = vcmask 130048
      %v1744 = vsel %vm1742, %v1605, 0
      %v1747 = vsel %vm1742, %v1606, 0
      %v1750 = vsel %vm1742, %v1607, 0
      %v1753 = vsel %vm1742, %v1608, 0
      %v1756 = vsel %vm1742, %v1609, 0
      %v1759 = vsel %vm1742, %v1610, 0
      %v1762 = vsel %vm1742, %v1611, 0
      %v1765 = vsel %vm1742, %v1612, 0
      %v1768 = vsel %vm1742, %v1613, 0
      %v1771 = vsel %vm1742, %v1614, 0
      %v1774 = vsel %vm1742, %v1615, 0
      %v1777 = vsel %vm1742, %v1616, 0
      %v1780 = vsel %vm1742, %v1617, 0
      %v1783 = vsel %vm1742, %v1618, 0
      %v1786 = vsel %vm1742, %v1619, 0
      %v1789 = vsel %vm1742, %v1620, 0
      %v1792 = vsel %vm1742, %v1621, 0
      %v1795 = vsel %vm1742, %v1622, 0
      %v1798 = vsel %vm1742, %v1623, 0
      %v1801 = vsel %vm1742, %v1624, 0
      %v1804 = vsel %vm1742, %v1625, 0
      %v1807 = vsel %vm1742, %v1626, 0
      %v1810 = vsel %vm1742, %v1627, 0
      %v1813 = vsel %vm1742, %v1628, 0
      %v1816 = vsel %vm1742, %v1629, 0
      %v1819 = vsel %vm1742, %v1630, 0
      %v1822 = vsel %vm1742, %v1631, 0
      %v1825 = vsel %vm1742, %v1632, 0
      %v1828 = vsel %vm1742, %v1633, 0
      %v1831 = vsel %vm1742, %v1634, 0
      %v1834 = vsel %vm1742, %v1635, 0
      %v1837 = vsel %vm1742, %v1636, 0
      %v1840 = vsel %vm1742, %v1637, 0
      %v1843 = vsel %vm1742, %v1638, 0
      %v1846 = vsel %vm1742, %v1639, 0
      %v1849 = vsel %vm1742, %v1640, 0
      %v1852 = vsel %vm1742, %v1641, 0
      %v1855 = vsel %vm1742, %v1642, 0
      %v1858 = vsel %vm1742, %v1643, 0
      %v1861 = vsel %vm1742, %v1644, 0
      %v1864 = vsel %vm1742, %v1645, 0
      %v1867 = vsel %vm1742, %v1646, 0
      %v1870 = vsel %vm1742, %v1647, 0
      %v1873 = vsel %vm1742, %v1648, 0
      %v1876 = vsel %vm1742, %v1649, 0
      %v1879 = vsel %vm1742, %v1650, 0
      %v1882 = vsel %vm1742, %v1651, 0
      %v1885 = vsel %vm1742, %v1652, 0
      %v1888 = vsel %vm1742, %v1653, 0
      %v1891 = vsel %vm1742, %v1654, 0
      %v1894 = vsel %vm1742, %v1655, 0
      %v1897 = vsel %vm1742, %v1656, 0
      %v1900 = vsel %vm1742, %v1657, 0
      %v1903 = vsel %vm1742, %v1658, 0
      %v1906 = vsel %vm1742, %v1659, 0
      %v1909 = vsel %vm1742, %v1660, 0
      %v1912 = vsel %vm1742, %v1661, 0
      %v1915 = vsel %vm1742, %v1662, 0
      %v1918 = vsel %vm1742, %v1663, 0
      %v1921 = vsel %vm1742, %v1664, 0
      %v1924 = vsel %vm1742, %v1665, 0
      %v1927 = vsel %vm1742, %v1666, 0
      %v1930 = vsel %vm1742, %v1667, 0
      %v1933 = vsel %vm1742, %v1668, 0
      %v1936 = vsel %vm1742, %v1669, 0
      %v1939 = vsel %vm1742, %v1670, 0
      %v1942 = vsel %vm1742, %v1671, 0
      %v1945 = vsel %vm1742, %v1672, 0
      %v1948 = vsel %vm1742, %v1673, 0
      %v1951 = vsel %vm1742, %v1674, 0
      %v1954 = vsel %vm1742, %v1675, 0
      %v1957 = vsel %vm1742, %v1676, 0
      %v1960 = vsel %vm1742, %v1677, 0
      %v1963 = vsel %vm1742, %v1678, 0
      %v1966 = vsel %vm1742, %v1679, 0
      %v1969 = vsel %vm1742, %v1680, 0
      %v1972 = vsel %vm1742, %v1681, 0
      %v1975 = vsel %vm1742, %v1682, 0
      %v1978 = vsel %vm1742, %v1683, 0
      %v1981 = vsel %vm1742, %v1684, 0
      %v1984 = vsel %vm1742, %v1685, 0
      %v1987 = vsel %vm1742, %v1686, 0
      %v1990 = vsel %vm1742, %v1687, 0
      %v1993 = vsel %vm1742, %v1688, 0
      %v1996 = vsel %vm1742, %v1689, 0
      %v1999 = vsel %vm1742, %v1690, 0
      %v2002 = vsel %vm1742, %v1691, 0
      %v2005 = vsel %vm1742, %v1692, 0
      %v2008 = vsel %vm1742, %v1693, 0
      %v2011 = vsel %vm1742, %v1694, 0
      %v2014 = vsel %vm1742, %v1695, 0
      %v2017 = vsel %vm1742, %v1696, 0
      %v2020 = vsel %vm1742, %v1697, 0
      %v2023 = vsel %vm1742, %v1698, 0
      %v2026 = vsel %vm1742, %v1699, 0
      %v2029 = vsel %vm1742, %v1700, 0
      %v2032 = vsel %vm1742, %v1701, 0
      %v2035 = vsel %vm1742, %v1702, 0
      %v2038 = vsel %vm1742, %v1703, 0
      %v2041 = vsel %vm1742, %v1704, 0
      %v2044 = vsel %vm1742, %v1705, 0
      %v2047 = vsel %vm1742, %v1706, 0
      %v2050 = vsel %vm1742, %v1707, 0
      %v2053 = vsel %vm1742, %v1708, 0
      %v2056 = vsel %vm1742, %v1709, 0
      %v2059 = vsel %vm1742, %v1710, 0
      %v2062 = vsel %vm1742, %v1711, 0
      %v2065 = vsel %vm1742, %v1712, 0
      %v2068 = vsel %vm1742, %v1713, 0
      %v2071 = vsel %vm1742, %v1714, 0
      %v2074 = vsel %vm1742, %v1715, 0
      %v2077 = vsel %vm1742, %v1716, 0
      %v2080 = vsel %vm1742, %v1717, 0
      %v2083 = vsel %vm1742, %v1718, 0
      %v2086 = vsel %vm1742, %v1719, 0
      %v2089 = vsel %vm1742, %v1720, 0
      %v2092 = vsel %vm1742, %v1721, 0
      %v2095 = vsel %vm1742, %v1722, 0
      %v2098 = vsel %vm1742, %v1723, 0
      %v2101 = vsel %vm1742, %v1724, 0
      %v2104 = vsel %vm1742, %v1725, 0
      %v2107 = vsel %vm1742, %v1726, 0
      %v2110 = vsel %vm1742, %v1727, 0
      %v2113 = vsel %vm1742, %v1728, 0
      %v2116 = vsel %vm1742, %v1729, 0
      %v2119 = vsel %vm1742, %v1730, 0
      %v2122 = vsel %vm1742, %v1731, 0
      %v2125 = vsel %vm1742, %v1732, 0
      %2127 = vmatprep.subr.mxu0 0.0
      %2128 = vmatpush1.msra.mxu0 %v1733
      %2129 = vmatprep.subr.mxu0 0.0
      %2130 = vmatpush1.msra.mxu0 %v1734
      %2131 = vmatprep.subr.mxu0 0.0
      %2132 = vmatpush1.msra.mxu0 0.0
      %2133 = vmatprep.subr.mxu0 0.0
      %2134 = vmatpush1.msra.mxu0 0.0
      %2135 = vmatprep.subr.mxu0 0.0
      %2136 = vmatpush1.msra.mxu0 0.0
      %2137 = vmatprep.subr.mxu0 0.0
      %2138 = vmatpush1.msra.mxu0 0.0
      %2139 = vmatprep.subr.mxu0 0.0
      %2140 = vmatpush1.msra.mxu0 0.0
      %2141 = vmatprep.subr.mxu0 0.0
      %2142 = vmatpush1.msra.mxu0 0.0
      %2143 = vmatprep.subr.mxu0 0.0
      %2144 = vmatpush1.msra.mxu0 0.0
      %2145 = vmatprep.subr.mxu0 0.0
      %2146 = vmatpush1.msra.mxu0 0.0
      %2147 = vmatprep.subr.mxu0 0.0
      %2148 = vmatpush1.msra.mxu0 0.0
      %2149 = vmatprep.subr.mxu0 0.0
      %2150 = vmatpush1.msra.mxu0 0.0
      %2151 = vmatprep.subr.mxu0 0.0
      %2152 = vmatpush1.msra.mxu0 0.0
      %2153 = vmatprep.subr.mxu0 0.0
      %2154 = vmatpush1.msra.mxu0 0.0
      %2155 = vmatprep.subr.mxu0 0.0
      %2156 = vmatpush1.msra.mxu0 0.0
      %2157 = vmatprep.subr.mxu0 0.0
      %2158 = vmatpush1.msra.mxu0 0.0
      %2159 = vmatprep.subr.mxu0 0.0
      %2160 = vmatpush1.msra.mxu0 0.0
      %2161 = vmatprep.subr.mxu0 0.0
      %2162 = vmatpush1.msra.mxu0 0.0
      %2163 = vmatprep.subr.mxu0 0.0
      %2164 = vmatpush1.msra.mxu0 0.0
      %2165 = vmatprep.subr.mxu0 0.0
      %2166 = vmatpush1.msra.mxu0 0.0
      %2167 = vmatprep.subr.mxu0 0.0
      %2168 = vmatpush1.msra.mxu0 0.0
      %2169 = vmatprep.subr.mxu0 0.0
      %2170 = vmatpush1.msra.mxu0 0.0
      %2171 = vmatprep.subr.mxu0 0.0
      %2172 = vmatpush1.msra.mxu0 0.0
      %2173 = vmatprep.subr.mxu0 0.0
      %2174 = vmatpush1.msra.mxu0 0.0
      %2175 = vmatprep.subr.mxu0 0.0
      %2176 = vmatpush1.msra.mxu0 0.0
      %2177 = vmatprep.subr.mxu0 0.0
      %2178 = vmatpush1.msra.mxu0 0.0
      %2179 = vmatprep.subr.mxu0 0.0
      %2180 = vmatpush1.msra.mxu0 0.0
      %2181 = vmatprep.subr.mxu0 0.0
      %2182 = vmatpush1.msra.mxu0 0.0
      %2183 = vmatprep.subr.mxu0 0.0
      %2184 = vmatpush1.msra.mxu0 0.0
      %2185 = vmatprep.subr.mxu0 0.0
      %2186 = vmatpush1.msra.mxu0 0.0
      %2187 = vmatprep.subr.mxu0 0.0
      %2188 = vmatpush1.msra.mxu0 0.0
      %2189 = vmatprep.subr.mxu0 0.0
      %2190 = vmatpush1.msra.mxu0 0.0
      %2191 = vmatprep.mubr.f32.mxu0 0.0
      %2192 = vmatmul.mubr.f32.gmra.mrb[0].mxu0 %v1744
      %v2193 = vpop.f32.mrb[0].mxu0
      %v2194 = vadd.f32 %v1740, %v2193
      %v2195 = vpop.f32.mrb[0].mxu0
      %2196 = vmatprep.mubr.f32.mxu0 0.0
      %2197 = vmatmul.mubr.f32.gmra.mrb[0].mxu0 %v1747
      %v2198 = vpop.f32.mrb[0].mxu0
      %v2199 = vadd.f32 %v1740, %v2198
      %v2200 = vpop.f32.mrb[0].mxu0
      %2201 = vmatprep.mubr.f32.mxu0 0.0
      %2202 = vmatmul.mubr.f32.gmra.mrb[0].mxu0 %v1750
      %v2203 = vpop.f32.mrb[0].mxu0
      %v2204 = vadd.f32 %v1740, %v2203
      %v2205 = vpop.f32.mrb[0].mxu0
      %2206 = vmatprep.mubr.f32.mxu0 0.0
      %2207 = vmatmul.mubr.f32.gmra.mrb[0].mxu0 %v1753
      %v2208 = vpop.f32.mrb[0].mxu0
      %v2209 = vadd.f32 %v1740, %v2208
      %v2210 = vpop.f32.mrb[0].mxu0
      %2211 = vmatprep.mubr.f32.mxu0 0.0
      %2212 = vmatmul.mubr.f32.gmra.mrb[0].mxu0 %v1756
      %v2213 = vpop.f32.mrb[0].mxu0
      %v2214 = vadd.f32 %v1740, %v2213
      %v2215 = vpop.f32.mrb[0].mxu0
      %2216 = vmatprep.mubr.f32.mxu0 0.0
      %2217 = vmatmul.mubr.f32.gmra.mrb[0].mxu0 %v1759
      %v2218 = vpop.f32.mrb[0].mxu0
      %v2219 = vadd.f32 %v1740, %v2218
      %v2220 = vpop.f32.mrb[0].mxu0
      %2221 = vmatprep.mubr.f32.mxu0 0.0
      %2222 = vmatmul.mubr.f32.gmra.mrb[0].mxu0 %v1762
      %v2223 = vpop.f32.mrb[0].mxu0
      %v2224 = vadd.f32 %v1740, %v2223
      %v2225 = vpop.f32.mrb[0].mxu0
      %2226 = vmatprep.mubr.f32.mxu0 0.0
      %2227 = vmatmul.mubr.f32.gmra.mrb[0].mxu0 %v1765
      %v2228 = vpop.f32.mrb[0].mxu0
      %v2229 = vadd.f32 %v1740, %v2228
      %v2230 = vpop.f32.mrb[0].mxu0
      %2231 = vmatprep.mubr.f32.mxu0 0.0
      %2232 = vmatmul.mubr.f32.gmra.mrb[0].mxu0 %v1768
      %v2233 = vpop.f32.mrb[0].mxu0
      %v2234 = vadd.f32 %v1740, %v2233
      %v2235 = vpop.f32.mrb[0].mxu0
      %2236 = vmatprep.mubr.f32.mxu0 0.0
      %2237 = vmatmul.mubr.f32.gmra.mrb[0].mxu0 %v1771
      %v2238 = vpop.f32.mrb[0].mxu0
      %v2239 = vadd.f32 %v1740, %v2238
      %v2240 = vpop.f32.mrb[0].mxu0
      %2241 = vmatprep.mubr.f32.mxu0 0.0
      %2242 = vmatmul.mubr.f32.gmra.mrb[0].mxu0 %v1774
      %v2243 = vpop.f32.mrb[0].mxu0
      %v2244 = vadd.f32 %v1740, %v2243
      %v2245 = vpop.f32.mrb[0].mxu0
      %2246 = vmatprep.mubr.f32.mxu0 0.0
      %2247 = vmatmul.mubr.f32.gmra.mrb[0].mxu0 %v1777
      %v2248 = vpop.f32.mrb[0].mxu0
      %v2249 = vadd.f32 %v1740, %v2248
      %v2250 = vpop.f32.mrb[0].mxu0
      %2251 = vmatprep.mubr.f32.mxu0 0.0
      %2252 = vmatmul.mubr.f32.gmra.mrb[0].mxu0 %v1780
      %v2253 = vpop.f32.mrb[0].mxu0
      %v2254 = vadd.f32 %v1740, %v2253
      %v2255 = vpop.f32.mrb[0].mxu0
      %2256 = vmatprep.mubr.f32.mxu0 0.0
      %2257 = vmatmul.mubr.f32.gmra.mrb[0].mxu0 %v1783
      %v2258 = vpop.f32.mrb[0].mxu0
      %v2259 = vadd.f32 %v1740, %v2258
      %v2260 = vpop.f32.mrb[0].mxu0
      %2261 = vmatprep.mubr.f32.mxu0 0.0
      %2262 = vmatmul.mubr.f32.gmra.mrb[0].mxu0 %v1786
      %v2263 = vpop.f32.mrb[0].mxu0
      %v2264 = vadd.f32 %v1740, %v2263
      %v2265 = vpop.f32.mrb[0].mxu0
      %2266 = vmatprep.mubr.f32.mxu0 0.0
      %2267 = vmatmul.mubr.f32.gmra.mrb[0].mxu0 %v1789
      %v2268 = vpop.f32.mrb[0].mxu0
      %v2269 = vadd.f32 %v1740, %v2268
      %v2270 = vpop.f32.mrb[0].mxu0
      %2271 = vmatprep.mubr.f32.mxu0 0.0
      %2272 = vmatmul.mubr.f32.gmra.mrb[0].mxu0 %v1792
      %v2273 = vpop.f32.mrb[0].mxu0
      %v2274 = vadd.f32 %v1740, %v2273
      %v2275 = vpop.f32.mrb[0].mxu0
      %2276 = vmatprep.mubr.f32.mxu0 0.0
      %2277 = vmatmul.mubr.f32.gmra.mrb[0].mxu0 %v1795
      %v2278 = vpop.f32.mrb[0].mxu0
      %v2279 = vadd.f32 %v1740, %v2278
      %v2280 = vpop.f32.mrb[0].mxu0
      %2281 = vmatprep.mubr.f32.mxu0 0.0
      %2282 = vmatmul.mubr.f32.gmra.mrb[0].mxu0 %v1798
      %v2283 = vpop.f32.mrb[0].mxu0
      %v2284 = vadd.f32 %v1740, %v2283
      %v2285 = vpop.f32.mrb[0].mxu0
      %2286 = vmatprep.mubr.f32.mxu0 0.0
      %2287 = vmatmul.mubr.f32.gmra.mrb[0].mxu0 %v1801
      %v2288 = vpop.f32.mrb[0].mxu0
      %v2289 = vadd.f32 %v1740, %v2288
      %v2290 = vpop.f32.mrb[0].mxu0
      %2291 = vmatprep.mubr.f32.mxu0 0.0
      %2292 = vmatmul.mubr.f32.gmra.mrb[0].mxu0 %v1804
      %v2293 = vpop.f32.mrb[0].mxu0
      %v2294 = vadd.f32 %v1740, %v2293
      %v2295 = vpop.f32.mrb[0].mxu0
      %2296 = vmatprep.mubr.f32.mxu0 0.0
      %2297 = vmatmul.mubr.f32.gmra.mrb[0].mxu0 %v1807
      %v2298 = vpop.f32.mrb[0].mxu0
      %v2299 = vadd.f32 %v1740, %v2298
      %v2300 = vpop.f32.mrb[0].mxu0
      %2301 = vmatprep.mubr.f32.mxu0 0.0
      %2302 = vmatmul.mubr.f32.gmra.mrb[0].mxu0 %v1810
      %v2303 = vpop.f32.mrb[0].mxu0
      %v2304 = vadd.f32 %v1740, %v2303
      %v2305 = vpop.f32.mrb[0].mxu0
      %2306 = vmatprep.mubr.f32.mxu0 0.0
      %2307 = vmatmul.mubr.f32.gmra.mrb[0].mxu0 %v1813
      %v2308 = vpop.f32.mrb[0].mxu0
      %v2309 = vadd.f32 %v1740, %v2308
      %v2310 = vpop.f32.mrb[0].mxu0
      %2311 = vmatprep.mubr.f32.mxu0 0.0
      %2312 = vmatmul.mubr.f32.gmra.mrb[0].mxu0 %v1816
      %v2313 = vpop.f32.mrb[0].mxu0
      %v2314 = vadd.f32 %v1740, %v2313
      %v2315 = vpop.f32.mrb[0].mxu0
      %2316 = vmatprep.mubr.f32.mxu0 0.0
      %2317 = vmatmul.mubr.f32.gmra.mrb[0].mxu0 %v1819
      %v2318 = vpop.f32.mrb[0].mxu0
      %v2319 = vadd.f32 %v1740, %v2318
      %v2320 = vpop.f32.mrb[0].mxu0
      %2321 = vmatprep.mubr.f32.mxu0 0.0
      %2322 = vmatmul.mubr.f32.gmra.mrb[0].mxu0 %v1822
      %v2323 = vpop.f32.mrb[0].mxu0
      %v2324 = vadd.f32 %v1740, %v2323
      %v2325 = vpop.f32.mrb[0].mxu0
      %2326 = vmatprep.mubr.f32.mxu0 0.0
      %2327 = vmatmul.mubr.f32.gmra.mrb[0].mxu0 %v1825
      %v2328 = vpop.f32.mrb[0].mxu0
      %v2329 = vadd.f32 %v1740, %v2328
      %v2330 = vpop.f32.mrb[0].mxu0
      %2331 = vmatprep.mubr.f32.mxu0 0.0
      %2332 = vmatmul.mubr.f32.gmra.mrb[0].mxu0 %v1828
      %v2333 = vpop.f32.mrb[0].mxu0
      %v2334 = vadd.f32 %v1740, %v2333
      %v2335 = vpop.f32.mrb[0].mxu0
      %2336 = vmatprep.mubr.f32.mxu0 0.0
      %2337 = vmatmul.mubr.f32.gmra.mrb[0].mxu0 %v1831
      %v2338 = vpop.f32.mrb[0].mxu0
      %v2339 = vadd.f32 %v1740, %v2338
      %v2340 = vpop.f32.mrb[0].mxu0
      %2341 = vmatprep.mubr.f32.mxu0 0.0
      %2342 = vmatmul.mubr.f32.gmra.mrb[0].mxu0 %v1834
      %v2343 = vpop.f32.mrb[0].mxu0
      %v2344 = vadd.f32 %v1740, %v2343
      %v2345 = vpop.f32.mrb[0].mxu0
      %2346 = vmatprep.mubr.f32.mxu0 0.0
      %2347 = vmatmul.mubr.f32.gmra.mrb[0].mxu0 %v1837
      %v2348 = vpop.f32.mrb[0].mxu0
      %v2349 = vadd.f32 %v1740, %v2348
      %v2350 = vpop.f32.mrb[0].mxu0
      %2351 = vmatprep.mubr.f32.mxu0 0.0
      %2352 = vmatmul.mubr.f32.gmra.mrb[0].mxu0 %v1840
      %v2353 = vpop.f32.mrb[0].mxu0
      %v2354 = vadd.f32 %v1740, %v2353
      %v2355 = vpop.f32.mrb[0].mxu0
      %2356 = vmatprep.mubr.f32.mxu0 0.0
      %2357 = vmatmul.mubr.f32.gmra.mrb[0].mxu0 %v1843
      %v2358 = vpop.f32.mrb[0].mxu0
      %v2359 = vadd.f32 %v1740, %v2358
      %v2360 = vpop.f32.mrb[0].mxu0
      %2361 = vmatprep.mubr.f32.mxu0 0.0
      %2362 = vmatmul.mubr.f32.gmra.mrb[0].mxu0 %v1846
      %v2363 = vpop.f32.mrb[0].mxu0
      %v2364 = vadd.f32 %v1740, %v2363
      %v2365 = vpop.f32.mrb[0].mxu0
      %2366 = vmatprep.mubr.f32.mxu0 0.0
      %2367 = vmatmul.mubr.f32.gmra.mrb[0].mxu0 %v1849
      %v2368 = vpop.f32.mrb[0].mxu0
      %v2369 = vadd.f32 %v1740, %v2368
      %v2370 = vpop.f32.mrb[0].mxu0
      %2371 = vmatprep.mubr.f32.mxu0 0.0
      %2372 = vmatmul.mubr.f32.gmra.mrb[0].mxu0 %v1852
      %v2373 = vpop.f32.mrb[0].mxu0
      %v2374 = vadd.f32 %v1740, %v2373
      %v2375 = vpop.f32.mrb[0].mxu0
      %2376 = vmatprep.mubr.f32.mxu0 0.0
      %2377 = vmatmul.mubr.f32.gmra.mrb[0].mxu0 %v1855
      %v2378 = vpop.f32.mrb[0].mxu0
      %v2379 = vadd.f32 %v1740, %v2378
      %v2380 = vpop.f32.mrb[0].mxu0
      %2381 = vmatprep.mubr.f32.mxu0 0.0
      %2382 = vmatmul.mubr.f32.gmra.mrb[0].mxu0 %v1858
      %v2383 = vpop.f32.mrb[0].mxu0
      %v2384 = vadd.f32 %v1740, %v2383
      %v2385 = vpop.f32.mrb[0].mxu0
      %2386 = vmatprep.mubr.f32.mxu0 0.0
      %2387 = vmatmul.mubr.f32.gmra.mrb[0].mxu0 %v1861
      %v2388 = vpop.f32.mrb[0].mxu0
      %v2389 = vadd.f32 %v1740, %v2388
      %v2390 = vpop.f32.mrb[0].mxu0
      %2391 = vmatprep.mubr.f32.mxu0 0.0
      %2392 = vmatmul.mubr.f32.gmra.mrb[0].mxu0 %v1864
      %v2393 = vpop.f32.mrb[0].mxu0
      %v2394 = vadd.f32 %v1740, %v2393
      %v2395 = vpop.f32.mrb[0].mxu0
      %2396 = vmatprep.mubr.f32.mxu0 0.0
      %2397 = vmatmul.mubr.f32.gmra.mrb[0].mxu0 %v1867
      %v2398 = vpop.f32.mrb[0].mxu0
      %v2399 = vadd.f32 %v1740, %v2398
      %v2400 = vpop.f32.mrb[0].mxu0
      %2401 = vmatprep.mubr.f32.mxu0 0.0
      %2402 = vmatmul.mubr.f32.gmra.mrb[0].mxu0 %v1870
      %v2403 = vpop.f32.mrb[0].mxu0
      %v2404 = vadd.f32 %v1740, %v2403
      %v2405 = vpop.f32.mrb[0].mxu0
      %2406 = vmatprep.mubr.f32.mxu0 0.0
      %2407 = vmatmul.mubr.f32.gmra.mrb[0].mxu0 %v1873
      %v2408 = vpop.f32.mrb[0].mxu0
      %v2409 = vadd.f32 %v1740, %v2408
      %v2410 = vpop.f32.mrb[0].mxu0
      %2411 = vmatprep.mubr.f32.mxu0 0.0
      %2412 = vmatmul.mubr.f32.gmra.mrb[0].mxu0 %v1876
      %v2413 = vpop.f32.mrb[0].mxu0
      %v2414 = vadd.f32 %v1740, %v2413
      %v2415 = vpop.f32.mrb[0].mxu0
      %2416 = vmatprep.mubr.f32.mxu0 0.0
      %2417 = vmatmul.mubr.f32.gmra.mrb[0].mxu0 %v1879
      %v2418 = vpop.f32.mrb[0].mxu0
      %v2419 = vadd.f32 %v1740, %v2418
      %v2420 = vpop.f32.mrb[0].mxu0
      %2421 = vmatprep.mubr.f32.mxu0 0.0
      %2422 = vmatmul.mubr.f32.gmra.mrb[0].mxu0 %v1882
      %v2423 = vpop.f32.mrb[0].mxu0
      %v2424 = vadd.f32 %v1740, %v2423
      %v2425 = vpop.f32.mrb[0].mxu0
      %2426 = vmatprep.mubr.f32.mxu0 0.0
      %2427 = vmatmul.mubr.f32.gmra.mrb[0].mxu0 %v1885
      %v2428 = vpop.f32.mrb[0].mxu0
      %v2429 = vadd.f32 %v1740, %v2428
      %v2430 = vpop.f32.mrb[0].mxu0
      %2431 = vmatprep.mubr.f32.mxu0 0.0
      %2432 = vmatmul.mubr.f32.gmra.mrb[0].mxu0 %v1888
      %v2433 = vpop.f32.mrb[0].mxu0
      %v2434 = vadd.f32 %v1740, %v2433
      %v2435 = vpop.f32.mrb[0].mxu0
      %2436 = vmatprep.mubr.f32.mxu0 0.0
      %2437 = vmatmul.mubr.f32.gmra.mrb[0].mxu0 %v1891
      %v2438 = vpop.f32.mrb[0].mxu0
      %v2439 = vadd.f32 %v1740, %v2438
      %v2440 = vpop.f32.mrb[0].mxu0
      %2441 = vmatprep.mubr.f32.mxu0 0.0
      %2442 = vmatmul.mubr.f32.gmra.mrb[0].mxu0 %v1894
      %v2443 = vpop.f32.mrb[0].mxu0
      %v2444 = vadd.f32 %v1740, %v2443
      %v2445 = vpop.f32.mrb[0].mxu0
      %2446 = vmatprep.mubr.f32.mxu0 0.0
      %2447 = vmatmul.mubr.f32.gmra.mrb[0].mxu0 %v1897
      %v2448 = vpop.f32.mrb[0].mxu0
      %v2449 = vadd.f32 %v1740, %v2448
      %v2450 = vpop.f32.mrb[0].mxu0
      %2451 = vmatprep.mubr.f32.mxu0 0.0
      %2452 = vmatmul.mubr.f32.gmra.mrb[0].mxu0 %v1900
      %v2453 = vpop.f32.mrb[0].mxu0
      %v2454 = vadd.f32 %v1740, %v2453
      %v2455 = vpop.f32.mrb[0].mxu0
      %2456 = vmatprep.mubr.f32.mxu0 0.0
      %2457 = vmatmul.mubr.f32.gmra.mrb[0].mxu0 %v1903
      %v2458 = vpop.f32.mrb[0].mxu0
      %v2459 = vadd.f32 %v1740, %v2458
      %v2460 = vpop.f32.mrb[0].mxu0
      %2461 = vmatprep.mubr.f32.mxu0 0.0
      %2462 = vmatmul.mubr.f32.gmra.mrb[0].mxu0 %v1906
      %v2463 = vpop.f32.mrb[0].mxu0
      %v2464 = vadd.f32 %v1740, %v2463
      %v2465 = vpop.f32.mrb[0].mxu0
      %2466 = vmatprep.mubr.f32.mxu0 0.0
      %2467 = vmatmul.mubr.f32.gmra.mrb[0].mxu0 %v1909
      %v2468 = vpop.f32.mrb[0].mxu0
      %v2469 = vadd.f32 %v1740, %v2468
      %v2470 = vpop.f32.mrb[0].mxu0
      %2471 = vmatprep.mubr.f32.mxu0 0.0
      %2472 = vmatmul.mubr.f32.gmra.mrb[0].mxu0 %v1912
      %v2473 = vpop.f32.mrb[0].mxu0
      %v2474 = vadd.f32 %v1740, %v2473
      %v2475 = vpop.f32.mrb[0].mxu0
      %2476 = vmatprep.mubr.f32.mxu0 0.0
      %2477 = vmatmul.mubr.f32.gmra.mrb[0].mxu0 %v1915
      %v2478 = vpop.f32.mrb[0].mxu0
      %v2479 = vadd.f32 %v1740, %v2478
      %v2480 = vpop.f32.mrb[0].mxu0
      %2481 = vmatprep.mubr.f32.mxu0 0.0
      %2482 = vmatmul.mubr.f32.gmra.mrb[0].mxu0 %v1918
      %v2483 = vpop.f32.mrb[0].mxu0
      %v2484 = vadd.f32 %v1740, %v2483
      %v2485 = vpop.f32.mrb[0].mxu0
      %2486 = vmatprep.mubr.f32.mxu0 0.0
      %2487 = vmatmul.mubr.f32.gmra.mrb[0].mxu0 %v1921
      %v2488 = vpop.f32.mrb[0].mxu0
      %v2489 = vadd.f32 %v1740, %v2488
      %v2490 = vpop.f32.mrb[0].mxu0
      %2491 = vmatprep.mubr.f32.mxu0 0.0
      %2492 = vmatmul.mubr.f32.gmra.mrb[0].mxu0 %v1924
      %v2493 = vpop.f32.mrb[0].mxu0
      %v2494 = vadd.f32 %v1740, %v2493
      %v2495 = vpop.f32.mrb[0].mxu0
      %2496 = vmatprep.mubr.f32.mxu0 0.0
      %2497 = vmatmul.mubr.f32.gmra.mrb[0].mxu0 %v1927
      %v2498 = vpop.f32.mrb[0].mxu0
      %v2499 = vadd.f32 %v1740, %v2498
      %v2500 = vpop.f32.mrb[0].mxu0
      %2501 = vmatprep.mubr.f32.mxu0 0.0
      %2502 = vmatmul.mubr.f32.gmra.mrb[0].mxu0 %v1930
      %v2503 = vpop.f32.mrb[0].mxu0
      %v2504 = vadd.f32 %v1740, %v2503
      %v2505 = vpop.f32.mrb[0].mxu0
      %2506 = vmatprep.mubr.f32.mxu0 0.0
      %2507 = vmatmul.mubr.f32.gmra.mrb[0].mxu0 %v1933
      %v2508 = vpop.f32.mrb[0].mxu0
      %v2509 = vadd.f32 %v1740, %v2508
      %v2510 = vpop.f32.mrb[0].mxu0
      %2511 = vmatprep.mubr.f32.mxu0 0.0
      %2512 = vmatmul.mubr.f32.gmra.mrb[0].mxu0 %v1936
      %v2513 = vpop.f32.mrb[0].mxu0
      %v2514 = vadd.f32 %v1740, %v2513
      %v2515 = vpop.f32.mrb[0].mxu0
      %2516 = vmatprep.mubr.f32.mxu0 0.0
      %2517 = vmatmul.mubr.f32.gmra.mrb[0].mxu0 %v1939
      %v2518 = vpop.f32.mrb[0].mxu0
      %v2519 = vadd.f32 %v1740, %v2518
      %v2520 = vpop.f32.mrb[0].mxu0
      %2521 = vmatprep.mubr.f32.mxu0 0.0
      %2522 = vmatmul.mubr.f32.gmra.mrb[0].mxu0 %v1942
      %v2523 = vpop.f32.mrb[0].mxu0
      %v2524 = vadd.f32 %v1740, %v2523
      %v2525 = vpop.f32.mrb[0].mxu0
      %2526 = vmatprep.mubr.f32.mxu0 0.0
      %2527 = vmatmul.mubr.f32.gmra.mrb[0].mxu0 %v1945
      %v2528 = vpop.f32.mrb[0].mxu0
      %v2529 = vadd.f32 %v1740, %v2528
      %v2530 = vpop.f32.mrb[0].mxu0
      %2531 = vmatprep.mubr.f32.mxu0 0.0
      %2532 = vmatmul.mubr.f32.gmra.mrb[0].mxu0 %v1948
      %v2533 = vpop.f32.mrb[0].mxu0
      %v2534 = vadd.f32 %v1740, %v2533
      %v2535 = vpop.f32.mrb[0].mxu0
      %2536 = vmatprep.mubr.f32.mxu0 0.0
      %2537 = vmatmul.mubr.f32.gmra.mrb[0].mxu0 %v1951
      %v2538 = vpop.f32.mrb[0].mxu0
      %v2539 = vadd.f32 %v1740, %v2538
      %v2540 = vpop.f32.mrb[0].mxu0
      %2541 = vmatprep.mubr.f32.mxu0 0.0
      %2542 = vmatmul.mubr.f32.gmra.mrb[0].mxu0 %v1954
      %v2543 = vpop.f32.mrb[0].mxu0
      %v2544 = vadd.f32 %v1740, %v2543
      %v2545 = vpop.f32.mrb[0].mxu0
      %2546 = vmatprep.mubr.f32.mxu0 0.0
      %2547 = vmatmul.mubr.f32.gmra.mrb[0].mxu0 %v1957
      %v2548 = vpop.f32.mrb[0].mxu0
      %v2549 = vadd.f32 %v1740, %v2548
      %v2550 = vpop.f32.mrb[0].mxu0
      %2551 = vmatprep.mubr.f32.mxu0 0.0
      %2552 = vmatmul.mubr.f32.gmra.mrb[0].mxu0 %v1960
      %v2553 = vpop.f32.mrb[0].mxu0
      %v2554 = vadd.f32 %v1740, %v2553
      %v2555 = vpop.f32.mrb[0].mxu0
      %2556 = vmatprep.mubr.f32.mxu0 0.0
      %2557 = vmatmul.mubr.f32.gmra.mrb[0].mxu0 %v1963
      %v2558 = vpop.f32.mrb[0].mxu0
      %v2559 = vadd.f32 %v1740, %v2558
      %v2560 = vpop.f32.mrb[0].mxu0
      %2561 = vmatprep.mubr.f32.mxu0 0.0
      %2562 = vmatmul.mubr.f32.gmra.mrb[0].mxu0 %v1966
      %v2563 = vpop.f32.mrb[0].mxu0
      %v2564 = vadd.f32 %v1740, %v2563
      %v2565 = vpop.f32.mrb[0].mxu0
      %2566 = vmatprep.mubr.f32.mxu0 0.0
      %2567 = vmatmul.mubr.f32.gmra.mrb[0].mxu0 %v1969
      %v2568 = vpop.f32.mrb[0].mxu0
      %v2569 = vadd.f32 %v1740, %v2568
      %v2570 = vpop.f32.mrb[0].mxu0
      %2571 = vmatprep.mubr.f32.mxu0 0.0
      %2572 = vmatmul.mubr.f32.gmra.mrb[0].mxu0 %v1972
      %v2573 = vpop.f32.mrb[0].mxu0
      %v2574 = vadd.f32 %v1740, %v2573
      %v2575 = vpop.f32.mrb[0].mxu0
      %2576 = vmatprep.mubr.f32.mxu0 0.0
      %2577 = vmatmul.mubr.f32.gmra.mrb[0].mxu0 %v1975
      %v2578 = vpop.f32.mrb[0].mxu0
      %v2579 = vadd.f32 %v1740, %v2578
      %v2580 = vpop.f32.mrb[0].mxu0
      %2581 = vmatprep.mubr.f32.mxu0 0.0
      %2582 = vmatmul.mubr.f32.gmra.mrb[0].mxu0 %v1978
      %v2583 = vpop.f32.mrb[0].mxu0
      %v2584 = vadd.f32 %v1740, %v2583
      %v2585 = vpop.f32.mrb[0].mxu0
      %2586 = vmatprep.mubr.f32.mxu0 0.0
      %2587 = vmatmul.mubr.f32.gmra.mrb[0].mxu0 %v1981
      %v2588 = vpop.f32.mrb[0].mxu0
      %v2589 = vadd.f32 %v1740, %v2588
      %v2590 = vpop.f32.mrb[0].mxu0
      %2591 = vmatprep.mubr.f32.mxu0 0.0
      %2592 = vmatmul.mubr.f32.gmra.mrb[0].mxu0 %v1984
      %v2593 = vpop.f32.mrb[0].mxu0
      %v2594 = vadd.f32 %v1740, %v2593
      %v2595 = vpop.f32.mrb[0].mxu0
      %2596 = vmatprep.mubr.f32.mxu0 0.0
      %2597 = vmatmul.mubr.f32.gmra.mrb[0].mxu0 %v1987
      %v2598 = vpop.f32.mrb[0].mxu0
      %v2599 = vadd.f32 %v1740, %v2598
      %v2600 = vpop.f32.mrb[0].mxu0
      %2601 = vmatprep.mubr.f32.mxu0 0.0
      %2602 = vmatmul.mubr.f32.gmra.mrb[0].mxu0 %v1990
      %v2603 = vpop.f32.mrb[0].mxu0
      %v2604 = vadd.f32 %v1740, %v2603
      %v2605 = vpop.f32.mrb[0].mxu0
      %2606 = vmatprep.mubr.f32.mxu0 0.0
      %2607 = vmatmul.mubr.f32.gmra.mrb[0].mxu0 %v1993
      %v2608 = vpop.f32.mrb[0].mxu0
      %v2609 = vadd.f32 %v1740, %v2608
      %v2610 = vpop.f32.mrb[0].mxu0
      %2611 = vmatprep.mubr.f32.mxu0 0.0
      %2612 = vmatmul.mubr.f32.gmra.mrb[0].mxu0 %v1996
      %v2613 = vpop.f32.mrb[0].mxu0
      %v2614 = vadd.f32 %v1740, %v2613
      %v2615 = vpop.f32.mrb[0].mxu0
      %2616 = vmatprep.mubr.f32.mxu0 0.0
      %2617 = vmatmul.mubr.f32.gmra.mrb[0].mxu0 %v1999
      %v2618 = vpop.f32.mrb[0].mxu0
      %v2619 = vadd.f32 %v1740, %v2618
      %v2620 = vpop.f32.mrb[0].mxu0
      %2621 = vmatprep.mubr.f32.mxu0 0.0
      %2622 = vmatmul.mubr.f32.gmra.mrb[0].mxu0 %v2002
      %v2623 = vpop.f32.mrb[0].mxu0
      %v2624 = vadd.f32 %v1740, %v2623
      %v2625 = vpop.f32.mrb[0].mxu0
      %2626 = vmatprep.mubr.f32.mxu0 0.0
      %2627 = vmatmul.mubr.f32.gmra.mrb[0].mxu0 %v2005
      %v2628 = vpop.f32.mrb[0].mxu0
      %v2629 = vadd.f32 %v1740, %v2628
      %v2630 = vpop.f32.mrb[0].mxu0
      %2631 = vmatprep.mubr.f32.mxu0 0.0
      %2632 = vmatmul.mubr.f32.gmra.mrb[0].mxu0 %v2008
      %v2633 = vpop.f32.mrb[0].mxu0
      %v2634 = vadd.f32 %v1740, %v2633
      %v2635 = vpop.f32.mrb[0].mxu0
      %2636 = vmatprep.mubr.f32.mxu0 0.0
      %2637 = vmatmul.mubr.f32.gmra.mrb[0].mxu0 %v2011
      %v2638 = vpop.f32.mrb[0].mxu0
      %v2639 = vadd.f32 %v1740, %v2638
      %v2640 = vpop.f32.mrb[0].mxu0
      %2641 = vmatprep.mubr.f32.mxu0 0.0
      %2642 = vmatmul.mubr.f32.gmra.mrb[0].mxu0 %v2014
      %v2643 = vpop.f32.mrb[0].mxu0
      %v2644 = vadd.f32 %v1740, %v2643
      %v2645 = vpop.f32.mrb[0].mxu0
      %2646 = vmatprep.mubr.f32.mxu0 0.0
      %2647 = vmatmul.mubr.f32.gmra.mrb[0].mxu0 %v2017
      %v2648 = vpop.f32.mrb[0].mxu0
      %v2649 = vadd.f32 %v1740, %v2648
      %v2650 = vpop.f32.mrb[0].mxu0
      %2651 = vmatprep.mubr.f32.mxu0 0.0
      %2652 = vmatmul.mubr.f32.gmra.mrb[0].mxu0 %v2020
      %v2653 = vpop.f32.mrb[0].mxu0
      %v2654 = vadd.f32 %v1740, %v2653
      %v2655 = vpop.f32.mrb[0].mxu0
      %2656 = vmatprep.mubr.f32.mxu0 0.0
      %2657 = vmatmul.mubr.f32.gmra.mrb[0].mxu0 %v2023
      %v2658 = vpop.f32.mrb[0].mxu0
      %v2659 = vadd.f32 %v1740, %v2658
      %v2660 = vpop.f32.mrb[0].mxu0
      %2661 = vmatprep.mubr.f32.mxu0 0.0
      %2662 = vmatmul.mubr.f32.gmra.mrb[0].mxu0 %v2026
      %v2663 = vpop.f32.mrb[0].mxu0
      %v2664 = vadd.f32 %v1740, %v2663
      %v2665 = vpop.f32.mrb[0].mxu0
      %2666 = vmatprep.mubr.f32.mxu0 0.0
      %2667 = vmatmul.mubr.f32.gmra.mrb[0].mxu0 %v2029
      %v2668 = vpop.f32.mrb[0].mxu0
      %v2669 = vadd.f32 %v1740, %v2668
      %v2670 = vpop.f32.mrb[0].mxu0
      %2671 = vmatprep.mubr.f32.mxu0 0.0
      %2672 = vmatmul.mubr.f32.gmra.mrb[0].mxu0 %v2032
      %v2673 = vpop.f32.mrb[0].mxu0
      %v2674 = vadd.f32 %v1740, %v2673
      %v2675 = vpop.f32.mrb[0].mxu0
      %2676 = vmatprep.mubr.f32.mxu0 0.0
      %2677 = vmatmul.mubr.f32.gmra.mrb[0].mxu0 %v2035
      %v2678 = vpop.f32.mrb[0].mxu0
      %v2679 = vadd.f32 %v1740, %v2678
      %v2680 = vpop.f32.mrb[0].mxu0
      %2681 = vmatprep.mubr.f32.mxu0 0.0
      %2682 = vmatmul.mubr.f32.gmra.mrb[0].mxu0 %v2038
      %v2683 = vpop.f32.mrb[0].mxu0
      %v2684 = vadd.f32 %v1740, %v2683
      %v2685 = vpop.f32.mrb[0].mxu0
      %2686 = vmatprep.mubr.f32.mxu0 0.0
      %2687 = vmatmul.mubr.f32.gmra.mrb[0].mxu0 %v2041
      %v2688 = vpop.f32.mrb[0].mxu0
      %v2689 = vadd.f32 %v1740, %v2688
      %v2690 = vpop.f32.mrb[0].mxu0
      %2691 = vmatprep.mubr.f32.mxu0 0.0
      %2692 = vmatmul.mubr.f32.gmra.mrb[0].mxu0 %v2044
      %v2693 = vpop.f32.mrb[0].mxu0
      %v2694 = vadd.f32 %v1740, %v2693
      %v2695 = vpop.f32.mrb[0].mxu0
      %2696 = vmatprep.mubr.f32.mxu0 0.0
      %2697 = vmatmul.mubr.f32.gmra.mrb[0].mxu0 %v2047
      %v2698 = vpop.f32.mrb[0].mxu0
      %v2699 = vadd.f32 %v1740, %v2698
      %v2700 = vpop.f32.mrb[0].mxu0
      %2701 = vmatprep.mubr.f32.mxu0 0.0
      %2702 = vmatmul.mubr.f32.gmra.mrb[0].mxu0 %v2050
      %v2703 = vpop.f32.mrb[0].mxu0
      %v2704 = vadd.f32 %v1740, %v2703
      %v2705 = vpop.f32.mrb[0].mxu0
      %2706 = vmatprep.mubr.f32.mxu0 0.0
      %2707 = vmatmul.mubr.f32.gmra.mrb[0].mxu0 %v2053
      %v2708 = vpop.f32.mrb[0].mxu0
      %v2709 = vadd.f32 %v1740, %v2708
      %v2710 = vpop.f32.mrb[0].mxu0
      %2711 = vmatprep.mubr.f32.mxu0 0.0
      %2712 = vmatmul.mubr.f32.gmra.mrb[0].mxu0 %v2056
      %v2713 = vpop.f32.mrb[0].mxu0
      %v2714 = vadd.f32 %v1740, %v2713
      %v2715 = vpop.f32.mrb[0].mxu0
      %2716 = vmatprep.mubr.f32.mxu0 0.0
      %2717 = vmatmul.mubr.f32.gmra.mrb[0].mxu0 %v2059
      %v2718 = vpop.f32.mrb[0].mxu0
      %v2719 = vadd.f32 %v1740, %v2718
      %v2720 = vpop.f32.mrb[0].mxu0
      %2721 = vmatprep.mubr.f32.mxu0 0.0
      %2722 = vmatmul.mubr.f32.gmra.mrb[0].mxu0 %v2062
      %v2723 = vpop.f32.mrb[0].mxu0
      %v2724 = vadd.f32 %v1740, %v2723
      %v2725 = vpop.f32.mrb[0].mxu0
      %2726 = vmatprep.mubr.f32.mxu0 0.0
      %2727 = vmatmul.mubr.f32.gmra.mrb[0].mxu0 %v2065
      %v2728 = vpop.f32.mrb[0].mxu0
      %v2729 = vadd.f32 %v1740, %v2728
      %v2730 = vpop.f32.mrb[0].mxu0
      %2731 = vmatprep.mubr.f32.mxu0 0.0
      %2732 = vmatmul.mubr.f32.gmra.mrb[0].mxu0 %v2068
      %v2733 = vpop.f32.mrb[0].mxu0
      %v2734 = vadd.f32 %v1740, %v2733
      %v2735 = vpop.f32.mrb[0].mxu0
      %2736 = vmatprep.mubr.f32.mxu0 0.0
      %2737 = vmatmul.mubr.f32.gmra.mrb[0].mxu0 %v2071
      %v2738 = vpop.f32.mrb[0].mxu0
      %v2739 = vadd.f32 %v1740, %v2738
      %v2740 = vpop.f32.mrb[0].mxu0
      %2741 = vmatprep.mubr.f32.mxu0 0.0
      %2742 = vmatmul.mubr.f32.gmra.mrb[0].mxu0 %v2074
      %v2743 = vpop.f32.mrb[0].mxu0
      %v2744 = vadd.f32 %v1740, %v2743
      %v2745 = vpop.f32.mrb[0].mxu0
      %2746 = vmatprep.mubr.f32.mxu0 0.0
      %2747 = vmatmul.mubr.f32.gmra.mrb[0].mxu0 %v2077
      %v2748 = vpop.f32.mrb[0].mxu0
      %v2749 = vadd.f32 %v1740, %v2748
      %v2750 = vpop.f32.mrb[0].mxu0
      %2751 = vmatprep.mubr.f32.mxu0 0.0
      %2752 = vmatmul.mubr.f32.gmra.mrb[0].mxu0 %v2080
      %v2753 = vpop.f32.mrb[0].mxu0
      %v2754 = vadd.f32 %v1740, %v2753
      %v2755 = vpop.f32.mrb[0].mxu0
      %2756 = vmatprep.mubr.f32.mxu0 0.0
      %2757 = vmatmul.mubr.f32.gmra.mrb[0].mxu0 %v2083
      %v2758 = vpop.f32.mrb[0].mxu0
      %v2759 = vadd.f32 %v1740, %v2758
      %v2760 = vpop.f32.mrb[0].mxu0
      %2761 = vmatprep.mubr.f32.mxu0 0.0
      %2762 = vmatmul.mubr.f32.gmra.mrb[0].mxu0 %v2086
      %v2763 = vpop.f32.mrb[0].mxu0
      %v2764 = vadd.f32 %v1740, %v2763
      %v2765 = vpop.f32.mrb[0].mxu0
      %2766 = vmatprep.mubr.f32.mxu0 0.0
      %2767 = vmatmul.mubr.f32.gmra.mrb[0].mxu0 %v2089
      %v2768 = vpop.f32.mrb[0].mxu0
      %v2769 = vadd.f32 %v1740, %v2768
      %v2770 = vpop.f32.mrb[0].mxu0
      %2771 = vmatprep.mubr.f32.mxu0 0.0
      %2772 = vmatmul.mubr.f32.gmra.mrb[0].mxu0 %v2092
      %v2773 = vpop.f32.mrb[0].mxu0
      %v2774 = vadd.f32 %v1740, %v2773
      %v2775 = vpop.f32.mrb[0].mxu0
      %2776 = vmatprep.mubr.f32.mxu0 0.0
      %2777 = vmatmul.mubr.f32.gmra.mrb[0].mxu0 %v2095
      %v2778 = vpop.f32.mrb[0].mxu0
      %v2779 = vadd.f32 %v1740, %v2778
      %v2780 = vpop.f32.mrb[0].mxu0
      %2781 = vmatprep.mubr.f32.mxu0 0.0
      %2782 = vmatmul.mubr.f32.gmra.mrb[0].mxu0 %v2098
      %v2783 = vpop.f32.mrb[0].mxu0
      %v2784 = vadd.f32 %v1740, %v2783
      %v2785 = vpop.f32.mrb[0].mxu0
      %2786 = vmatprep.mubr.f32.mxu0 0.0
      %2787 = vmatmul.mubr.f32.gmra.mrb[0].mxu0 %v2101
      %v2788 = vpop.f32.mrb[0].mxu0
      %v2789 = vadd.f32 %v1740, %v2788
      %v2790 = vpop.f32.mrb[0].mxu0
      %2791 = vmatprep.mubr.f32.mxu0 0.0
      %2792 = vmatmul.mubr.f32.gmra.mrb[0].mxu0 %v2104
      %v2793 = vpop.f32.mrb[0].mxu0
      %v2794 = vadd.f32 %v1740, %v2793
      %v2795 = vpop.f32.mrb[0].mxu0
      %2796 = vmatprep.mubr.f32.mxu0 0.0
      %2797 = vmatmul.mubr.f32.gmra.mrb[0].mxu0 %v2107
      %v2798 = vpop.f32.mrb[0].mxu0
      %v2799 = vadd.f32 %v1740, %v2798
      %v2800 = vpop.f32.mrb[0].mxu0
      %2801 = vmatprep.mubr.f32.mxu0 0.0
      %2802 = vmatmul.mubr.f32.gmra.mrb[0].mxu0 %v2110
      %v2803 = vpop.f32.mrb[0].mxu0
      %v2804 = vadd.f32 %v1740, %v2803
      %v2805 = vpop.f32.mrb[0].mxu0
      %2806 = vmatprep.mubr.f32.mxu0 0.0
      %2807 = vmatmul.mubr.f32.gmra.mrb[0].mxu0 %v2113
      %v2808 = vpop.f32.mrb[0].mxu0
      %v2809 = vadd.f32 %v1740, %v2808
      %v2810 = vpop.f32.mrb[0].mxu0
      %2811 = vmatprep.mubr.f32.mxu0 0.0
      %2812 = vmatmul.mubr.f32.gmra.mrb[0].mxu0 %v2116
      %v2813 = vpop.f32.mrb[0].mxu0
      %v2814 = vadd.f32 %v1740, %v2813
      %v2815 = vpop.f32.mrb[0].mxu0
      %2816 = vmatprep.mubr.f32.mxu0 0.0
      %2817 = vmatmul.mubr.f32.gmra.mrb[0].mxu0 %v2119
      %v2818 = vpop.f32.mrb[0].mxu0
      %v2819 = vadd.f32 %v1740, %v2818
      %v2820 = vpop.f32.mrb[0].mxu0
      %2821 = vmatprep.mubr.f32.mxu0 0.0
      %2822 = vmatmul.mubr.f32.gmra.mrb[0].mxu0 %v2122
      %v2823 = vpop.f32.mrb[0].mxu0
      %v2824 = vadd.f32 %v1740, %v2823
      %v2825 = vpop.f32.mrb[0].mxu0
      %2826 = vmatprep.mubr.f32.mxu0 0.0
      %2827 = vmatmul.mubr.f32.gmra.mrb[0].mxu0 %v2125
      %v2828 = vpop.f32.mrb[0].mxu0
      %v2829 = vadd.f32 %v1740, %v2828
      %v2830 = vpop.f32.mrb[0].mxu0
      %2831 = vdwg.mxu0
      %vm2832 = vcmask 31744
      %2833 = vst.msk [vmem:[%s229] sm:$0xff] %vm2832, %v2194
      %2834 = vst.msk [vmem:[%s229 + $0x8] sm:$0xff] %vm2832, %v2199
      %2835 = vst.msk [vmem:[%s229 + $0x10] sm:$0xff] %vm2832, %v2204
      %2836 = vst.msk [vmem:[%s229 + $0x18] sm:$0xff] %vm2832, %v2209
      %2837 = vst.msk [vmem:[%s229 + $0x20] sm:$0xff] %vm2832, %v2214
      %2838 = vst.msk [vmem:[%s229 + $0x28] sm:$0xff] %vm2832, %v2219
      %2839 = vst.msk [vmem:[%s229 + $0x30] sm:$0xff] %vm2832, %v2224
      %2840 = vst.msk [vmem:[%s229 + $0x38] sm:$0xff] %vm2832, %v2229
      %2841 = vst.msk [vmem:[%s229 + $0x40] sm:$0xff] %vm2832, %v2234
      %2842 = vst.msk [vmem:[%s229 + $0x48] sm:$0xff] %vm2832, %v2239
      %2843 = vst.msk [vmem:[%s229 + $0x50] sm:$0xff] %vm2832, %v2244
      %2844 = vst.msk [vmem:[%s229 + $0x58] sm:$0xff] %vm2832, %v2249
      %2845 = vst.msk [vmem:[%s229 + $0x60] sm:$0xff] %vm2832, %v2254
      %2846 = vst.msk [vmem:[%s229 + $0x68] sm:$0xff] %vm2832, %v2259
      %2847 = vst.msk [vmem:[%s229 + $0x70] sm:$0xff] %vm2832, %v2264
      %2848 = vst.msk [vmem:[%s229 + $0x78] sm:$0xff] %vm2832, %v2269
      %2849 = vst.msk [vmem:[%s229 + $0x80] sm:$0xff] %vm2832, %v2274
      %2850 = vst.msk [vmem:[%s229 + $0x88] sm:$0xff] %vm2832, %v2279
      %2851 = vst.msk [vmem:[%s229 + $0x90] sm:$0xff] %vm2832, %v2284
      %2852 = vst.msk [vmem:[%s229 + $0x98] sm:$0xff] %vm2832, %v2289
      %2853 = vst.msk [vmem:[%s229 + $0xa0] sm:$0xff] %vm2832, %v2294
      %2854 = vst.msk [vmem:[%s229 + $0xa8] sm:$0xff] %vm2832, %v2299
      %2855 = vst.msk [vmem:[%s229 + $0xb0] sm:$0xff] %vm2832, %v2304
      %2856 = vst.msk [vmem:[%s229 + $0xb8] sm:$0xff] %vm2832, %v2309
      %2857 = vst.msk [vmem:[%s229 + $0xc0] sm:$0xff] %vm2832, %v2314
      %2858 = vst.msk [vmem:[%s229 + $0xc8] sm:$0xff] %vm2832, %v2319
      %2859 = vst.msk [vmem:[%s229 + $0xd0] sm:$0xff] %vm2832, %v2324
      %2860 = vst.msk [vmem:[%s229 + $0xd8] sm:$0xff] %vm2832, %v2329
      %2861 = vst.msk [vmem:[%s229 + $0xe0] sm:$0xff] %vm2832, %v2334
      %2862 = vst.msk [vmem:[%s229 + $0xe8] sm:$0xff] %vm2832, %v2339
      %2863 = vst.msk [vmem:[%s229 + $0xf0] sm:$0xff] %vm2832, %v2344
      %2864 = vst.msk [vmem:[%s229 + $0xf8] sm:$0xff] %vm2832, %v2349
      %2865 = vst.msk [vmem:[%s229 + $0x100] sm:$0xff] %vm2832, %v2354
      %2866 = vst.msk [vmem:[%s229 + $0x108] sm:$0xff] %vm2832, %v2359
      %2867 = vst.msk [vmem:[%s229 + $0x110] sm:$0xff] %vm2832, %v2364
      %2868 = vst.msk [vmem:[%s229 + $0x118] sm:$0xff] %vm2832, %v2369
      %2869 = vst.msk [vmem:[%s229 + $0x120] sm:$0xff] %vm2832, %v2374
      %2870 = vst.msk [vmem:[%s229 + $0x128] sm:$0xff] %vm2832, %v2379
      %2871 = vst.msk [vmem:[%s229 + $0x130] sm:$0xff] %vm2832, %v2384
      %2872 = vst.msk [vmem:[%s229 + $0x138] sm:$0xff] %vm2832, %v2389
      %2873 = vst.msk [vmem:[%s229 + $0x140] sm:$0xff] %vm2832, %v2394
      %2874 = vst.msk [vmem:[%s229 + $0x148] sm:$0xff] %vm2832, %v2399
      %2875 = vst.msk [vmem:[%s229 + $0x150] sm:$0xff] %vm2832, %v2404
      %2876 = vst.msk [vmem:[%s229 + $0x158] sm:$0xff] %vm2832, %v2409
      %2877 = vst.msk [vmem:[%s229 + $0x160] sm:$0xff] %vm2832, %v2414
      %2878 = vst.msk [vmem:[%s229 + $0x168] sm:$0xff] %vm2832, %v2419
      %2879 = vst.msk [vmem:[%s229 + $0x170] sm:$0xff] %vm2832, %v2424
      %2880 = vst.msk [vmem:[%s229 + $0x178] sm:$0xff] %vm2832, %v2429
      %2881 = vst.msk [vmem:[%s229 + $0x180] sm:$0xff] %vm2832, %v2434
      %2882 = vst.msk [vmem:[%s229 + $0x188] sm:$0xff] %vm2832, %v2439
      %2883 = vst.msk [vmem:[%s229 + $0x190] sm:$0xff] %vm2832, %v2444
      %2884 = vst.msk [vmem:[%s229 + $0x198] sm:$0xff] %vm2832, %v2449
      %2885 = vst.msk [vmem:[%s229 + $0x1a0] sm:$0xff] %vm2832, %v2454
      %2886 = vst.msk [vmem:[%s229 + $0x1a8] sm:$0xff] %vm2832, %v2459
      %2887 = vst.msk [vmem:[%s229 + $0x1b0] sm:$0xff] %vm2832, %v2464
      %2888 = vst.msk [vmem:[%s229 + $0x1b8] sm:$0xff] %vm2832, %v2469
      %2889 = vst.msk [vmem:[%s229 + $0x1c0] sm:$0xff] %vm2832, %v2474
      %2890 = vst.msk [vmem:[%s229 + $0x1c8] sm:$0xff] %vm2832, %v2479
      %2891 = vst.msk [vmem:[%s229 + $0x1d0] sm:$0xff] %vm2832, %v2484
      %2892 = vst.msk [vmem:[%s229 + $0x1d8] sm:$0xff] %vm2832, %v2489
      %2893 = vst.msk [vmem:[%s229 + $0x1e0] sm:$0xff] %vm2832, %v2494
      %2894 = vst.msk [vmem:[%s229 + $0x1e8] sm:$0xff] %vm2832, %v2499
      %2895 = vst.msk [vmem:[%s229 + $0x1f0] sm:$0xff] %vm2832, %v2504
      %2896 = vst.msk [vmem:[%s229 + $0x1f8] sm:$0xff] %vm2832, %v2509
      %2897 = vst.msk [vmem:[%s229 + $0x200] sm:$0xff] %vm2832, %v2514
      %2898 = vst.msk [vmem:[%s229 + $0x208] sm:$0xff] %vm2832, %v2519
      %2899 = vst.msk [vmem:[%s229 + $0x210] sm:$0xff] %vm2832, %v2524
      %2900 = vst.msk [vmem:[%s229 + $0x218] sm:$0xff] %vm2832, %v2529
      %2901 = vst.msk [vmem:[%s229 + $0x220] sm:$0xff] %vm2832, %v2534
      %2902 = vst.msk [vmem:[%s229 + $0x228] sm:$0xff] %vm2832, %v2539
      %2903 = vst.msk [vmem:[%s229 + $0x230] sm:$0xff] %vm2832, %v2544
      %2904 = vst.msk [vmem:[%s229 + $0x238] sm:$0xff] %vm2832, %v2549
      %2905 = vst.msk [vmem:[%s229 + $0x240] sm:$0xff] %vm2832, %v2554
      %2906 = vst.msk [vmem:[%s229 + $0x248] sm:$0xff] %vm2832, %v2559
      %2907 = vst.msk [vmem:[%s229 + $0x250] sm:$0xff] %vm2832, %v2564
      %2908 = vst.msk [vmem:[%s229 + $0x258] sm:$0xff] %vm2832, %v2569
      %2909 = vst.msk [vmem:[%s229 + $0x260] sm:$0xff] %vm2832, %v2574
      %2910 = vst.msk [vmem:[%s229 + $0x268] sm:$0xff] %vm2832, %v2579
      %2911 = vst.msk [vmem:[%s229 + $0x270] sm:$0xff] %vm2832, %v2584
      %2912 = vst.msk [vmem:[%s229 + $0x278] sm:$0xff] %vm2832, %v2589
      %2913 = vst.msk [vmem:[%s229 + $0x280] sm:$0xff] %vm2832, %v2594
      %2914 = vst.msk [vmem:[%s229 + $0x288] sm:$0xff] %vm2832, %v2599
      %2915 = vst.msk [vmem:[%s229 + $0x290] sm:$0xff] %vm2832, %v2604
      %2916 = vst.msk [vmem:[%s229 + $0x298] sm:$0xff] %vm2832, %v2609
      %2917 = vst.msk [vmem:[%s229 + $0x2a0] sm:$0xff] %vm2832, %v2614
      %2918 = vst.msk [vmem:[%s229 + $0x2a8] sm:$0xff] %vm2832, %v2619
      %2919 = vst.msk [vmem:[%s229 + $0x2b0] sm:$0xff] %vm2832, %v2624
      %2920 = vst.msk [vmem:[%s229 + $0x2b8] sm:$0xff] %vm2832, %v2629
      %2921 = vst.msk [vmem:[%s229 + $0x2c0] sm:$0xff] %vm2832, %v2634
      %2922 = vst.msk [vmem:[%s229 + $0x2c8] sm:$0xff] %vm2832, %v2639
      %2923 = vst.msk [vmem:[%s229 + $0x2d0] sm:$0xff] %vm2832, %v2644
      %2924 = vst.msk [vmem:[%s229 + $0x2d8] sm:$0xff] %vm2832, %v2649
      %2925 = vst.msk [vmem:[%s229 + $0x2e0] sm:$0xff] %vm2832, %v2654
      %2926 = vst.msk [vmem:[%s229 + $0x2e8] sm:$0xff] %vm2832, %v2659
      %2927 = vst.msk [vmem:[%s229 + $0x2f0] sm:$0xff] %vm2832, %v2664
      %2928 = vst.msk [vmem:[%s229 + $0x2f8] sm:$0xff] %vm2832, %v2669
      %2929 = vst.msk [vmem:[%s229 + $0x300] sm:$0xff] %vm2832, %v2674
      %2930 = vst.msk [vmem:[%s229 + $0x308] sm:$0xff] %vm2832, %v2679
      %2931 = vst.msk [vmem:[%s229 + $0x310] sm:$0xff] %vm2832, %v2684
      %2932 = vst.msk [vmem:[%s229 + $0x318] sm:$0xff] %vm2832, %v2689
      %2933 = vst.msk [vmem:[%s229 + $0x320] sm:$0xff] %vm2832, %v2694
      %2934 = vst.msk [vmem:[%s229 + $0x328] sm:$0xff] %vm2832, %v2699
      %2935 = vst.msk [vmem:[%s229 + $0x330] sm:$0xff] %vm2832, %v2704
      %2936 = vst.msk [vmem:[%s229 + $0x338] sm:$0xff] %vm2832, %v2709
      %2937 = vst.msk [vmem:[%s229 + $0x340] sm:$0xff] %vm2832, %v2714
      %2938 = vst.msk [vmem:[%s229 + $0x348] sm:$0xff] %vm2832, %v2719
      %2939 = vst.msk [vmem:[%s229 + $0x350] sm:$0xff] %vm2832, %v2724
      %2940 = vst.msk [vmem:[%s229 + $0x358] sm:$0xff] %vm2832, %v2729
      %2941 = vst.msk [vmem:[%s229 + $0x360] sm:$0xff] %vm2832, %v2734
      %2942 = vst.msk [vmem:[%s229 + $0x368] sm:$0xff] %vm2832, %v2739
      %2943 = vst.msk [vmem:[%s229 + $0x370] sm:$0xff] %vm2832, %v2744
      %2944 = vst.msk [vmem:[%s229 + $0x378] sm:$0xff] %vm2832, %v2749
      %2945 = vst.msk [vmem:[%s229 + $0x380] sm:$0xff] %vm2832, %v2754
      %2946 = vst.msk [vmem:[%s229 + $0x388] sm:$0xff] %vm2832, %v2759
      %2947 = vst.msk [vmem:[%s229 + $0x390] sm:$0xff] %vm2832, %v2764
      %2948 = vst.msk [vmem:[%s229 + $0x398] sm:$0xff] %vm2832, %v2769
      %2949 = vst.msk [vmem:[%s229 + $0x3a0] sm:$0xff] %vm2832, %v2774
      %2950 = vst.msk [vmem:[%s229 + $0x3a8] sm:$0xff] %vm2832, %v2779
      %2951 = vst.msk [vmem:[%s229 + $0x3b0] sm:$0xff] %vm2832, %v2784
      %2952 = vst.msk [vmem:[%s229 + $0x3b8] sm:$0xff] %vm2832, %v2789
      %2953 = vst.msk [vmem:[%s229 + $0x3c0] sm:$0xff] %vm2832, %v2794
      %2954 = vst.msk [vmem:[%s229 + $0x3c8] sm:$0xff] %vm2832, %v2799
      %2955 = vst.msk [vmem:[%s229 + $0x3d0] sm:$0xff] %vm2832, %v2804
      %2956 = vst.msk [vmem:[%s229 + $0x3d8] sm:$0xff] %vm2832, %v2809
      %2957 = vst.msk [vmem:[%s229 + $0x3e0] sm:$0xff] %vm2832, %v2814
      %2958 = vst.msk [vmem:[%s229 + $0x3e8] sm:$0xff] %vm2832, %v2819
      %2959 = vst.msk [vmem:[%s229 + $0x3f0] sm:$0xff] %vm2832, %v2824
      %2960 = vst.msk [vmem:[%s229 + $0x3f8] sm:$0xff] %vm2832, %v2829
      %s2961 = smul.u32 128, %s16
      %p2962 = scmp.lt.s32.totalorder %s2961, 255
      %s2963 = scalar_select %p2962, %s2961, 255
      %s2964 = smul.addr %s2963, 8
      %s2965 = scalar_lea.vmem %s5, %s2964
      // Predicated region
      $region41: #{easy_upsample_pallas.7} parent=39 // pred_check
        %p2966 = pneg %p144
      $region42: #{easy_upsample_pallas.7} parent=39 // pred_check_branch
        %2968 = sbr.rel (%p2966) target = $region44
      $region43: #{easy_upsample_pallas.7} parent=39 // pred_region
        %s2969 = smul.u32 128, %s16
      $region44: #{easy_upsample_pallas.7} parent=39 // pred_fallthru
        _
    $region40: #{easy_upsample_pallas.7} parent=5 // pred_fallthru
      _
    %p2970 = scmp.le.s32.totalorder 2, %s11
    // Predicated region
    $region45: #{easy_upsample_pallas.7} parent=5 // pred_check
      %p2971 = pneg %p2970
    $region46: #{easy_upsample_pallas.7} parent=5 // pred_check_branch
      %2973 = sbr.rel (%p2971) target = $region48
    $region47: #{easy_upsample_pallas.7} parent=5 // pred_region
      %s2974 = ssub.s32 %s11, 2
      // Predicated region
      $region49: #{easy_upsample_pallas.7} parent=47 // pred_check
        %p2975 = pneg %p150
      $region50: #{easy_upsample_pallas.7} parent=47 // pred_check_branch
        %2977 = sbr.rel (%p2975) target = $region52
      $region51: #{easy_upsample_pallas.7} parent=47 // pred_region
        %s2978 = smul.u32 128, %s17
        %p2979 = scmp.lt.s32.totalorder %s2978, 255
        %s2980 = scalar_select %p2979, %s2978, 255
        %s2981 = smul.addr %s2980, 8
        %s2982 = scalar_lea.vmem %s5, %s2981
      $region52: #{easy_upsample_pallas.7} parent=47 // pred_fallthru
        _
    $region48: #{easy_upsample_pallas.7} parent=5 // pred_fallthru
      _
  $region6: #{easy_upsample_pallas.7} parent=0 // loop_footer
    %s15 = sadd.s32 1, %s11
  $region7: #{easy_upsample_pallas.7} parent=0 // loop_footer_branch
    %10 = sbr.rel target = $region3
  $region8: #{easy_upsample_pallas.7} parent=0 // loop_exit
    _

</llo_original>
